<compile_context>
chip_gen: v7x
topology: tpu7x:2x2x1
jax: 0.10.0
libtpu: 0.0.40
codegen_flags: <defaults>
</compile_context>

<pallas_src>
import math

import jax
import jax.numpy as jnp
from jax.experimental import pallas as pl
from jax.experimental.pallas import tpu as pltpu

LAT_PAD = 128  # lane-dense padded latent width (requires dim <= 128)


def vae_kernel(x_ref, eps_ref,
               w1_ref, b1_ref,
               wenc_ref, benc_ref,
               w3_ref, b3_ref,
               w4_ref, b4_ref,
               recon_ref, mulv_ref):
    # encode: h1 = relu(x @ W1 + b1)
    xb = x_ref[...].astype(jnp.bfloat16)
    h1 = jnp.dot(xb, w1_ref[...], preferred_element_type=jnp.float32) + b1_ref[...]
    h1 = jnp.maximum(h1, 0.0)                                        # (TB, 400) f32

    # fused heads: one lane-dense matmul produces [mu_pad | logvar_pad]
    mulv = jnp.dot(h1.astype(jnp.bfloat16), wenc_ref[...],
                   preferred_element_type=jnp.float32) + benc_ref[...]   # (TB, 256)
    mu = mulv[:, :LAT_PAD]                                           # lane-aligned slice
    logvar = mulv[:, LAT_PAD:]

    # reparameterize (training mode): z = eps * exp(0.5 * logvar) + mu
    # padded lanes: logvar=0, eps=0, mu=0  ->  z=0 (decoder rows there are 0 anyway)
    z = eps_ref[...] * jnp.exp(0.5 * logvar) + mu                    # (TB, 128)

    # decode: h3 = relu(z @ W3 + b3); recon = sigmoid(h3 @ W4 + b4)
    h3 = jnp.dot(z.astype(jnp.bfloat16), w3_ref[...],
                 preferred_element_type=jnp.float32) + b3_ref[...]
    h3 = jnp.maximum(h3, 0.0)                                        # (TB, 400)
    logits = jnp.dot(h3.astype(jnp.bfloat16), w4_ref[...],
                     preferred_element_type=jnp.float32) + b4_ref[...]

    recon_ref[...] = jax.nn.sigmoid(logits)                          # (TB, 784)
    mulv_ref[...] = mulv                                             # (TB, 256) lane-dense


def _round_up(n, m):
    return ((n + m - 1) // m) * m


def init_params(key, dim=20):
    """PyTorch-layout init (weights stored as (in, out) = nn.Linear W^T), f32."""
    def linear(k, fan_in, fan_out):
        kw, kb = jax.random.split(k)
        bound = 1.0 / jnp.sqrt(fan_in)
        w = jax.random.uniform(kw, (fan_in, fan_out), jnp.float32, -bound, bound)
        b = jax.random.uniform(kb, (1, fan_out), jnp.float32, -bound, bound)
        return w, b

    k1, k21, k22, k3, k4 = jax.random.split(key, 5)
    w1, b1 = linear(k1, 784, 400)
    w21, b21 = linear(k21, 400, dim)
    w22, b22 = linear(k22, 400, dim)
    w3, b3 = linear(k3, dim, 400)
    w4, b4 = linear(k4, 400, 784)
    return dict(w1=w1, b1=b1, w21=w21, b21=b21, w22=w22, b22=b22,
                w3=w3, b3=b3, w4=w4, b4=b4)


def pack_params(params, dim):
    """bf16 weights, fused + lane-padded encoder heads, lane-padded decoder input."""
    bf = jnp.bfloat16
    w_enc = jnp.zeros((400, 2 * LAT_PAD), bf)
    w_enc = w_enc.at[:, :dim].set(params["w21"].astype(bf))
    w_enc = w_enc.at[:, LAT_PAD:LAT_PAD + dim].set(params["w22"].astype(bf))
    b_enc = jnp.zeros((1, 2 * LAT_PAD), jnp.float32)
    b_enc = b_enc.at[:, :dim].set(params["b21"])
    b_enc = b_enc.at[:, LAT_PAD:LAT_PAD + dim].set(params["b22"])
    w3p = jnp.zeros((LAT_PAD, 400), bf).at[:dim, :].set(params["w3"].astype(bf))
    return dict(
        w1=params["w1"].astype(bf), b1=params["b1"].astype(jnp.float32),
        w_enc=w_enc, b_enc=b_enc,
        w3=w3p, b3=params["b3"].astype(jnp.float32),
        w4=params["w4"].astype(bf), b4=params["b4"].astype(jnp.float32),
    )


def vae_forward(x_nchw, kparams, eps, dim, batch_tile=256):
    """x_nchw: (B,1,28,28) f32; eps: (B, dim) f32 reparam noise (training mode)."""
    B = x_nchw.shape[0]
    x = x_nchw.reshape(B, 784).astype(jnp.float32)

    # lane-pad eps so latent math is done on a lane-dense 128-wide slab
    eps_pad = jnp.zeros((B, LAT_PAD), jnp.float32).at[:, :dim].set(eps)

    # batch tile: multiple of the f32 sublane tile (8); pad B up to a multiple
    tb = min(batch_tile, _round_up(B, 8))
    bp = _round_up(B, tb)
    if bp != B:
        x = jnp.pad(x, ((0, bp - B), (0, 0)))
        eps_pad = jnp.pad(eps_pad, ((0, bp - B), (0, 0)))
    n_tiles = bp // tb

    operands = (
        x, eps_pad,
        kparams["w1"], kparams["b1"],
        kparams["w_enc"], kparams["b_enc"],
        kparams["w3"], kparams["b3"],
        kparams["w4"], kparams["b4"],
    )

    def batch_spec(cols):
        return pl.BlockSpec((tb, cols), lambda i: (i, 0))

    def resident_spec(shape):
        # full-array block, same block index every grid step -> loaded once
        return pl.BlockSpec(shape, lambda i: (0, 0))

    in_specs = [batch_spec(784), batch_spec(LAT_PAD)] + [
        resident_spec(kparams[k].shape)
        for k in ("w1", "b1", "w_enc", "b_enc", "w3", "b3", "w4", "b4")
    ]

    out_shapes = (
        jax.ShapeDtypeStruct((bp, 784), jnp.float32),            # recon
        jax.ShapeDtypeStruct((bp, 2 * LAT_PAD), jnp.float32),    # [mu_pad | logvar_pad]
    )
    out_specs = (batch_spec(784), batch_spec(2 * LAT_PAD))

    flops = 2 * bp * (784 * 400 + 400 * 2 * LAT_PAD + LAT_PAD * 400 + 400 * 784)
    bytes_accessed = sum(int(math.prod(op.shape)) * op.dtype.itemsize for op in operands)
    bytes_accessed += sum(int(math.prod(s.shape)) * 4 for s in out_shapes)
    cost = pl.CostEstimate(flops=flops,
                           transcendentals=bp * (LAT_PAD + 784),
                           bytes_accessed=int(bytes_accessed))

    recon, mulv = pl.pallas_call(
        vae_kernel,
        out_shape=out_shapes,
        grid_spec=pltpu.PrefetchScalarGridSpec(
            num_scalar_prefetch=0,
            grid=(n_tiles,),
            in_specs=in_specs,
            out_specs=out_specs,
        ),
        compiler_params=pltpu.CompilerParams(
            dimension_semantics=("parallel",),
        ),
        cost_estimate=cost,
    )(*operands)

    recon = recon[:B]
    mu = mulv[:B, :dim]
    logvar = mulv[:B, LAT_PAD:LAT_PAD + dim]
    return recon, mu, logvar


def vae_reference(x_flat, kp, eps_pad, dim):
    """Pure-JAX reference with matching bf16 weight / activation precision."""
    xb = x_flat.astype(jnp.bfloat16)
    h1 = jnp.maximum(jnp.dot(xb, kp["w1"], preferred_element_type=jnp.float32) + kp["b1"], 0.0)
    mulv = jnp.dot(h1.astype(jnp.bfloat16), kp["w_enc"],
                   preferred_element_type=jnp.float32) + kp["b_enc"]
    mu = mulv[:, :LAT_PAD]
    logvar = mulv[:, LAT_PAD:]
    z = eps_pad * jnp.exp(0.5 * logvar) + mu
    h3 = jnp.maximum(jnp.dot(z.astype(jnp.bfloat16), kp["w3"],
                             preferred_element_type=jnp.float32) + kp["b3"], 0.0)
    recon = jax.nn.sigmoid(jnp.dot(h3.astype(jnp.bfloat16), kp["w4"],
                                   preferred_element_type=jnp.float32) + kp["b4"])
    return recon, mu[:, :dim], logvar[:, :dim]


if __name__ == "__main__":
    key = jax.random.PRNGKey(0)
    k_params, k_x, k_eps = jax.random.split(key, 3)

    dim = 20
    B = 4
    params = init_params(k_params, dim=dim)
    kparams = pack_params(params, dim)

    x = jax.random.uniform(k_x, (B, 1, 28, 28), jnp.float32)   # NCHW, like MNIST
    eps = jax.random.normal(k_eps, (B, dim), jnp.float32)      # reparam noise

    recon, mu, logvar = vae_forward(x, kparams, eps, dim)
    jax.block_until_ready((recon, mu, logvar))

    # Reference check (same bf16-weight precision, f32 accumulation).
    xf = x.reshape(B, 784)
    eps_pad = jnp.zeros((B, LAT_PAD), jnp.float32).at[:, :dim].set(eps)
    rec_r, mu_r, lv_r = vae_reference(xf, kparams, eps_pad, dim)

    assert recon.shape == (B, 784) and mu.shape == (B, dim) and logvar.shape == (B, dim)
    assert jnp.allclose(recon, rec_r, atol=2e-3), "recon mismatch"
    assert jnp.allclose(mu, mu_r, atol=2e-3), "mu mismatch"
    assert jnp.allclose(logvar, lv_r, atol=2e-3), "logvar mismatch"

    print("KERNEL_OK")
</pallas_src>

<mosaic_0001>
module attributes {stable_mosaic.version = 11 : i64} {
  func.func @vae_kernel(%arg0: i32, %arg1: memref<8x784xf32, #tpu.memory_space<vmem>>, %arg2: memref<8x128xf32, #tpu.memory_space<vmem>>, %arg3: memref<784x400xbf16, #tpu.memory_space<vmem>>, %arg4: memref<1x400xf32, #tpu.memory_space<vmem>>, %arg5: memref<400x256xbf16, #tpu.memory_space<vmem>>, %arg6: memref<1x256xf32, #tpu.memory_space<vmem>>, %arg7: memref<128x400xbf16, #tpu.memory_space<vmem>>, %arg8: memref<1x400xf32, #tpu.memory_space<vmem>>, %arg9: memref<400x784xbf16, #tpu.memory_space<vmem>>, %arg10: memref<1x784xf32, #tpu.memory_space<vmem>>, %arg11: memref<8x784xf32, #tpu.memory_space<vmem>>, %arg12: memref<8x256xf32, #tpu.memory_space<vmem>>) attributes {dimension_semantics = [#tpu.dimension_semantics<parallel>], iteration_bounds = array<i64: 1>, scalar_prefetch = 0 : i64, scratch_operands = 0 : i64, tpu.core_type = #tpu.core_type<tc>, window_params = [{transform_indices = @transform_0, window_bounds = array<i64: 8, 784>}, {transform_indices = @transform_1, window_bounds = array<i64: 8, 128>}, {pipeline_mode = #tpu.pipeline_mode<synchronous>, transform_indices = @transform_2, window_bounds = array<i64: 784, 400>}, {pipeline_mode = #tpu.pipeline_mode<synchronous>, transform_indices = @transform_3, window_bounds = array<i64: 1, 400>}, {pipeline_mode = #tpu.pipeline_mode<synchronous>, transform_indices = @transform_4, window_bounds = array<i64: 400, 256>}, {pipeline_mode = #tpu.pipeline_mode<synchronous>, transform_indices = @transform_5, window_bounds = array<i64: 1, 256>}, {pipeline_mode = #tpu.pipeline_mode<synchronous>, transform_indices = @transform_6, window_bounds = array<i64: 128, 400>}, {pipeline_mode = #tpu.pipeline_mode<synchronous>, transform_indices = @transform_7, window_bounds = array<i64: 1, 400>}, {pipeline_mode = #tpu.pipeline_mode<synchronous>, transform_indices = @transform_8, window_bounds = array<i64: 400, 784>}, {pipeline_mode = #tpu.pipeline_mode<synchronous>, transform_indices = @transform_9, window_bounds = array<i64: 1, 784>}, {transform_indices = @transform_10, window_bounds = array<i64: 8, 784>}, {transform_indices = @transform_11, window_bounds = array<i64: 8, 256>}]} {
    %c0 = arith.constant 0 : index
    %c0_0 = arith.constant 0 : index
    %0 = vector.load %arg1[%c0, %c0_0] : memref<8x784xf32, #tpu.memory_space<vmem>>, vector<8x784xf32>
    %1 = arith.truncf %0 : vector<8x784xf32> to vector<8x784xbf16>
    %c0_1 = arith.constant 0 : index
    %c0_2 = arith.constant 0 : index
    %2 = vector.load %arg3[%c0_1, %c0_2] : memref<784x400xbf16, #tpu.memory_space<vmem>>, vector<784x400xbf16>
    %cst = arith.constant dense<0.000000e+00> : vector<8x400xf32>
    %3 = tpu.matmul %1, %2, %cst {dimension_numbers = #tpu.dot_dimension_numbers<[1], [0], [0], [1], [0, 0, 1, 1], [], []>} : vector<8x784xbf16>, vector<784x400xbf16>, vector<8x400xf32> -> vector<8x400xf32>
    %c0_3 = arith.constant 0 : index
    %c0_4 = arith.constant 0 : index
    %4 = vector.load %arg4[%c0_3, %c0_4] : memref<1x400xf32, #tpu.memory_space<vmem>>, vector<1x400xf32>
    %5 = vector.broadcast %4 : vector<1x400xf32> to vector<8x400xf32>
    %6 = arith.addf %3, %5 : vector<8x400xf32>
    %cst_5 = arith.constant 0.000000e+00 : f32
    %7 = vector.broadcast %cst_5 : f32 to vector<8x400xf32>
    %8 = arith.maximumf %6, %7 : vector<8x400xf32>
    %9 = arith.truncf %8 : vector<8x400xf32> to vector<8x400xbf16>
    %c0_6 = arith.constant 0 : index
    %c0_7 = arith.constant 0 : index
    %10 = vector.load %arg5[%c0_6, %c0_7] : memref<400x256xbf16, #tpu.memory_space<vmem>>, vector<400x256xbf16>
    %cst_8 = arith.constant dense<0.000000e+00> : vector<8x256xf32>
    %11 = tpu.matmul %9, %10, %cst_8 {dimension_numbers = #tpu.dot_dimension_numbers<[1], [0], [0], [1], [0, 0, 1, 1], [], []>} : vector<8x400xbf16>, vector<400x256xbf16>, vector<8x256xf32> -> vector<8x256xf32>
    %c0_9 = arith.constant 0 : index
    %c0_10 = arith.constant 0 : index
    %12 = vector.load %arg6[%c0_9, %c0_10] : memref<1x256xf32, #tpu.memory_space<vmem>>, vector<1x256xf32>
    %13 = vector.broadcast %12 : vector<1x256xf32> to vector<8x256xf32>
    %14 = arith.addf %11, %13 : vector<8x256xf32>
    %15 = vector.extract_strided_slice %14 {offsets = [0, 0], sizes = [8, 128], strides = [1, 1]} : vector<8x256xf32> to vector<8x128xf32>
    %16 = vector.extract_strided_slice %14 {offsets = [0, 128], sizes = [8, 128], strides = [1, 1]} : vector<8x256xf32> to vector<8x128xf32>
    %c0_11 = arith.constant 0 : index
    %c0_12 = arith.constant 0 : index
    %17 = vector.load %arg2[%c0_11, %c0_12] : memref<8x128xf32, #tpu.memory_space<vmem>>, vector<8x128xf32>
    %cst_13 = arith.constant 5.000000e-01 : f32
    %18 = vector.broadcast %cst_13 : f32 to vector<8x128xf32>
    %19 = arith.mulf %18, %16 : vector<8x128xf32>
    %20 = math.exp %19 : vector<8x128xf32>
    %21 = arith.mulf %17, %20 : vector<8x128xf32>
    %22 = arith.addf %21, %15 : vector<8x128xf32>
    %23 = arith.truncf %22 : vector<8x128xf32> to vector<8x128xbf16>
    %c0_14 = arith.constant 0 : index
    %c0_15 = arith.constant 0 : index
    %24 = vector.load %arg7[%c0_14, %c0_15] : memref<128x400xbf16, #tpu.memory_space<vmem>>, vector<128x400xbf16>
    %cst_16 = arith.constant dense<0.000000e+00> : vector<8x400xf32>
    %25 = tpu.matmul %23, %24, %cst_16 {dimension_numbers = #tpu.dot_dimension_numbers<[1], [0], [0], [1], [0, 0, 1, 1], [], []>} : vector<8x128xbf16>, vector<128x400xbf16>, vector<8x400xf32> -> vector<8x400xf32>
    %c0_17 = arith.constant 0 : index
    %c0_18 = arith.constant 0 : index
    %26 = vector.load %arg8[%c0_17, %c0_18] : memref<1x400xf32, #tpu.memory_space<vmem>>, vector<1x400xf32>
    %27 = vector.broadcast %26 : vector<1x400xf32> to vector<8x400xf32>
    %28 = arith.addf %25, %27 : vector<8x400xf32>
    %cst_19 = arith.constant 0.000000e+00 : f32
    %29 = vector.broadcast %cst_19 : f32 to vector<8x400xf32>
    %30 = arith.maximumf %28, %29 : vector<8x400xf32>
    %31 = arith.truncf %30 : vector<8x400xf32> to vector<8x400xbf16>
    %c0_20 = arith.constant 0 : index
    %c0_21 = arith.constant 0 : index
    %32 = vector.load %arg9[%c0_20, %c0_21] : memref<400x784xbf16, #tpu.memory_space<vmem>>, vector<400x784xbf16>
    %cst_22 = arith.constant dense<0.000000e+00> : vector<8x784xf32>
    %33 = tpu.matmul %31, %32, %cst_22 {dimension_numbers = #tpu.dot_dimension_numbers<[1], [0], [0], [1], [0, 0, 1, 1], [], []>} : vector<8x400xbf16>, vector<400x784xbf16>, vector<8x784xf32> -> vector<8x784xf32>
    %c0_23 = arith.constant 0 : index
    %c0_24 = arith.constant 0 : index
    %34 = vector.load %arg10[%c0_23, %c0_24] : memref<1x784xf32, #tpu.memory_space<vmem>>, vector<1x784xf32>
    %35 = vector.broadcast %34 : vector<1x784xf32> to vector<8x784xf32>
    %36 = arith.addf %33, %35 : vector<8x784xf32>
    %37 = arith.negf %36 : vector<8x784xf32>
    %38 = math.exp %37 : vector<8x784xf32>
    %cst_25 = arith.constant 1.000000e+00 : f32
    %39 = vector.broadcast %cst_25 : f32 to vector<8x784xf32>
    %40 = arith.addf %39, %38 : vector<8x784xf32>
    %41 = arith.divf %39, %40 : vector<8x784xf32>
    %c0_26 = arith.constant 0 : index
    %c0_27 = arith.constant 0 : index
    %42 = vector.load %arg11[%c0_26, %c0_27] : memref<8x784xf32, #tpu.memory_space<vmem>>, vector<8x784xf32>
    tpu.vector_store %arg11[%c0_26, %c0_27], %41 {strides = array<i32>} : memref<8x784xf32, #tpu.memory_space<vmem>>, vector<8x784xf32>,
    %c0_28 = arith.constant 0 : index
    %c0_29 = arith.constant 0 : index
    %43 = vector.load %arg12[%c0_28, %c0_29] : memref<8x256xf32, #tpu.memory_space<vmem>>, vector<8x256xf32>
    tpu.vector_store %arg12[%c0_28, %c0_29], %14 {strides = array<i32>} : memref<8x256xf32, #tpu.memory_space<vmem>>, vector<8x256xf32>,
    return
  }
  func.func @transform_0(%arg0: i32) -> (i32, i32) {
    %c0_i32 = arith.constant 0 : i32
    %c0_i32_0 = arith.constant 0 : i32
    return %arg0, %c0_i32 : i32, i32
  }
  func.func @transform_1(%arg0: i32) -> (i32, i32) {
    %c0_i32 = arith.constant 0 : i32
    %c0_i32_0 = arith.constant 0 : i32
    return %arg0, %c0_i32 : i32, i32
  }
  func.func @transform_2(%arg0: i32) -> (i32, i32) {
    %c0_i32 = arith.constant 0 : i32
    %c0_i32_0 = arith.constant 0 : i32
    %c0_i32_1 = arith.constant 0 : i32
    return %c0_i32, %c0_i32_0 : i32, i32
  }
  func.func @transform_3(%arg0: i32) -> (i32, i32) {
    %c0_i32 = arith.constant 0 : i32
    %c0_i32_0 = arith.constant 0 : i32
    %c0_i32_1 = arith.constant 0 : i32
    return %c0_i32, %c0_i32_0 : i32, i32
  }
  func.func @transform_4(%arg0: i32) -> (i32, i32) {
    %c0_i32 = arith.constant 0 : i32
    %c0_i32_0 = arith.constant 0 : i32
    %c0_i32_1 = arith.constant 0 : i32
    return %c0_i32, %c0_i32_0 : i32, i32
  }
  func.func @transform_5(%arg0: i32) -> (i32, i32) {
    %c0_i32 = arith.constant 0 : i32
    %c0_i32_0 = arith.constant 0 : i32
    %c0_i32_1 = arith.constant 0 : i32
    return %c0_i32, %c0_i32_0 : i32, i32
  }
  func.func @transform_6(%arg0: i32) -> (i32, i32) {
    %c0_i32 = arith.constant 0 : i32
    %c0_i32_0 = arith.constant 0 : i32
    %c0_i32_1 = arith.constant 0 : i32
    return %c0_i32, %c0_i32_0 : i32, i32
  }
  func.func @transform_7(%arg0: i32) -> (i32, i32) {
    %c0_i32 = arith.constant 0 : i32
    %c0_i32_0 = arith.constant 0 : i32
    %c0_i32_1 = arith.constant 0 : i32
    return %c0_i32, %c0_i32_0 : i32, i32
  }
  func.func @transform_8(%arg0: i32) -> (i32, i32) {
    %c0_i32 = arith.constant 0 : i32
    %c0_i32_0 = arith.constant 0 : i32
    %c0_i32_1 = arith.constant 0 : i32
    return %c0_i32, %c0_i32_0 : i32, i32
  }
  func.func @transform_9(%arg0: i32) -> (i32, i32) {
    %c0_i32 = arith.constant 0 : i32
    %c0_i32_0 = arith.constant 0 : i32
    %c0_i32_1 = arith.constant 0 : i32
    return %c0_i32, %c0_i32_0 : i32, i32
  }
  func.func @transform_10(%arg0: i32) -> (i32, i32) {
    %c0_i32 = arith.constant 0 : i32
    %c0_i32_0 = arith.constant 0 : i32
    return %arg0, %c0_i32 : i32, i32
  }
  func.func @transform_11(%arg0: i32) -> (i32, i32) {
    %c0_i32 = arith.constant 0 : i32
    %c0_i32_0 = arith.constant 0 : i32
    return %arg0, %c0_i32 : i32, i32
  }
}

</mosaic_0001>

<llo_original>
// kernel: tpu_custom_call.1
$region0: #{tpu_custom_call.1}
  #allocation0 [shape = 'u32[]', space=smem, size = 0x4, offset = 0x4, fixed_abs, tag = 'smem constant byte address 0x4 - core index']
  #allocation1 [shape = 'u32[144,128]{1,0:T(1,128)}', space=vmem, size = 0x12000, scoped, tag = 'internal scratch']
  %s0 = inlined_call_operand.vmem [shape: f32[8,784], index: 0, kind: input, shape index: {}]
  %s1 = inlined_call_operand.vmem [shape: f32[8,128], index: 1, kind: input, shape index: {}]
  %s2 = inlined_call_operand.vmem [shape: bf16[784,400], index: 2, kind: input, shape index: {}]
  %s3 = inlined_call_operand.vmem [shape: f32[1,400], index: 3, kind: input, shape index: {}]
  %s4 = inlined_call_operand.vmem [shape: bf16[400,256], index: 4, kind: input, shape index: {}]
  %s5 = inlined_call_operand.vmem [shape: f32[1,256], index: 5, kind: input, shape index: {}]
  %s6 = inlined_call_operand.vmem [shape: bf16[128,400], index: 6, kind: input, shape index: {}]
  %s7 = inlined_call_operand.vmem [shape: f32[1,400], index: 7, kind: input, shape index: {}]
  %s8 = inlined_call_operand.vmem [shape: bf16[400,784], index: 8, kind: input, shape index: {}]
  %s9 = inlined_call_operand.vmem [shape: f32[1,784], index: 9, kind: input, shape index: {}]
  %s10 = inlined_call_operand.hbm [shape: f32[8,784], index: 10, kind: output, shape index: {0}]
  %s11 = inlined_call_operand.hbm [shape: f32[8,256], index: 11, kind: output, shape index: {1}]
  %12 = xla_tuple %s10, %s11
  %s13 = sld [smem:[#allocation0]]
  $region58: #{tpu_custom_call.1} parent=0
    _
  %s15 = ssub.s32 1, %s13
  %s16 = scalar_select 0, %s15, %s13
  $region1: #{tpu_custom_call.1} parent=0
    #allocation2 [shape = 'u8[28672]{0}', space=vmem, size = 0x7000, scoped, tag = 'output window, operand 0, single buffered']
    #allocation3 [shape = 's32[1]{0}', space=sflag, size = 0x4, scoped, tag = 'scoped memory for tpu_custom_call.1']
    #allocation4 [shape = 'u8[8192]{0}', space=vmem, size = 0x2000, scoped, tag = 'output window, operand 1, single buffered']
    #allocation5 [shape = 's32[1]{0}', space=sflag, size = 0x4, scoped, tag = 'scoped memory for tpu_custom_call.1']
    %17 = vsyncpa [#allocation3], 0
    %18 = vsyncpa [#allocation5], 0
    // Predicated region
    $region2: #{tpu_custom_call.1} parent=1 // pred_check
      _
    $region3: #{tpu_custom_call.1} parent=1 // pred_check_branch
      %20 = sbr.rel (0) target = $region5
    $region4: #{tpu_custom_call.1} parent=1 // pred_region
      _
    $region5: #{tpu_custom_call.1} parent=1 // pred_fallthru
      _
    // Predicated region
    $region6: #{tpu_custom_call.1} parent=1 // pred_check
      _
    $region7: #{tpu_custom_call.1} parent=1 // pred_check_branch
      %22 = sbr.rel (0) target = $region9
    $region8: #{tpu_custom_call.1} parent=1 // pred_region
      _
    $region9: #{tpu_custom_call.1} parent=1 // pred_fallthru
      _
    // Predicated region
    $region10: #{tpu_custom_call.1} parent=1 // pred_check
      _
    $region11: #{tpu_custom_call.1} parent=1 // pred_check_branch
      %24 = sbr.rel (0) target = $region13
    $region12: #{tpu_custom_call.1} parent=1 // pred_region
      _
    $region13: #{tpu_custom_call.1} parent=1 // pred_fallthru
      _
    // Predicated region
    $region14: #{tpu_custom_call.1} parent=1 // pred_check
      _
    $region15: #{tpu_custom_call.1} parent=1 // pred_check_branch
      %26 = sbr.rel (0) target = $region17
    $region16: #{tpu_custom_call.1} parent=1 // pred_region
      _
    $region17: #{tpu_custom_call.1} parent=1 // pred_fallthru
      _
    // Predicated region
    $region18: #{tpu_custom_call.1} parent=1 // pred_check
      _
    $region19: #{tpu_custom_call.1} parent=1 // pred_check_branch
      %28 = sbr.rel (0) target = $region21
    $region20: #{tpu_custom_call.1} parent=1 // pred_region
      _
    $region21: #{tpu_custom_call.1} parent=1 // pred_fallthru
      _
    // Predicated region
    $region22: #{tpu_custom_call.1} parent=1 // pred_check
      _
    $region23: #{tpu_custom_call.1} parent=1 // pred_check_branch
      %30 = sbr.rel (0) target = $region25
    $region24: #{tpu_custom_call.1} parent=1 // pred_region
      _
    $region25: #{tpu_custom_call.1} parent=1 // pred_fallthru
      _
    // Predicated region
    $region26: #{tpu_custom_call.1} parent=1 // pred_check
      _
    $region27: #{tpu_custom_call.1} parent=1 // pred_check_branch
      %32 = sbr.rel (0) target = $region29
    $region28: #{tpu_custom_call.1} parent=1 // pred_region
      _
    $region29: #{tpu_custom_call.1} parent=1 // pred_fallthru
      _
    // Predicated region
    $region30: #{tpu_custom_call.1} parent=1 // pred_check
      _
    $region31: #{tpu_custom_call.1} parent=1 // pred_check_branch
      %34 = sbr.rel (0) target = $region33
    $region32: #{tpu_custom_call.1} parent=1 // pred_region
      _
    $region33: #{tpu_custom_call.1} parent=1 // pred_fallthru
      _
    // Predicated region
    $region34: #{tpu_custom_call.1} parent=1 // pred_check
      _
    $region35: #{tpu_custom_call.1} parent=1 // pred_check_branch
      %36 = sbr.rel (0) target = $region37
    $region36: #{tpu_custom_call.1} parent=1 // pred_region
      _
    $region37: #{tpu_custom_call.1} parent=1 // pred_fallthru
      _
    // Predicated region
    $region38: #{tpu_custom_call.1} parent=1 // pred_check
      _
    $region39: #{tpu_custom_call.1} parent=1 // pred_check_branch
      %38 = sbr.rel (0) target = $region41
    $region40: #{tpu_custom_call.1} parent=1 // pred_region
      _
    $region41: #{tpu_custom_call.1} parent=1 // pred_fallthru
      _
    %v40 = vld [vmem:[%s0] sm:$0xff]
    %v41 = vld [vmem:[%s0 + $0x8] sm:$0xff]
    %v42 = vld [vmem:[%s0 + $0x10] sm:$0xff]
    %v43 = vld [vmem:[%s0 + $0x18] sm:$0xff]
    %v44 = vld [vmem:[%s0 + $0x20] sm:$0xff]
    %v45 = vld [vmem:[%s0 + $0x28] sm:$0xff]
    %v46 = vld [vmem:[%s0 + $0x30] sm:$0xff]
    %v47 = vpack.c.bf16 %v40, %v40
    %v48 = vpack.c.bf16 %v41, %v41
    %v49 = vpack.c.bf16 %v42, %v42
    %v50 = vpack.c.bf16 %v43, %v43
    %v51 = vpack.c.bf16 %v44, %v44
    %v52 = vpack.c.bf16 %v45, %v45
    %v53 = vpack.c.bf16 %v46, %v46
    %v54 = vld [vmem:[%s2] sm:$0xff]
    %v55 = vld [vmem:[%s2 + $0x8] sm:$0xff]
    %v56 = vld [vmem:[%s2 + $0x10] sm:$0xff]
    %v57 = vld [vmem:[%s2 + $0x18] sm:$0xff]
    %v58 = vld [vmem:[%s2 + $0x20] sm:$0xff]
    %v59 = vld [vmem:[%s2 + $0x28] sm:$0xff]
    %v60 = vld [vmem:[%s2 + $0x30] sm:$0xff]
    %v61 = vld [vmem:[%s2 + $0x38] sm:$0xff]
    %v62 = vld [vmem:[%s2 + $0x40] sm:$0xff]
    %v63 = vld [vmem:[%s2 + $0x48] sm:$0xff]
    %v64 = vld [vmem:[%s2 + $0x50] sm:$0xff]
    %v65 = vld [vmem:[%s2 + $0x58] sm:$0xff]
    %v66 = vld [vmem:[%s2 + $0x60] sm:$0xff]
    %v67 = vld [vmem:[%s2 + $0x68] sm:$0xff]
    %v68 = vld [vmem:[%s2 + $0x70] sm:$0xff]
    %v69 = vld [vmem:[%s2 + $0x78] sm:$0xff]
    %v70 = vld [vmem:[%s2 + $0x80] sm:$0xff]
    %v71 = vld [vmem:[%s2 + $0x88] sm:$0xff]
    %v72 = vld [vmem:[%s2 + $0x90] sm:$0xff]
    %v73 = vld [vmem:[%s2 + $0x98] sm:$0xff]
    %v74 = vld [vmem:[%s2 + $0xa0] sm:$0xff]
    %v75 = vld [vmem:[%s2 + $0xa8] sm:$0xff]
    %v76 = vld [vmem:[%s2 + $0xb0] sm:$0xff]
    %v77 = vld [vmem:[%s2 + $0xb8] sm:$0xff]
    %v78 = vld [vmem:[%s2 + $0xc0] sm:$0xff]
    %v79 = vld [vmem:[%s2 + $0xc8] sm:$0xff]
    %v80 = vld [vmem:[%s2 + $0xd0] sm:$0xff]
    %v81 = vld [vmem:[%s2 + $0xd8] sm:$0xff]
    %v82 = vld [vmem:[%s2 + $0xe0] sm:$0xff]
    %v83 = vld [vmem:[%s2 + $0xe8] sm:$0xff]
    %v84 = vld [vmem:[%s2 + $0xf0] sm:$0xff]
    %v85 = vld [vmem:[%s2 + $0xf8] sm:$0xff]
    %v86 = vld [vmem:[%s2 + $0x100] sm:$0xff]
    %v87 = vld [vmem:[%s2 + $0x108] sm:$0xff]
    %v88 = vld [vmem:[%s2 + $0x110] sm:$0xff]
    %v89 = vld [vmem:[%s2 + $0x118] sm:$0xff]
    %v90 = vld [vmem:[%s2 + $0x120] sm:$0xff]
    %v91 = vld [vmem:[%s2 + $0x128] sm:$0xff]
    %v92 = vld [vmem:[%s2 + $0x130] sm:$0xff]
    %v93 = vld [vmem:[%s2 + $0x138] sm:$0xff]
    %v94 = vld [vmem:[%s2 + $0x140] sm:$0xff]
    %v95 = vld [vmem:[%s2 + $0x148] sm:$0xff]
    %v96 = vld [vmem:[%s2 + $0x150] sm:$0xff]
    %v97 = vld [vmem:[%s2 + $0x158] sm:$0xff]
    %v98 = vld [vmem:[%s2 + $0x160] sm:$0xff]
    %v99 = vld [vmem:[%s2 + $0x168] sm:$0xff]
    %v100 = vld [vmem:[%s2 + $0x170] sm:$0xff]
    %v101 = vld [vmem:[%s2 + $0x178] sm:$0xff]
    %v102 = vld [vmem:[%s2 + $0x180] sm:$0xff]
    %v103 = vld [vmem:[%s2 + $0x188] sm:$0xff]
    %v104 = vld [vmem:[%s2 + $0x190] sm:$0xff]
    %v105 = vld [vmem:[%s2 + $0x198] sm:$0xff]
    %v106 = vld [vmem:[%s2 + $0x1a0] sm:$0xff]
    %v107 = vld [vmem:[%s2 + $0x1a8] sm:$0xff]
    %v108 = vld [vmem:[%s2 + $0x1b0] sm:$0xff]
    %v109 = vld [vmem:[%s2 + $0x1b8] sm:$0xff]
    %v110 = vld [vmem:[%s2 + $0x1c0] sm:$0xff]
    %v111 = vld [vmem:[%s2 + $0x1c8] sm:$0xff]
    %v112 = vld [vmem:[%s2 + $0x1d0] sm:$0xff]
    %v113 = vld [vmem:[%s2 + $0x1d8] sm:$0xff]
    %v114 = vld [vmem:[%s2 + $0x1e0] sm:$0xff]
    %v115 = vld [vmem:[%s2 + $0x1e8] sm:$0xff]
    %v116 = vld [vmem:[%s2 + $0x1f0] sm:$0xff]
    %v117 = vld [vmem:[%s2 + $0x1f8] sm:$0xff]
    %v118 = vld [vmem:[%s2 + $0x200] sm:$0xff]
    %v119 = vld [vmem:[%s2 + $0x208] sm:$0xff]
    %v120 = vld [vmem:[%s2 + $0x210] sm:$0xff]
    %v121 = vld [vmem:[%s2 + $0x218] sm:$0xff]
    %v122 = vld [vmem:[%s2 + $0x220] sm:$0xff]
    %v123 = vld [vmem:[%s2 + $0x228] sm:$0xff]
    %v124 = vld [vmem:[%s2 + $0x230] sm:$0xff]
    %v125 = vld [vmem:[%s2 + $0x238] sm:$0xff]
    %v126 = vld [vmem:[%s2 + $0x240] sm:$0xff]
    %v127 = vld [vmem:[%s2 + $0x248] sm:$0xff]
    %v128 = vld [vmem:[%s2 + $0x250] sm:$0xff]
    %v129 = vld [vmem:[%s2 + $0x258] sm:$0xff]
    %v130 = vld [vmem:[%s2 + $0x260] sm:$0xff]
    %v131 = vld [vmem:[%s2 + $0x268] sm:$0xff]
    %v132 = vld [vmem:[%s2 + $0x270] sm:$0xff]
    %v133 = vld [vmem:[%s2 + $0x278] sm:$0xff]
    %v134 = vld [vmem:[%s2 + $0x280] sm:$0xff]
    %v135 = vld [vmem:[%s2 + $0x288] sm:$0xff]
    %v136 = vld [vmem:[%s2 + $0x290] sm:$0xff]
    %v137 = vld [vmem:[%s2 + $0x298] sm:$0xff]
    %v138 = vld [vmem:[%s2 + $0x2a0] sm:$0xff]
    %v139 = vld [vmem:[%s2 + $0x2a8] sm:$0xff]
    %v140 = vld [vmem:[%s2 + $0x2b0] sm:$0xff]
    %v141 = vld [vmem:[%s2 + $0x2b8] sm:$0xff]
    %v142 = vld [vmem:[%s2 + $0x2c0] sm:$0xff]
    %v143 = vld [vmem:[%s2 + $0x2c8] sm:$0xff]
    %v144 = vld [vmem:[%s2 + $0x2d0] sm:$0xff]
    %v145 = vld [vmem:[%s2 + $0x2d8] sm:$0xff]
    %v146 = vld [vmem:[%s2 + $0x2e0] sm:$0xff]
    %v147 = vld [vmem:[%s2 + $0x2e8] sm:$0xff]
    %v148 = vld [vmem:[%s2 + $0x2f0] sm:$0xff]
    %v149 = vld [vmem:[%s2 + $0x2f8] sm:$0xff]
    %v150 = vld [vmem:[%s2 + $0x300] sm:$0xff]
    %v151 = vld [vmem:[%s2 + $0x308] sm:$0xff]
    %v152 = vld [vmem:[%s2 + $0x310] sm:$0xff]
    %v153 = vld [vmem:[%s2 + $0x318] sm:$0xff]
    %v154 = vld [vmem:[%s2 + $0x320] sm:$0xff]
    %v155 = vld [vmem:[%s2 + $0x328] sm:$0xff]
    %v156 = vld [vmem:[%s2 + $0x330] sm:$0xff]
    %v157 = vld [vmem:[%s2 + $0x338] sm:$0xff]
    %v158 = vld [vmem:[%s2 + $0x340] sm:$0xff]
    %v159 = vld [vmem:[%s2 + $0x348] sm:$0xff]
    %v160 = vld [vmem:[%s2 + $0x350] sm:$0xff]
    %v161 = vld [vmem:[%s2 + $0x358] sm:$0xff]
    %v162 = vld [vmem:[%s2 + $0x360] sm:$0xff]
    %v163 = vld [vmem:[%s2 + $0x368] sm:$0xff]
    %v164 = vld [vmem:[%s2 + $0x370] sm:$0xff]
    %v165 = vld [vmem:[%s2 + $0x378] sm:$0xff]
    %v166 = vld [vmem:[%s2 + $0x380] sm:$0xff]
    %v167 = vld [vmem:[%s2 + $0x388] sm:$0xff]
    %v168 = vld [vmem:[%s2 + $0x390] sm:$0xff]
    %v169 = vld [vmem:[%s2 + $0x398] sm:$0xff]
    %v170 = vld [vmem:[%s2 + $0x3a0] sm:$0xff]
    %v171 = vld [vmem:[%s2 + $0x3a8] sm:$0xff]
    %v172 = vld [vmem:[%s2 + $0x3b0] sm:$0xff]
    %v173 = vld [vmem:[%s2 + $0x3b8] sm:$0xff]
    %v174 = vld [vmem:[%s2 + $0x3c0] sm:$0xff]
    %v175 = vld [vmem:[%s2 + $0x3c8] sm:$0xff]
    %v176 = vld [vmem:[%s2 + $0x3d0] sm:$0xff]
    %v177 = vld [vmem:[%s2 + $0x3d8] sm:$0xff]
    %v178 = vld [vmem:[%s2 + $0x3e0] sm:$0xff]
    %v179 = vld [vmem:[%s2 + $0x3e8] sm:$0xff]
    %v180 = vld [vmem:[%s2 + $0x3f0] sm:$0xff]
    %v181 = vld [vmem:[%s2 + $0x3f8] sm:$0xff]
    %v182 = vld [vmem:[%s2 + $0x400] sm:$0xff]
    %v183 = vld [vmem:[%s2 + $0x408] sm:$0xff]
    %v184 = vld [vmem:[%s2 + $0x410] sm:$0xff]
    %v185 = vld [vmem:[%s2 + $0x418] sm:$0xff]
    %v186 = vld [vmem:[%s2 + $0x420] sm:$0xff]
    %v187 = vld [vmem:[%s2 + $0x428] sm:$0xff]
    %v188 = vld [vmem:[%s2 + $0x430] sm:$0xff]
    %v189 = vld [vmem:[%s2 + $0x438] sm:$0xff]
    %v190 = vld [vmem:[%s2 + $0x440] sm:$0xff]
    %v191 = vld [vmem:[%s2 + $0x448] sm:$0xff]
    %v192 = vld [vmem:[%s2 + $0x450] sm:$0xff]
    %v193 = vld [vmem:[%s2 + $0x458] sm:$0xff]
    %v194 = vld [vmem:[%s2 + $0x460] sm:$0xff]
    %v195 = vld [vmem:[%s2 + $0x468] sm:$0xff]
    %v196 = vld [vmem:[%s2 + $0x470] sm:$0xff]
    %v197 = vld [vmem:[%s2 + $0x478] sm:$0xff]
    %v198 = vld [vmem:[%s2 + $0x480] sm:$0xff]
    %v199 = vld [vmem:[%s2 + $0x488] sm:$0xff]
    %v200 = vld [vmem:[%s2 + $0x490] sm:$0xff]
    %v201 = vld [vmem:[%s2 + $0x498] sm:$0xff]
    %v202 = vld [vmem:[%s2 + $0x4a0] sm:$0xff]
    %v203 = vld [vmem:[%s2 + $0x4a8] sm:$0xff]
    %v204 = vld [vmem:[%s2 + $0x4b0] sm:$0xff]
    %v205 = vld [vmem:[%s2 + $0x4b8] sm:$0xff]
    %v206 = vld [vmem:[%s2 + $0x4c0] sm:$0xff]
    %v207 = vld [vmem:[%s2 + $0x4c8] sm:$0xff]
    %v208 = vld [vmem:[%s2 + $0x4d0] sm:$0xff]
    %v209 = vld [vmem:[%s2 + $0x4d8] sm:$0xff]
    %v210 = vld [vmem:[%s2 + $0x4e0] sm:$0xff]
    %v211 = vld [vmem:[%s2 + $0x4e8] sm:$0xff]
    %v212 = vld [vmem:[%s2 + $0x4f0] sm:$0xff]
    %v213 = vld [vmem:[%s2 + $0x4f8] sm:$0xff]
    %v214 = vld [vmem:[%s2 + $0x500] sm:$0xff]
    %v215 = vld [vmem:[%s2 + $0x508] sm:$0xff]
    %v216 = vld [vmem:[%s2 + $0x510] sm:$0xff]
    %v217 = vld [vmem:[%s2 + $0x518] sm:$0xff]
    %v218 = vld [vmem:[%s2 + $0x520] sm:$0xff]
    %v219 = vld [vmem:[%s2 + $0x528] sm:$0xff]
    %v220 = vld [vmem:[%s2 + $0x530] sm:$0xff]
    %v221 = vld [vmem:[%s2 + $0x538] sm:$0xff]
    %v222 = vld [vmem:[%s2 + $0x540] sm:$0xff]
    %v223 = vld [vmem:[%s2 + $0x548] sm:$0xff]
    %v224 = vld [vmem:[%s2 + $0x550] sm:$0xff]
    %v225 = vld [vmem:[%s2 + $0x558] sm:$0xff]
    %v226 = vld [vmem:[%s2 + $0x560] sm:$0xff]
    %v227 = vld [vmem:[%s2 + $0x568] sm:$0xff]
    %v228 = vld [vmem:[%s2 + $0x570] sm:$0xff]
    %v229 = vld [vmem:[%s2 + $0x578] sm:$0xff]
    %v230 = vld [vmem:[%s2 + $0x580] sm:$0xff]
    %v231 = vld [vmem:[%s2 + $0x588] sm:$0xff]
    %v232 = vld [vmem:[%s2 + $0x590] sm:$0xff]
    %v233 = vld [vmem:[%s2 + $0x598] sm:$0xff]
    %v234 = vld [vmem:[%s2 + $0x5a0] sm:$0xff]
    %v235 = vld [vmem:[%s2 + $0x5a8] sm:$0xff]
    %v236 = vld [vmem:[%s2 + $0x5b0] sm:$0xff]
    %v237 = vld [vmem:[%s2 + $0x5b8] sm:$0xff]
    %v238 = vld [vmem:[%s2 + $0x5c0] sm:$0xff]
    %v239 = vld [vmem:[%s2 + $0x5c8] sm:$0xff]
    %v240 = vld [vmem:[%s2 + $0x5d0] sm:$0xff]
    %v241 = vld [vmem:[%s2 + $0x5d8] sm:$0xff]
    %v242 = vld [vmem:[%s2 + $0x5e0] sm:$0xff]
    %v243 = vld [vmem:[%s2 + $0x5e8] sm:$0xff]
    %v244 = vld [vmem:[%s2 + $0x5f0] sm:$0xff]
    %v245 = vld [vmem:[%s2 + $0x5f8] sm:$0xff]
    %v246 = vld [vmem:[%s2 + $0x600] sm:$0xff]
    %v247 = vld [vmem:[%s2 + $0x608] sm:$0xff]
    %v248 = vld [vmem:[%s2 + $0x610] sm:$0xff]
    %v249 = vld [vmem:[%s2 + $0x618] sm:$0xff]
    %v250 = vld [vmem:[%s3] sm:$0xf]
    %v252 = vlaneseq
    %v253 = vshrl.u32 %v252, 7
    %v254 = vsub.s32 0, %v253
    %v255 = vrot.slane %v250, %v254
    %v256 = vlaneseq
    %v257 = vshrl.u32 %v256, 7
    %v258 = vsub.s32 1, %v257
    %v259 = vrot.slane %v250, %v258
    %v260 = vlaneseq
    %v261 = vshrl.u32 %v260, 7
    %v262 = vsub.s32 2, %v261
    %v263 = vrot.slane %v250, %v262
    %v264 = vlaneseq
    %v265 = vshrl.u32 %v264, 7
    %v266 = vsub.s32 3, %v265
    %v267 = vrot.slane %v250, %v266
    %v468 = vunpack.c.l.b16 %v54
    %v469 = vunpack.c.h.b16 %v54
    %v470 = vunpack.c.l.b16 %v55
    %v471 = vunpack.c.h.b16 %v55
    %v472 = vunpack.c.l.b16 %v56
    %v473 = vunpack.c.h.b16 %v56
    %v474 = vunpack.c.l.b16 %v57
    %v475 = vunpack.c.h.b16 %v57
    %v476 = vunpack.c.l.b16 %v58
    %v477 = vunpack.c.h.b16 %v58
    %v478 = vunpack.c.l.b16 %v59
    %v479 = vunpack.c.h.b16 %v59
    %v480 = vunpack.c.l.b16 %v60
    %v481 = vunpack.c.h.b16 %v60
    %v482 = vunpack.c.l.b16 %v61
    %v483 = vunpack.c.h.b16 %v61
    %v484 = vunpack.c.l.b16 %v62
    %v485 = vunpack.c.h.b16 %v62
    %v486 = vunpack.c.l.b16 %v63
    %v487 = vunpack.c.h.b16 %v63
    %v488 = vunpack.c.l.b16 %v64
    %v489 = vunpack.c.h.b16 %v64
    %v490 = vunpack.c.l.b16 %v65
    %v491 = vunpack.c.h.b16 %v65
    %v492 = vunpack.c.l.b16 %v66
    %v493 = vunpack.c.h.b16 %v66
    %v494 = vunpack.c.l.b16 %v67
    %v495 = vunpack.c.h.b16 %v67
    %v496 = vunpack.c.l.b16 %v68
    %v497 = vunpack.c.h.b16 %v68
    %v498 = vunpack.c.l.b16 %v69
    %v499 = vunpack.c.h.b16 %v69
    %v500 = vunpack.c.l.b16 %v70
    %v501 = vunpack.c.h.b16 %v70
    %v502 = vunpack.c.l.b16 %v71
    %v503 = vunpack.c.h.b16 %v71
    %v504 = vunpack.c.l.b16 %v72
    %v505 = vunpack.c.h.b16 %v72
    %v506 = vunpack.c.l.b16 %v73
    %v507 = vunpack.c.h.b16 %v73
    %v508 = vunpack.c.l.b16 %v74
    %v509 = vunpack.c.h.b16 %v74
    %v510 = vunpack.c.l.b16 %v75
    %v511 = vunpack.c.h.b16 %v75
    %v512 = vunpack.c.l.b16 %v76
    %v513 = vunpack.c.h.b16 %v76
    %v514 = vunpack.c.l.b16 %v77
    %v515 = vunpack.c.h.b16 %v77
    %v516 = vunpack.c.l.b16 %v78
    %v517 = vunpack.c.h.b16 %v78
    %v518 = vunpack.c.l.b16 %v79
    %v519 = vunpack.c.h.b16 %v79
    %v520 = vunpack.c.l.b16 %v80
    %v521 = vunpack.c.h.b16 %v80
    %v522 = vunpack.c.l.b16 %v81
    %v523 = vunpack.c.h.b16 %v81
    %v524 = vunpack.c.l.b16 %v82
    %v525 = vunpack.c.h.b16 %v82
    %v526 = vunpack.c.l.b16 %v83
    %v527 = vunpack.c.h.b16 %v83
    %v528 = vunpack.c.l.b16 %v84
    %v529 = vunpack.c.h.b16 %v84
    %v530 = vunpack.c.l.b16 %v85
    %v531 = vunpack.c.h.b16 %v85
    %v532 = vunpack.c.l.b16 %v86
    %v533 = vunpack.c.h.b16 %v86
    %v534 = vunpack.c.l.b16 %v87
    %v535 = vunpack.c.h.b16 %v87
    %v536 = vunpack.c.l.b16 %v88
    %v537 = vunpack.c.h.b16 %v88
    %v538 = vunpack.c.l.b16 %v89
    %v539 = vunpack.c.h.b16 %v89
    %v540 = vunpack.c.l.b16 %v90
    %v541 = vunpack.c.h.b16 %v90
    %v542 = vunpack.c.l.b16 %v91
    %v543 = vunpack.c.h.b16 %v91
    %v544 = vunpack.c.l.b16 %v92
    %v545 = vunpack.c.h.b16 %v92
    %v546 = vunpack.c.l.b16 %v93
    %v547 = vunpack.c.h.b16 %v93
    %v548 = vunpack.c.l.b16 %v94
    %v549 = vunpack.c.h.b16 %v94
    %v550 = vunpack.c.l.b16 %v95
    %v551 = vunpack.c.h.b16 %v95
    %v552 = vunpack.c.l.b16 %v96
    %v553 = vunpack.c.h.b16 %v96
    %v554 = vunpack.c.l.b16 %v97
    %v555 = vunpack.c.h.b16 %v97
    %v556 = vunpack.c.l.b16 %v98
    %v557 = vunpack.c.h.b16 %v98
    %v558 = vunpack.c.l.b16 %v99
    %v559 = vunpack.c.h.b16 %v99
    %v560 = vunpack.c.l.b16 %v100
    %v561 = vunpack.c.h.b16 %v100
    %v562 = vunpack.c.l.b16 %v101
    %v563 = vunpack.c.h.b16 %v101
    %v564 = vunpack.c.l.b16 %v102
    %v565 = vunpack.c.h.b16 %v102
    %v566 = vunpack.c.l.b16 %v103
    %v567 = vunpack.c.h.b16 %v103
    %v568 = vunpack.c.l.b16 %v104
    %v569 = vunpack.c.h.b16 %v104
    %v570 = vunpack.c.l.b16 %v105
    %v571 = vunpack.c.h.b16 %v105
    %v572 = vunpack.c.l.b16 %v106
    %v573 = vunpack.c.h.b16 %v106
    %v574 = vunpack.c.l.b16 %v107
    %v575 = vunpack.c.h.b16 %v107
    %v576 = vunpack.c.l.b16 %v108
    %v577 = vunpack.c.h.b16 %v108
    %v578 = vunpack.c.l.b16 %v109
    %v579 = vunpack.c.h.b16 %v109
    %v580 = vunpack.c.l.b16 %v110
    %v581 = vunpack.c.h.b16 %v110
    %v582 = vunpack.c.l.b16 %v111
    %v583 = vunpack.c.h.b16 %v111
    %v584 = vunpack.c.l.b16 %v112
    %v585 = vunpack.c.h.b16 %v112
    %v586 = vunpack.c.l.b16 %v113
    %v587 = vunpack.c.h.b16 %v113
    %v588 = vunpack.c.l.b16 %v114
    %v589 = vunpack.c.h.b16 %v114
    %v590 = vunpack.c.l.b16 %v115
    %v591 = vunpack.c.h.b16 %v115
    %v592 = vunpack.c.l.b16 %v116
    %v593 = vunpack.c.h.b16 %v116
    %v594 = vunpack.c.l.b16 %v117
    %v595 = vunpack.c.h.b16 %v117
    %v596 = vunpack.c.l.b16 %v118
    %v597 = vunpack.c.h.b16 %v118
    %v598 = vunpack.c.l.b16 %v119
    %v599 = vunpack.c.h.b16 %v119
    %v600 = vunpack.c.l.b16 %v120
    %v601 = vunpack.c.h.b16 %v120
    %v602 = vunpack.c.l.b16 %v121
    %v603 = vunpack.c.h.b16 %v121
    %v604 = vunpack.c.l.b16 %v122
    %v605 = vunpack.c.h.b16 %v122
    %v606 = vunpack.c.l.b16 %v123
    %v607 = vunpack.c.h.b16 %v123
    %v608 = vunpack.c.l.b16 %v124
    %v609 = vunpack.c.h.b16 %v124
    %v610 = vunpack.c.l.b16 %v125
    %v611 = vunpack.c.h.b16 %v125
    %v612 = vunpack.c.l.b16 %v126
    %v613 = vunpack.c.h.b16 %v126
    %v614 = vunpack.c.l.b16 %v127
    %v615 = vunpack.c.h.b16 %v127
    %v616 = vunpack.c.l.b16 %v128
    %v617 = vunpack.c.h.b16 %v128
    %v618 = vunpack.c.l.b16 %v129
    %v619 = vunpack.c.h.b16 %v129
    %v620 = vunpack.c.l.b16 %v130
    %v621 = vunpack.c.h.b16 %v130
    %v622 = vunpack.c.l.b16 %v131
    %v623 = vunpack.c.h.b16 %v131
    %v624 = vunpack.c.l.b16 %v132
    %v625 = vunpack.c.h.b16 %v132
    %v626 = vunpack.c.l.b16 %v133
    %v627 = vunpack.c.h.b16 %v133
    %v628 = vunpack.c.l.b16 %v134
    %v629 = vunpack.c.h.b16 %v134
    %v630 = vunpack.c.l.b16 %v135
    %v631 = vunpack.c.h.b16 %v135
    %v632 = vunpack.c.l.b16 %v136
    %v633 = vunpack.c.h.b16 %v136
    %v634 = vunpack.c.l.b16 %v137
    %v635 = vunpack.c.h.b16 %v137
    %v636 = vunpack.c.l.b16 %v138
    %v637 = vunpack.c.h.b16 %v138
    %v638 = vunpack.c.l.b16 %v139
    %v639 = vunpack.c.h.b16 %v139
    %v640 = vunpack.c.l.b16 %v140
    %v641 = vunpack.c.h.b16 %v140
    %v642 = vunpack.c.l.b16 %v141
    %v643 = vunpack.c.h.b16 %v141
    %v644 = vunpack.c.l.b16 %v142
    %v645 = vunpack.c.h.b16 %v142
    %v646 = vunpack.c.l.b16 %v143
    %v647 = vunpack.c.h.b16 %v143
    %v648 = vunpack.c.l.b16 %v144
    %v649 = vunpack.c.h.b16 %v144
    %v650 = vunpack.c.l.b16 %v145
    %v651 = vunpack.c.h.b16 %v145
    %v652 = vunpack.c.l.b16 %v146
    %v653 = vunpack.c.h.b16 %v146
    %v654 = vunpack.c.l.b16 %v147
    %v655 = vunpack.c.h.b16 %v147
    %v656 = vunpack.c.l.b16 %v148
    %v657 = vunpack.c.h.b16 %v148
    %v658 = vunpack.c.l.b16 %v149
    %v659 = vunpack.c.h.b16 %v149
    %v660 = vunpack.c.l.b16 %v150
    %v661 = vunpack.c.h.b16 %v150
    %v662 = vunpack.c.l.b16 %v151
    %v663 = vunpack.c.h.b16 %v151
    %v664 = vunpack.c.l.b16 %v152
    %v665 = vunpack.c.h.b16 %v152
    %v666 = vunpack.c.l.b16 %v153
    %v667 = vunpack.c.h.b16 %v153
    %v668 = vunpack.c.l.b16 %v154
    %v669 = vunpack.c.h.b16 %v154
    %v670 = vunpack.c.l.b16 %v155
    %v671 = vunpack.c.h.b16 %v155
    %v672 = vunpack.c.l.b16 %v156
    %v673 = vunpack.c.h.b16 %v156
    %v674 = vunpack.c.l.b16 %v157
    %v675 = vunpack.c.h.b16 %v157
    %v676 = vunpack.c.l.b16 %v158
    %v677 = vunpack.c.h.b16 %v158
    %v678 = vunpack.c.l.b16 %v159
    %v679 = vunpack.c.h.b16 %v159
    %v680 = vunpack.c.l.b16 %v160
    %v681 = vunpack.c.h.b16 %v160
    %v682 = vunpack.c.l.b16 %v161
    %v683 = vunpack.c.h.b16 %v161
    %v684 = vunpack.c.l.b16 %v162
    %v685 = vunpack.c.h.b16 %v162
    %v686 = vunpack.c.l.b16 %v163
    %v687 = vunpack.c.h.b16 %v163
    %v688 = vunpack.c.l.b16 %v164
    %v689 = vunpack.c.h.b16 %v164
    %v690 = vunpack.c.l.b16 %v165
    %v691 = vunpack.c.h.b16 %v165
    %v692 = vunpack.c.l.b16 %v166
    %v693 = vunpack.c.h.b16 %v166
    %v694 = vunpack.c.l.b16 %v167
    %v695 = vunpack.c.h.b16 %v167
    %v696 = vunpack.c.l.b16 %v168
    %v697 = vunpack.c.h.b16 %v168
    %v698 = vunpack.c.l.b16 %v169
    %v699 = vunpack.c.h.b16 %v169
    %v700 = vunpack.c.l.b16 %v170
    %v701 = vunpack.c.h.b16 %v170
    %v702 = vunpack.c.l.b16 %v171
    %v703 = vunpack.c.h.b16 %v171
    %v704 = vunpack.c.l.b16 %v172
    %v705 = vunpack.c.h.b16 %v172
    %v706 = vunpack.c.l.b16 %v173
    %v707 = vunpack.c.h.b16 %v173
    %v708 = vunpack.c.l.b16 %v174
    %v709 = vunpack.c.h.b16 %v174
    %v710 = vunpack.c.l.b16 %v175
    %v711 = vunpack.c.h.b16 %v175
    %v712 = vunpack.c.l.b16 %v176
    %v713 = vunpack.c.h.b16 %v176
    %v714 = vunpack.c.l.b16 %v177
    %v715 = vunpack.c.h.b16 %v177
    %v716 = vunpack.c.l.b16 %v178
    %v717 = vunpack.c.h.b16 %v178
    %v718 = vunpack.c.l.b16 %v179
    %v719 = vunpack.c.h.b16 %v179
    %v720 = vunpack.c.l.b16 %v180
    %v721 = vunpack.c.h.b16 %v180
    %v722 = vunpack.c.l.b16 %v181
    %v723 = vunpack.c.h.b16 %v181
    %v724 = vunpack.c.l.b16 %v182
    %v725 = vunpack.c.h.b16 %v182
    %v726 = vunpack.c.l.b16 %v183
    %v727 = vunpack.c.h.b16 %v183
    %v728 = vunpack.c.l.b16 %v184
    %v729 = vunpack.c.h.b16 %v184
    %v730 = vunpack.c.l.b16 %v185
    %v731 = vunpack.c.h.b16 %v185
    %v732 = vunpack.c.l.b16 %v186
    %v733 = vunpack.c.h.b16 %v186
    %v734 = vunpack.c.l.b16 %v187
    %v735 = vunpack.c.h.b16 %v187
    %v736 = vunpack.c.l.b16 %v188
    %v737 = vunpack.c.h.b16 %v188
    %v738 = vunpack.c.l.b16 %v189
    %v739 = vunpack.c.h.b16 %v189
    %v740 = vunpack.c.l.b16 %v190
    %v741 = vunpack.c.h.b16 %v190
    %v742 = vunpack.c.l.b16 %v191
    %v743 = vunpack.c.h.b16 %v191
    %v744 = vunpack.c.l.b16 %v192
    %v745 = vunpack.c.h.b16 %v192
    %v746 = vunpack.c.l.b16 %v193
    %v747 = vunpack.c.h.b16 %v193
    %v748 = vunpack.c.l.b16 %v194
    %v749 = vunpack.c.h.b16 %v194
    %v750 = vunpack.c.l.b16 %v195
    %v751 = vunpack.c.h.b16 %v195
    %v752 = vunpack.c.l.b16 %v196
    %v753 = vunpack.c.h.b16 %v196
    %v754 = vunpack.c.l.b16 %v197
    %v755 = vunpack.c.h.b16 %v197
    %v756 = vunpack.c.l.b16 %v198
    %v757 = vunpack.c.h.b16 %v198
    %v758 = vunpack.c.l.b16 %v199
    %v759 = vunpack.c.h.b16 %v199
    %v760 = vunpack.c.l.b16 %v200
    %v761 = vunpack.c.h.b16 %v200
    %v762 = vunpack.c.l.b16 %v201
    %v763 = vunpack.c.h.b16 %v201
    %v764 = vunpack.c.l.b16 %v202
    %v765 = vunpack.c.h.b16 %v202
    %v766 = vunpack.c.l.b16 %v203
    %v767 = vunpack.c.h.b16 %v203
    %v768 = vunpack.c.l.b16 %v204
    %v769 = vunpack.c.h.b16 %v204
    %v770 = vunpack.c.l.b16 %v205
    %v771 = vunpack.c.h.b16 %v205
    %v772 = vunpack.c.l.b16 %v206
    %v773 = vunpack.c.h.b16 %v206
    %v774 = vunpack.c.l.b16 %v207
    %v775 = vunpack.c.h.b16 %v207
    %v776 = vunpack.c.l.b16 %v208
    %v777 = vunpack.c.h.b16 %v208
    %v778 = vunpack.c.l.b16 %v209
    %v779 = vunpack.c.h.b16 %v209
    %v780 = vunpack.c.l.b16 %v210
    %v781 = vunpack.c.h.b16 %v210
    %v782 = vunpack.c.l.b16 %v211
    %v783 = vunpack.c.h.b16 %v211
    %v784 = vunpack.c.l.b16 %v212
    %v785 = vunpack.c.h.b16 %v212
    %v786 = vunpack.c.l.b16 %v213
    %v787 = vunpack.c.h.b16 %v213
    %v788 = vunpack.c.l.b16 %v214
    %v789 = vunpack.c.h.b16 %v214
    %v790 = vunpack.c.l.b16 %v215
    %v791 = vunpack.c.h.b16 %v215
    %v792 = vunpack.c.l.b16 %v216
    %v793 = vunpack.c.h.b16 %v216
    %v794 = vunpack.c.l.b16 %v217
    %v795 = vunpack.c.h.b16 %v217
    %v796 = vunpack.c.l.b16 %v218
    %v797 = vunpack.c.h.b16 %v218
    %v798 = vunpack.c.l.b16 %v219
    %v799 = vunpack.c.h.b16 %v219
    %v800 = vunpack.c.l.b16 %v220
    %v801 = vunpack.c.h.b16 %v220
    %v802 = vunpack.c.l.b16 %v221
    %v803 = vunpack.c.h.b16 %v221
    %v804 = vunpack.c.l.b16 %v222
    %v805 = vunpack.c.h.b16 %v222
    %v806 = vunpack.c.l.b16 %v223
    %v807 = vunpack.c.h.b16 %v223
    %v808 = vunpack.c.l.b16 %v224
    %v809 = vunpack.c.h.b16 %v224
    %v810 = vunpack.c.l.b16 %v225
    %v811 = vunpack.c.h.b16 %v225
    %v812 = vunpack.c.l.b16 %v226
    %v813 = vunpack.c.h.b16 %v226
    %v814 = vunpack.c.l.b16 %v227
    %v815 = vunpack.c.h.b16 %v227
    %v816 = vunpack.c.l.b16 %v228
    %v817 = vunpack.c.h.b16 %v228
    %v818 = vunpack.c.l.b16 %v229
    %v819 = vunpack.c.h.b16 %v229
    %v820 = vunpack.c.l.b16 %v230
    %v821 = vunpack.c.h.b16 %v230
    %v822 = vunpack.c.l.b16 %v231
    %v823 = vunpack.c.h.b16 %v231
    %v824 = vunpack.c.l.b16 %v232
    %v825 = vunpack.c.h.b16 %v232
    %v826 = vunpack.c.l.b16 %v233
    %v827 = vunpack.c.h.b16 %v233
    %v828 = vunpack.c.l.b16 %v234
    %v829 = vunpack.c.h.b16 %v234
    %v830 = vunpack.c.l.b16 %v235
    %v831 = vunpack.c.h.b16 %v235
    %v832 = vunpack.c.l.b16 %v236
    %v833 = vunpack.c.h.b16 %v236
    %v834 = vunpack.c.l.b16 %v237
    %v835 = vunpack.c.h.b16 %v237
    %v836 = vunpack.c.l.b16 %v238
    %v837 = vunpack.c.h.b16 %v238
    %v838 = vunpack.c.l.b16 %v239
    %v839 = vunpack.c.h.b16 %v239
    %v840 = vunpack.c.l.b16 %v240
    %v841 = vunpack.c.h.b16 %v240
    %v842 = vunpack.c.l.b16 %v241
    %v843 = vunpack.c.h.b16 %v241
    %v844 = vunpack.c.l.b16 %v242
    %v845 = vunpack.c.h.b16 %v242
    %v846 = vunpack.c.l.b16 %v243
    %v847 = vunpack.c.h.b16 %v243
    %v848 = vunpack.c.l.b16 %v244
    %v849 = vunpack.c.h.b16 %v244
    %v850 = vunpack.c.l.b16 %v245
    %v851 = vunpack.c.h.b16 %v245
    %v852 = vunpack.c.l.b16 %v246
    %v853 = vunpack.c.h.b16 %v246
    %v854 = vunpack.c.l.b16 %v247
    %v855 = vunpack.c.h.b16 %v247
    %v856 = vunpack.c.l.b16 %v248
    %v857 = vunpack.c.h.b16 %v248
    %v858 = vunpack.c.l.b16 %v249
    %v859 = vunpack.c.h.b16 %v249
    %v860 = vpack.c.b16 %v472, %v468
    %v861 = vpack.c.b16 %v473, %v469
    %v862 = vpack.c.b16 %v474, %v470
    %v863 = vpack.c.b16 %v475, %v471
    %v864 = vpack.c.b16 %v480, %v476
    %v865 = vpack.c.b16 %v481, %v477
    %v866 = vpack.c.b16 %v482, %v478
    %v867 = vpack.c.b16 %v483, %v479
    %v868 = vpack.c.b16 %v488, %v484
    %v869 = vpack.c.b16 %v489, %v485
    %v870 = vpack.c.b16 %v490, %v486
    %v871 = vpack.c.b16 %v491, %v487
    %v872 = vpack.c.b16 %v496, %v492
    %v873 = vpack.c.b16 %v497, %v493
    %v874 = vpack.c.b16 %v498, %v494
    %v875 = vpack.c.b16 %v499, %v495
    %v876 = vpack.c.b16 %v504, %v500
    %v877 = vpack.c.b16 %v505, %v501
    %v878 = vpack.c.b16 %v506, %v502
    %v879 = vpack.c.b16 %v507, %v503
    %v880 = vpack.c.b16 %v512, %v508
    %v881 = vpack.c.b16 %v513, %v509
    %v882 = vpack.c.b16 %v514, %v510
    %v883 = vpack.c.b16 %v515, %v511
    %v884 = vpack.c.b16 %v520, %v516
    %v885 = vpack.c.b16 %v521, %v517
    %v886 = vpack.c.b16 %v522, %v518
    %v887 = vpack.c.b16 %v523, %v519
    %v888 = vpack.c.b16 %v528, %v524
    %v889 = vpack.c.b16 %v529, %v525
    %v890 = vpack.c.b16 %v530, %v526
    %v891 = vpack.c.b16 %v531, %v527
    %v892 = vpack.c.b16 %v536, %v532
    %v893 = vpack.c.b16 %v537, %v533
    %v894 = vpack.c.b16 %v538, %v534
    %v895 = vpack.c.b16 %v539, %v535
    %v896 = vpack.c.b16 %v544, %v540
    %v897 = vpack.c.b16 %v545, %v541
    %v898 = vpack.c.b16 %v546, %v542
    %v899 = vpack.c.b16 %v547, %v543
    %v900 = vpack.c.b16 %v552, %v548
    %v901 = vpack.c.b16 %v553, %v549
    %v902 = vpack.c.b16 %v554, %v550
    %v903 = vpack.c.b16 %v555, %v551
    %v904 = vpack.c.b16 %v560, %v556
    %v905 = vpack.c.b16 %v561, %v557
    %v906 = vpack.c.b16 %v562, %v558
    %v907 = vpack.c.b16 %v563, %v559
    %v908 = vpack.c.b16 %v568, %v564
    %v909 = vpack.c.b16 %v569, %v565
    %v910 = vpack.c.b16 %v570, %v566
    %v911 = vpack.c.b16 %v571, %v567
    %v912 = vpack.c.b16 %v576, %v572
    %v913 = vpack.c.b16 %v577, %v573
    %v914 = vpack.c.b16 %v578, %v574
    %v915 = vpack.c.b16 %v579, %v575
    %v916 = vpack.c.b16 %v584, %v580
    %v917 = vpack.c.b16 %v585, %v581
    %v918 = vpack.c.b16 %v586, %v582
    %v919 = vpack.c.b16 %v587, %v583
    %v920 = vpack.c.b16 %v592, %v588
    %v921 = vpack.c.b16 %v593, %v589
    %v922 = vpack.c.b16 %v594, %v590
    %v923 = vpack.c.b16 %v595, %v591
    %v924 = vpack.c.b16 %v600, %v596
    %v925 = vpack.c.b16 %v601, %v597
    %v926 = vpack.c.b16 %v602, %v598
    %v927 = vpack.c.b16 %v603, %v599
    %v928 = vpack.c.b16 %v608, %v604
    %v929 = vpack.c.b16 %v609, %v605
    %v930 = vpack.c.b16 %v610, %v606
    %v931 = vpack.c.b16 %v611, %v607
    %v932 = vpack.c.b16 %v616, %v612
    %v933 = vpack.c.b16 %v617, %v613
    %v934 = vpack.c.b16 %v618, %v614
    %v935 = vpack.c.b16 %v619, %v615
    %v936 = vpack.c.b16 %v624, %v620
    %v937 = vpack.c.b16 %v625, %v621
    %v938 = vpack.c.b16 %v626, %v622
    %v939 = vpack.c.b16 %v627, %v623
    %v940 = vpack.c.b16 %v632, %v628
    %v941 = vpack.c.b16 %v633, %v629
    %v942 = vpack.c.b16 %v634, %v630
    %v943 = vpack.c.b16 %v635, %v631
    %v944 = vpack.c.b16 %v640, %v636
    %v945 = vpack.c.b16 %v641, %v637
    %v946 = vpack.c.b16 %v642, %v638
    %v947 = vpack.c.b16 %v643, %v639
    %v948 = vpack.c.b16 %v648, %v644
    %v949 = vpack.c.b16 %v649, %v645
    %v950 = vpack.c.b16 %v650, %v646
    %v951 = vpack.c.b16 %v651, %v647
    %v952 = vpack.c.b16 %v656, %v652
    %v953 = vpack.c.b16 %v657, %v653
    %v954 = vpack.c.b16 %v658, %v654
    %v955 = vpack.c.b16 %v659, %v655
    %v956 = vpack.c.b16 %v664, %v660
    %v957 = vpack.c.b16 %v665, %v661
    %v958 = vpack.c.b16 %v666, %v662
    %v959 = vpack.c.b16 %v667, %v663
    %v960 = vpack.c.b16 %v672, %v668
    %v961 = vpack.c.b16 %v673, %v669
    %v962 = vpack.c.b16 %v674, %v670
    %v963 = vpack.c.b16 %v675, %v671
    %v964 = vpack.c.b16 %v680, %v676
    %v965 = vpack.c.b16 %v681, %v677
    %v966 = vpack.c.b16 %v682, %v678
    %v967 = vpack.c.b16 %v683, %v679
    %v968 = vpack.c.b16 %v688, %v684
    %v969 = vpack.c.b16 %v689, %v685
    %v970 = vpack.c.b16 %v690, %v686
    %v971 = vpack.c.b16 %v691, %v687
    %v972 = vpack.c.b16 %v696, %v692
    %v973 = vpack.c.b16 %v697, %v693
    %v974 = vpack.c.b16 %v698, %v694
    %v975 = vpack.c.b16 %v699, %v695
    %v976 = vpack.c.b16 %v704, %v700
    %v977 = vpack.c.b16 %v705, %v701
    %v978 = vpack.c.b16 %v706, %v702
    %v979 = vpack.c.b16 %v707, %v703
    %v980 = vpack.c.b16 %v712, %v708
    %v981 = vpack.c.b16 %v713, %v709
    %v982 = vpack.c.b16 %v714, %v710
    %v983 = vpack.c.b16 %v715, %v711
    %v984 = vpack.c.b16 %v720, %v716
    %v985 = vpack.c.b16 %v721, %v717
    %v986 = vpack.c.b16 %v722, %v718
    %v987 = vpack.c.b16 %v723, %v719
    %v988 = vpack.c.b16 %v728, %v724
    %v989 = vpack.c.b16 %v729, %v725
    %v990 = vpack.c.b16 %v730, %v726
    %v991 = vpack.c.b16 %v731, %v727
    %v992 = vpack.c.b16 %v736, %v732
    %v993 = vpack.c.b16 %v737, %v733
    %v994 = vpack.c.b16 %v738, %v734
    %v995 = vpack.c.b16 %v739, %v735
    %v996 = vpack.c.b16 %v744, %v740
    %v997 = vpack.c.b16 %v745, %v741
    %v998 = vpack.c.b16 %v746, %v742
    %v999 = vpack.c.b16 %v747, %v743
    %v1000 = vpack.c.b16 %v752, %v748
    %v1001 = vpack.c.b16 %v753, %v749
    %v1002 = vpack.c.b16 %v754, %v750
    %v1003 = vpack.c.b16 %v755, %v751
    %v1004 = vpack.c.b16 %v760, %v756
    %v1005 = vpack.c.b16 %v761, %v757
    %v1006 = vpack.c.b16 %v762, %v758
    %v1007 = vpack.c.b16 %v763, %v759
    %v1008 = vpack.c.b16 %v768, %v764
    %v1009 = vpack.c.b16 %v769, %v765
    %v1010 = vpack.c.b16 %v770, %v766
    %v1011 = vpack.c.b16 %v771, %v767
    %v1012 = vpack.c.b16 %v776, %v772
    %v1013 = vpack.c.b16 %v777, %v773
    %v1014 = vpack.c.b16 %v778, %v774
    %v1015 = vpack.c.b16 %v779, %v775
    %v1016 = vpack.c.b16 %v784, %v780
    %v1017 = vpack.c.b16 %v785, %v781
    %v1018 = vpack.c.b16 %v786, %v782
    %v1019 = vpack.c.b16 %v787, %v783
    %v1020 = vpack.c.b16 %v792, %v788
    %v1021 = vpack.c.b16 %v793, %v789
    %v1022 = vpack.c.b16 %v794, %v790
    %v1023 = vpack.c.b16 %v795, %v791
    %v1024 = vpack.c.b16 %v800, %v796
    %v1025 = vpack.c.b16 %v801, %v797
    %v1026 = vpack.c.b16 %v802, %v798
    %v1027 = vpack.c.b16 %v803, %v799
    %v1028 = vpack.c.b16 %v808, %v804
    %v1029 = vpack.c.b16 %v809, %v805
    %v1030 = vpack.c.b16 %v810, %v806
    %v1031 = vpack.c.b16 %v811, %v807
    %v1032 = vpack.c.b16 %v816, %v812
    %v1033 = vpack.c.b16 %v817, %v813
    %v1034 = vpack.c.b16 %v818, %v814
    %v1035 = vpack.c.b16 %v819, %v815
    %v1036 = vpack.c.b16 %v824, %v820
    %v1037 = vpack.c.b16 %v825, %v821
    %v1038 = vpack.c.b16 %v826, %v822
    %v1039 = vpack.c.b16 %v827, %v823
    %v1040 = vpack.c.b16 %v832, %v828
    %v1041 = vpack.c.b16 %v833, %v829
    %v1042 = vpack.c.b16 %v834, %v830
    %v1043 = vpack.c.b16 %v835, %v831
    %v1044 = vpack.c.b16 %v840, %v836
    %v1045 = vpack.c.b16 %v841, %v837
    %v1046 = vpack.c.b16 %v842, %v838
    %v1047 = vpack.c.b16 %v843, %v839
    %v1048 = vpack.c.b16 %v848, %v844
    %v1049 = vpack.c.b16 %v849, %v845
    %v1050 = vpack.c.b16 %v850, %v846
    %v1051 = vpack.c.b16 %v851, %v847
    %v1052 = vpack.c.b16 %v856, %v852
    %v1053 = vpack.c.b16 %v857, %v853
    %v1054 = vpack.c.b16 %v858, %v854
    %v1055 = vpack.c.b16 %v859, %v855
    %vm1252 = vcmask 130048
    %v1254 = vsel %vm1252, %v53, 0
    %1256 = vmatprep.subr.bf16.mxu0 %v861
    %1257 = vmatpush1.bf16.msra.mxu0 %v860
    %1258 = vmatprep.subr.bf16.mxu0 %v865
    %1259 = vmatpush1.bf16.msra.mxu0 %v864
    %1260 = vmatprep.subr.bf16.mxu0 %v869
    %1261 = vmatpush1.bf16.msra.mxu0 %v868
    %1262 = vmatprep.subr.bf16.mxu0 %v873
    %1263 = vmatpush1.bf16.msra.mxu0 %v872
    %1264 = vmatprep.subr.bf16.mxu0 %v877
    %1265 = vmatpush1.bf16.msra.mxu0 %v876
    %1266 = vmatprep.subr.bf16.mxu0 %v881
    %1267 = vmatpush1.bf16.msra.mxu0 %v880
    %1268 = vmatprep.subr.bf16.mxu0 %v885
    %1269 = vmatpush1.bf16.msra.mxu0 %v884
    %1270 = vmatprep.subr.bf16.mxu0 %v889
    %1271 = vmatpush1.bf16.msra.mxu0 %v888
    %1272 = vmatprep.subr.bf16.mxu0 %v893
    %1273 = vmatpush1.bf16.msra.mxu0 %v892
    %1274 = vmatprep.subr.bf16.mxu0 %v897
    %1275 = vmatpush1.bf16.msra.mxu0 %v896
    %1276 = vmatprep.subr.bf16.mxu0 %v901
    %1277 = vmatpush1.bf16.msra.mxu0 %v900
    %1278 = vmatprep.subr.bf16.mxu0 %v905
    %1279 = vmatpush1.bf16.msra.mxu0 %v904
    %1280 = vmatprep.subr.bf16.mxu0 %v909
    %1281 = vmatpush1.bf16.msra.mxu0 %v908
    %1282 = vmatprep.subr.bf16.mxu0 %v913
    %1283 = vmatpush1.bf16.msra.mxu0 %v912
    %1284 = vmatprep.subr.bf16.mxu0 %v917
    %1285 = vmatpush1.bf16.msra.mxu0 %v916
    %1286 = vmatprep.subr.bf16.mxu0 %v921
    %1287 = vmatpush1.bf16.msra.mxu0 %v920
    %1288 = vmatprep.mubr.bf16.mxu0 %v48
    %1289 = vmatmul.mubr.bf16.gmra.mrb[0].mxu0 %v47
    %v1290 = vpop.f32.mrb[0].mxu0
    %v1291 = vadd.f32 %v255, %v1290
    %v1292 = vpop.f32.mrb[0].mxu0
    %v1293 = vadd.f32 %v259, %v1292
    %v1294 = vpop.f32.mrb[0].mxu0
    %v1295 = vpop.f32.mrb[0].mxu0
    %1296 = vdwg.mxu0
    %1297 = vmatprep.subr.bf16.mxu0 %v925
    %1298 = vmatpush1.bf16.msra.mxu0 %v924
    %1299 = vmatprep.subr.bf16.mxu0 %v929
    %1300 = vmatpush1.bf16.msra.mxu0 %v928
    %1301 = vmatprep.subr.bf16.mxu0 %v933
    %1302 = vmatpush1.bf16.msra.mxu0 %v932
    %1303 = vmatprep.subr.bf16.mxu0 %v937
    %1304 = vmatpush1.bf16.msra.mxu0 %v936
    %1305 = vmatprep.subr.bf16.mxu0 %v941
    %1306 = vmatpush1.bf16.msra.mxu0 %v940
    %1307 = vmatprep.subr.bf16.mxu0 %v945
    %1308 = vmatpush1.bf16.msra.mxu0 %v944
    %1309 = vmatprep.subr.bf16.mxu0 %v949
    %1310 = vmatpush1.bf16.msra.mxu0 %v948
    %1311 = vmatprep.subr.bf16.mxu0 %v953
    %1312 = vmatpush1.bf16.msra.mxu0 %v952
    %1313 = vmatprep.subr.bf16.mxu0 %v957
    %1314 = vmatpush1.bf16.msra.mxu0 %v956
    %1315 = vmatprep.subr.bf16.mxu0 %v961
    %1316 = vmatpush1.bf16.msra.mxu0 %v960
    %1317 = vmatprep.subr.bf16.mxu0 %v965
    %1318 = vmatpush1.bf16.msra.mxu0 %v964
    %1319 = vmatprep.subr.bf16.mxu0 %v969
    %1320 = vmatpush1.bf16.msra.mxu0 %v968
    %1321 = vmatprep.subr.bf16.mxu0 %v973
    %1322 = vmatpush1.bf16.msra.mxu0 %v972
    %1323 = vmatprep.subr.bf16.mxu0 %v977
    %1324 = vmatpush1.bf16.msra.mxu0 %v976
    %1325 = vmatprep.subr.bf16.mxu0 %v981
    %1326 = vmatpush1.bf16.msra.mxu0 %v980
    %1327 = vmatprep.subr.bf16.mxu0 %v985
    %1328 = vmatpush1.bf16.msra.mxu0 %v984
    %1329 = vmatprep.mubr.bf16.mxu0 %v50
    %1330 = vmatmul.mubr.bf16.gmra.mrb[0].mxu0 %v49
    %v1331 = vpop.f32.mrb[0].mxu0
    %v1332 = vadd.f32 %v1291, %v1331
    %v1333 = vpop.f32.mrb[0].mxu0
    %v1334 = vadd.f32 %v1293, %v1333
    %v1335 = vpop.f32.mrb[0].mxu0
    %v1336 = vpop.f32.mrb[0].mxu0
    %1337 = vdwg.mxu0
    %1338 = vmatprep.subr.bf16.mxu0 %v989
    %1339 = vmatpush1.bf16.msra.mxu0 %v988
    %1340 = vmatprep.subr.bf16.mxu0 %v993
    %1341 = vmatpush1.bf16.msra.mxu0 %v992
    %1342 = vmatprep.subr.bf16.mxu0 %v997
    %1343 = vmatpush1.bf16.msra.mxu0 %v996
    %1344 = vmatprep.subr.bf16.mxu0 %v1001
    %1345 = vmatpush1.bf16.msra.mxu0 %v1000
    %1346 = vmatprep.subr.bf16.mxu0 %v1005
    %1347 = vmatpush1.bf16.msra.mxu0 %v1004
    %1348 = vmatprep.subr.bf16.mxu0 %v1009
    %1349 = vmatpush1.bf16.msra.mxu0 %v1008
    %1350 = vmatprep.subr.bf16.mxu0 %v1013
    %1351 = vmatpush1.bf16.msra.mxu0 %v1012
    %1352 = vmatprep.subr.bf16.mxu0 %v1017
    %1353 = vmatpush1.bf16.msra.mxu0 %v1016
    %1354 = vmatprep.subr.bf16.mxu0 %v1021
    %1355 = vmatpush1.bf16.msra.mxu0 %v1020
    %1356 = vmatprep.subr.bf16.mxu0 %v1025
    %1357 = vmatpush1.bf16.msra.mxu0 %v1024
    %1358 = vmatprep.subr.bf16.mxu0 %v1029
    %1359 = vmatpush1.bf16.msra.mxu0 %v1028
    %1360 = vmatprep.subr.bf16.mxu0 %v1033
    %1361 = vmatpush1.bf16.msra.mxu0 %v1032
    %1362 = vmatprep.subr.bf16.mxu0 %v1037
    %1363 = vmatpush1.bf16.msra.mxu0 %v1036
    %1364 = vmatprep.subr.bf16.mxu0 %v1041
    %1365 = vmatpush1.bf16.msra.mxu0 %v1040
    %1366 = vmatprep.subr.bf16.mxu0 %v1045
    %1367 = vmatpush1.bf16.msra.mxu0 %v1044
    %1368 = vmatprep.subr.bf16.mxu0 %v1049
    %1369 = vmatpush1.bf16.msra.mxu0 %v1048
    %1370 = vmatprep.mubr.bf16.mxu0 %v52
    %1371 = vmatmul.mubr.bf16.gmra.mrb[0].mxu0 %v51
    %v1372 = vpop.f32.mrb[0].mxu0
    %v1373 = vadd.f32 %v1332, %v1372
    %v1374 = vpop.f32.mrb[0].mxu0
    %v1375 = vadd.f32 %v1334, %v1374
    %v1376 = vpop.f32.mrb[0].mxu0
    %v1377 = vpop.f32.mrb[0].mxu0
    %1378 = vdwg.mxu0
    %1379 = vmatprep.subr.bf16.mxu0 %v1053
    %1380 = vmatpush1.bf16.msra.mxu0 %v1052
    %1381 = vmatprep.subr.bf16.mxu0 0
    %1382 = vmatpush1.bf16.msra.mxu0 0
    %1383 = vmatprep.subr.bf16.mxu0 0
    %1384 = vmatpush1.bf16.msra.mxu0 0
    %1385 = vmatprep.subr.bf16.mxu0 0
    %1386 = vmatpush1.bf16.msra.mxu0 0
    %1387 = vmatprep.subr.bf16.mxu0 0
    %1388 = vmatpush1.bf16.msra.mxu0 0
    %1389 = vmatprep.subr.bf16.mxu0 0
    %1390 = vmatpush1.bf16.msra.mxu0 0
    %1391 = vmatprep.subr.bf16.mxu0 0
    %1392 = vmatpush1.bf16.msra.mxu0 0
    %1393 = vmatprep.subr.bf16.mxu0 0
    %1394 = vmatpush1.bf16.msra.mxu0 0
    %1395 = vmatprep.subr.bf16.mxu0 0
    %1396 = vmatpush1.bf16.msra.mxu0 0
    %1397 = vmatprep.subr.bf16.mxu0 0
    %1398 = vmatpush1.bf16.msra.mxu0 0
    %1399 = vmatprep.subr.bf16.mxu0 0
    %1400 = vmatpush1.bf16.msra.mxu0 0
    %1401 = vmatprep.subr.bf16.mxu0 0
    %1402 = vmatpush1.bf16.msra.mxu0 0
    %1403 = vmatprep.subr.bf16.mxu0 0
    %1404 = vmatpush1.bf16.msra.mxu0 0
    %1405 = vmatprep.subr.bf16.mxu0 0
    %1406 = vmatpush1.bf16.msra.mxu0 0
    %1407 = vmatprep.subr.bf16.mxu0 0
    %1408 = vmatpush1.bf16.msra.mxu0 0
    %1409 = vmatprep.subr.bf16.mxu0 0
    %1410 = vmatpush1.bf16.msra.mxu0 0
    %1411 = vmatprep.mubr.bf16.mxu0 0
    %1412 = vmatmul.mubr.bf16.gmra.mrb[0].mxu0 %v1254
    %v1413 = vpop.f32.mrb[0].mxu0
    %v1414 = vadd.f32 %v1373, %v1413
    %v1415 = vpop.f32.mrb[0].mxu0
    %v1416 = vadd.f32 %v1375, %v1415
    %v1417 = vpop.f32.mrb[0].mxu0
    %v1418 = vpop.f32.mrb[0].mxu0
    %1419 = vdwg.mxu0
    %1420 = vmatprep.subr.bf16.mxu0 %v863
    %1421 = vmatpush1.bf16.msra.mxu0 %v862
    %1422 = vmatprep.subr.bf16.mxu0 %v867
    %1423 = vmatpush1.bf16.msra.mxu0 %v866
    %1424 = vmatprep.subr.bf16.mxu0 %v871
    %1425 = vmatpush1.bf16.msra.mxu0 %v870
    %1426 = vmatprep.subr.bf16.mxu0 %v875
    %1427 = vmatpush1.bf16.msra.mxu0 %v874
    %1428 = vmatprep.subr.bf16.mxu0 %v879
    %1429 = vmatpush1.bf16.msra.mxu0 %v878
    %1430 = vmatprep.subr.bf16.mxu0 %v883
    %1431 = vmatpush1.bf16.msra.mxu0 %v882
    %1432 = vmatprep.subr.bf16.mxu0 %v887
    %1433 = vmatpush1.bf16.msra.mxu0 %v886
    %1434 = vmatprep.subr.bf16.mxu0 %v891
    %1435 = vmatpush1.bf16.msra.mxu0 %v890
    %1436 = vmatprep.subr.bf16.mxu0 %v895
    %1437 = vmatpush1.bf16.msra.mxu0 %v894
    %1438 = vmatprep.subr.bf16.mxu0 %v899
    %1439 = vmatpush1.bf16.msra.mxu0 %v898
    %1440 = vmatprep.subr.bf16.mxu0 %v903
    %1441 = vmatpush1.bf16.msra.mxu0 %v902
    %1442 = vmatprep.subr.bf16.mxu0 %v907
    %1443 = vmatpush1.bf16.msra.mxu0 %v906
    %1444 = vmatprep.subr.bf16.mxu0 %v911
    %1445 = vmatpush1.bf16.msra.mxu0 %v910
    %1446 = vmatprep.subr.bf16.mxu0 %v915
    %1447 = vmatpush1.bf16.msra.mxu0 %v914
    %1448 = vmatprep.subr.bf16.mxu0 %v919
    %1449 = vmatpush1.bf16.msra.mxu0 %v918
    %1450 = vmatprep.subr.bf16.mxu0 %v923
    %1451 = vmatpush1.bf16.msra.mxu0 %v922
    %1452 = vmatprep.mubr.bf16.mxu0 %v48
    %1453 = vmatmul.mubr.bf16.gmra.mrb[0].mxu0 %v47
    %v1454 = vpop.f32.mrb[0].mxu0
    %v1455 = vadd.f32 %v263, %v1454
    %v1456 = vpop.f32.mrb[0].mxu0
    %v1457 = vadd.f32 %v267, %v1456
    %v1458 = vpop.f32.mrb[0].mxu0
    %v1459 = vpop.f32.mrb[0].mxu0
    %1460 = vdwg.mxu0
    %1461 = vmatprep.subr.bf16.mxu0 %v927
    %1462 = vmatpush1.bf16.msra.mxu0 %v926
    %1463 = vmatprep.subr.bf16.mxu0 %v931
    %1464 = vmatpush1.bf16.msra.mxu0 %v930
    %1465 = vmatprep.subr.bf16.mxu0 %v935
    %1466 = vmatpush1.bf16.msra.mxu0 %v934
    %1467 = vmatprep.subr.bf16.mxu0 %v939
    %1468 = vmatpush1.bf16.msra.mxu0 %v938
    %1469 = vmatprep.subr.bf16.mxu0 %v943
    %1470 = vmatpush1.bf16.msra.mxu0 %v942
    %1471 = vmatprep.subr.bf16.mxu0 %v947
    %1472 = vmatpush1.bf16.msra.mxu0 %v946
    %1473 = vmatprep.subr.bf16.mxu0 %v951
    %1474 = vmatpush1.bf16.msra.mxu0 %v950
    %1475 = vmatprep.subr.bf16.mxu0 %v955
    %1476 = vmatpush1.bf16.msra.mxu0 %v954
    %1477 = vmatprep.subr.bf16.mxu0 %v959
    %1478 = vmatpush1.bf16.msra.mxu0 %v958
    %1479 = vmatprep.subr.bf16.mxu0 %v963
    %1480 = vmatpush1.bf16.msra.mxu0 %v962
    %1481 = vmatprep.subr.bf16.mxu0 %v967
    %1482 = vmatpush1.bf16.msra.mxu0 %v966
    %1483 = vmatprep.subr.bf16.mxu0 %v971
    %1484 = vmatpush1.bf16.msra.mxu0 %v970
    %1485 = vmatprep.subr.bf16.mxu0 %v975
    %1486 = vmatpush1.bf16.msra.mxu0 %v974
    %1487 = vmatprep.subr.bf16.mxu0 %v979
    %1488 = vmatpush1.bf16.msra.mxu0 %v978
    %1489 = vmatprep.subr.bf16.mxu0 %v983
    %1490 = vmatpush1.bf16.msra.mxu0 %v982
    %1491 = vmatprep.subr.bf16.mxu0 %v987
    %1492 = vmatpush1.bf16.msra.mxu0 %v986
    %1493 = vmatprep.mubr.bf16.mxu0 %v50
    %1494 = vmatmul.mubr.bf16.gmra.mrb[0].mxu0 %v49
    %v1495 = vpop.f32.mrb[0].mxu0
    %v1496 = vadd.f32 %v1455, %v1495
    %v1497 = vpop.f32.mrb[0].mxu0
    %v1498 = vadd.f32 %v1457, %v1497
    %v1499 = vpop.f32.mrb[0].mxu0
    %v1500 = vpop.f32.mrb[0].mxu0
    %1501 = vdwg.mxu0
    %1502 = vmatprep.subr.bf16.mxu0 %v991
    %1503 = vmatpush1.bf16.msra.mxu0 %v990
    %1504 = vmatprep.subr.bf16.mxu0 %v995
    %1505 = vmatpush1.bf16.msra.mxu0 %v994
    %1506 = vmatprep.subr.bf16.mxu0 %v999
    %1507 = vmatpush1.bf16.msra.mxu0 %v998
    %1508 = vmatprep.subr.bf16.mxu0 %v1003
    %1509 = vmatpush1.bf16.msra.mxu0 %v1002
    %1510 = vmatprep.subr.bf16.mxu0 %v1007
    %1511 = vmatpush1.bf16.msra.mxu0 %v1006
    %1512 = vmatprep.subr.bf16.mxu0 %v1011
    %1513 = vmatpush1.bf16.msra.mxu0 %v1010
    %1514 = vmatprep.subr.bf16.mxu0 %v1015
    %1515 = vmatpush1.bf16.msra.mxu0 %v1014
    %1516 = vmatprep.subr.bf16.mxu0 %v1019
    %1517 = vmatpush1.bf16.msra.mxu0 %v1018
    %1518 = vmatprep.subr.bf16.mxu0 %v1023
    %1519 = vmatpush1.bf16.msra.mxu0 %v1022
    %1520 = vmatprep.subr.bf16.mxu0 %v1027
    %1521 = vmatpush1.bf16.msra.mxu0 %v1026
    %1522 = vmatprep.subr.bf16.mxu0 %v1031
    %1523 = vmatpush1.bf16.msra.mxu0 %v1030
    %1524 = vmatprep.subr.bf16.mxu0 %v1035
    %1525 = vmatpush1.bf16.msra.mxu0 %v1034
    %1526 = vmatprep.subr.bf16.mxu0 %v1039
    %1527 = vmatpush1.bf16.msra.mxu0 %v1038
    %1528 = vmatprep.subr.bf16.mxu0 %v1043
    %1529 = vmatpush1.bf16.msra.mxu0 %v1042
    %1530 = vmatprep.subr.bf16.mxu0 %v1047
    %1531 = vmatpush1.bf16.msra.mxu0 %v1046
    %1532 = vmatprep.subr.bf16.mxu0 %v1051
    %1533 = vmatpush1.bf16.msra.mxu0 %v1050
    %1534 = vmatprep.mubr.bf16.mxu0 %v52
    %1535 = vmatmul.mubr.bf16.gmra.mrb[0].mxu0 %v51
    %v1536 = vpop.f32.mrb[0].mxu0
    %v1537 = vadd.f32 %v1496, %v1536
    %v1538 = vpop.f32.mrb[0].mxu0
    %v1539 = vadd.f32 %v1498, %v1538
    %v1540 = vpop.f32.mrb[0].mxu0
    %v1541 = vpop.f32.mrb[0].mxu0
    %1542 = vdwg.mxu0
    %1543 = vmatprep.subr.bf16.mxu0 %v1055
    %1544 = vmatpush1.bf16.msra.mxu0 %v1054
    %1545 = vmatprep.subr.bf16.mxu0 0
    %1546 = vmatpush1.bf16.msra.mxu0 0
    %1547 = vmatprep.subr.bf16.mxu0 0
    %1548 = vmatpush1.bf16.msra.mxu0 0
    %1549 = vmatprep.subr.bf16.mxu0 0
    %1550 = vmatpush1.bf16.msra.mxu0 0
    %1551 = vmatprep.subr.bf16.mxu0 0
    %1552 = vmatpush1.bf16.msra.mxu0 0
    %1553 = vmatprep.subr.bf16.mxu0 0
    %1554 = vmatpush1.bf16.msra.mxu0 0
    %1555 = vmatprep.subr.bf16.mxu0 0
    %1556 = vmatpush1.bf16.msra.mxu0 0
    %1557 = vmatprep.subr.bf16.mxu0 0
    %1558 = vmatpush1.bf16.msra.mxu0 0
    %1559 = vmatprep.subr.bf16.mxu0 0
    %1560 = vmatpush1.bf16.msra.mxu0 0
    %1561 = vmatprep.subr.bf16.mxu0 0
    %1562 = vmatpush1.bf16.msra.mxu0 0
    %1563 = vmatprep.subr.bf16.mxu0 0
    %1564 = vmatpush1.bf16.msra.mxu0 0
    %1565 = vmatprep.subr.bf16.mxu0 0
    %1566 = vmatpush1.bf16.msra.mxu0 0
    %1567 = vmatprep.subr.bf16.mxu0 0
    %1568 = vmatpush1.bf16.msra.mxu0 0
    %1569 = vmatprep.subr.bf16.mxu0 0
    %1570 = vmatpush1.bf16.msra.mxu0 0
    %1571 = vmatprep.subr.bf16.mxu0 0
    %1572 = vmatpush1.bf16.msra.mxu0 0
    %1573 = vmatprep.subr.bf16.mxu0 0
    %1574 = vmatpush1.bf16.msra.mxu0 0
    %1575 = vmatprep.mubr.bf16.mxu0 0
    %1576 = vmatmul.mubr.bf16.gmra.mrb[0].mxu0 %v1254
    %v1577 = vpop.f32.mrb[0].mxu0
    %v1578 = vadd.f32 %v1537, %v1577
    %v1579 = vpop.f32.mrb[0].mxu0
    %v1580 = vadd.f32 %v1539, %v1579
    %v1581 = vpop.f32.mrb[0].mxu0
    %v1582 = vpop.f32.mrb[0].mxu0
    %1583 = vdwg.mxu0
    %v1584 = vmax.f32 %v1414, 0.0
    %v1585 = vmax.f32 %v1416, 0.0
    %v1586 = vmax.f32 %v1578, 0.0
    %v1587 = vmax.f32 %v1580, 0.0
    %v1588 = vpack.c.bf16 %v1584, %v1584
    %v1589 = vpack.c.bf16 %v1585, %v1585
    %v1590 = vpack.c.bf16 %v1586, %v1586
    %v1591 = vpack.c.bf16 %v1587, %v1587
    %v1592 = vld [vmem:[%s4] sm:$0xff]
    %v1593 = vld [vmem:[%s4 + $0x8] sm:$0xff]
    %v1594 = vld [vmem:[%s4 + $0x10] sm:$0xff]
    %v1595 = vld [vmem:[%s4 + $0x18] sm:$0xff]
    %v1596 = vld [vmem:[%s4 + $0x20] sm:$0xff]
    %v1597 = vld [vmem:[%s4 + $0x28] sm:$0xff]
    %v1598 = vld [vmem:[%s4 + $0x30] sm:$0xff]
    %v1599 = vld [vmem:[%s4 + $0x38] sm:$0xff]
    %v1600 = vld [vmem:[%s4 + $0x40] sm:$0xff]
    %v1601 = vld [vmem:[%s4 + $0x48] sm:$0xff]
    %v1602 = vld [vmem:[%s4 + $0x50] sm:$0xff]
    %v1603 = vld [vmem:[%s4 + $0x58] sm:$0xff]
    %v1604 = vld [vmem:[%s4 + $0x60] sm:$0xff]
    %v1605 = vld [vmem:[%s4 + $0x68] sm:$0xff]
    %v1606 = vld [vmem:[%s4 + $0x70] sm:$0xff]
    %v1607 = vld [vmem:[%s4 + $0x78] sm:$0xff]
    %v1608 = vld [vmem:[%s4 + $0x80] sm:$0xff]
    %v1609 = vld [vmem:[%s4 + $0x88] sm:$0xff]
    %v1610 = vld [vmem:[%s4 + $0x90] sm:$0xff]
    %v1611 = vld [vmem:[%s4 + $0x98] sm:$0xff]
    %v1612 = vld [vmem:[%s4 + $0xa0] sm:$0xff]
    %v1613 = vld [vmem:[%s4 + $0xa8] sm:$0xff]
    %v1614 = vld [vmem:[%s4 + $0xb0] sm:$0xff]
    %v1615 = vld [vmem:[%s4 + $0xb8] sm:$0xff]
    %v1616 = vld [vmem:[%s4 + $0xc0] sm:$0xff]
    %v1617 = vld [vmem:[%s4 + $0xc8] sm:$0xff]
    %v1618 = vld [vmem:[%s4 + $0xd0] sm:$0xff]
    %v1619 = vld [vmem:[%s4 + $0xd8] sm:$0xff]
    %v1620 = vld [vmem:[%s4 + $0xe0] sm:$0xff]
    %v1621 = vld [vmem:[%s4 + $0xe8] sm:$0xff]
    %v1622 = vld [vmem:[%s4 + $0xf0] sm:$0xff]
    %v1623 = vld [vmem:[%s4 + $0xf8] sm:$0xff]
    %v1624 = vld [vmem:[%s4 + $0x100] sm:$0xff]
    %v1625 = vld [vmem:[%s4 + $0x108] sm:$0xff]
    %v1626 = vld [vmem:[%s4 + $0x110] sm:$0xff]
    %v1627 = vld [vmem:[%s4 + $0x118] sm:$0xff]
    %v1628 = vld [vmem:[%s4 + $0x120] sm:$0xff]
    %v1629 = vld [vmem:[%s4 + $0x128] sm:$0xff]
    %v1630 = vld [vmem:[%s4 + $0x130] sm:$0xff]
    %v1631 = vld [vmem:[%s4 + $0x138] sm:$0xff]
    %v1632 = vld [vmem:[%s4 + $0x140] sm:$0xff]
    %v1633 = vld [vmem:[%s4 + $0x148] sm:$0xff]
    %v1634 = vld [vmem:[%s4 + $0x150] sm:$0xff]
    %v1635 = vld [vmem:[%s4 + $0x158] sm:$0xff]
    %v1636 = vld [vmem:[%s4 + $0x160] sm:$0xff]
    %v1637 = vld [vmem:[%s4 + $0x168] sm:$0xff]
    %v1638 = vld [vmem:[%s4 + $0x170] sm:$0xff]
    %v1639 = vld [vmem:[%s4 + $0x178] sm:$0xff]
    %v1640 = vld [vmem:[%s4 + $0x180] sm:$0xff]
    %v1641 = vld [vmem:[%s4 + $0x188] sm:$0xff]
    %v1642 = vld [vmem:[%s5] sm:$0x3]
    %v1644 = vlaneseq
    %v1645 = vshrl.u32 %v1644, 7
    %v1646 = vsub.s32 0, %v1645
    %v1647 = vrot.slane %v1642, %v1646
    %v1648 = vlaneseq
    %v1649 = vshrl.u32 %v1648, 7
    %v1650 = vsub.s32 1, %v1649
    %v1651 = vrot.slane %v1642, %v1650
    %v1704 = vunpack.c.l.b16 %v1592
    %v1705 = vunpack.c.h.b16 %v1592
    %v1706 = vunpack.c.l.b16 %v1593
    %v1707 = vunpack.c.h.b16 %v1593
    %v1708 = vunpack.c.l.b16 %v1594
    %v1709 = vunpack.c.h.b16 %v1594
    %v1710 = vunpack.c.l.b16 %v1595
    %v1711 = vunpack.c.h.b16 %v1595
    %v1712 = vunpack.c.l.b16 %v1596
    %v1713 = vunpack.c.h.b16 %v1596
    %v1714 = vunpack.c.l.b16 %v1597
    %v1715 = vunpack.c.h.b16 %v1597
    %v1716 = vunpack.c.l.b16 %v1598
    %v1717 = vunpack.c.h.b16 %v1598
    %v1718 = vunpack.c.l.b16 %v1599
    %v1719 = vunpack.c.h.b16 %v1599
    %v1720 = vunpack.c.l.b16 %v1600
    %v1721 = vunpack.c.h.b16 %v1600
    %v1722 = vunpack.c.l.b16 %v1601
    %v1723 = vunpack.c.h.b16 %v1601
    %v1724 = vunpack.c.l.b16 %v1602
    %v1725 = vunpack.c.h.b16 %v1602
    %v1726 = vunpack.c.l.b16 %v1603
    %v1727 = vunpack.c.h.b16 %v1603
    %v1728 = vunpack.c.l.b16 %v1604
    %v1729 = vunpack.c.h.b16 %v1604
    %v1730 = vunpack.c.l.b16 %v1605
    %v1731 = vunpack.c.h.b16 %v1605
    %v1732 = vunpack.c.l.b16 %v1606
    %v1733 = vunpack.c.h.b16 %v1606
    %v1734 = vunpack.c.l.b16 %v1607
    %v1735 = vunpack.c.h.b16 %v1607
    %v1736 = vunpack.c.l.b16 %v1608
    %v1737 = vunpack.c.h.b16 %v1608
    %v1738 = vunpack.c.l.b16 %v1609
    %v1739 = vunpack.c.h.b16 %v1609
    %v1740 = vunpack.c.l.b16 %v1610
    %v1741 = vunpack.c.h.b16 %v1610
    %v1742 = vunpack.c.l.b16 %v1611
    %v1743 = vunpack.c.h.b16 %v1611
    %v1744 = vunpack.c.l.b16 %v1612
    %v1745 = vunpack.c.h.b16 %v1612
    %v1746 = vunpack.c.l.b16 %v1613
    %v1747 = vunpack.c.h.b16 %v1613
    %v1748 = vunpack.c.l.b16 %v1614
    %v1749 = vunpack.c.h.b16 %v1614
    %v1750 = vunpack.c.l.b16 %v1615
    %v1751 = vunpack.c.h.b16 %v1615
    %v1752 = vunpack.c.l.b16 %v1616
    %v1753 = vunpack.c.h.b16 %v1616
    %v1754 = vunpack.c.l.b16 %v1617
    %v1755 = vunpack.c.h.b16 %v1617
    %v1756 = vunpack.c.l.b16 %v1618
    %v1757 = vunpack.c.h.b16 %v1618
    %v1758 = vunpack.c.l.b16 %v1619
    %v1759 = vunpack.c.h.b16 %v1619
    %v1760 = vunpack.c.l.b16 %v1620
    %v1761 = vunpack.c.h.b16 %v1620
    %v1762 = vunpack.c.l.b16 %v1621
    %v1763 = vunpack.c.h.b16 %v1621
    %v1764 = vunpack.c.l.b16 %v1622
    %v1765 = vunpack.c.h.b16 %v1622
    %v1766 = vunpack.c.l.b16 %v1623
    %v1767 = vunpack.c.h.b16 %v1623
    %v1768 = vunpack.c.l.b16 %v1624
    %v1769 = vunpack.c.h.b16 %v1624
    %v1770 = vunpack.c.l.b16 %v1625
    %v1771 = vunpack.c.h.b16 %v1625
    %v1772 = vunpack.c.l.b16 %v1626
    %v1773 = vunpack.c.h.b16 %v1626
    %v1774 = vunpack.c.l.b16 %v1627
    %v1775 = vunpack.c.h.b16 %v1627
    %v1776 = vunpack.c.l.b16 %v1628
    %v1777 = vunpack.c.h.b16 %v1628
    %v1778 = vunpack.c.l.b16 %v1629
    %v1779 = vunpack.c.h.b16 %v1629
    %v1780 = vunpack.c.l.b16 %v1630
    %v1781 = vunpack.c.h.b16 %v1630
    %v1782 = vunpack.c.l.b16 %v1631
    %v1783 = vunpack.c.h.b16 %v1631
    %v1784 = vunpack.c.l.b16 %v1632
    %v1785 = vunpack.c.h.b16 %v1632
    %v1786 = vunpack.c.l.b16 %v1633
    %v1787 = vunpack.c.h.b16 %v1633
    %v1788 = vunpack.c.l.b16 %v1634
    %v1789 = vunpack.c.h.b16 %v1634
    %v1790 = vunpack.c.l.b16 %v1635
    %v1791 = vunpack.c.h.b16 %v1635
    %v1792 = vunpack.c.l.b16 %v1636
    %v1793 = vunpack.c.h.b16 %v1636
    %v1794 = vunpack.c.l.b16 %v1637
    %v1795 = vunpack.c.h.b16 %v1637
    %v1796 = vunpack.c.l.b16 %v1638
    %v1797 = vunpack.c.h.b16 %v1638
    %v1798 = vunpack.c.l.b16 %v1639
    %v1799 = vunpack.c.h.b16 %v1639
    %v1800 = vunpack.c.l.b16 %v1640
    %v1801 = vunpack.c.h.b16 %v1640
    %v1802 = vunpack.c.l.b16 %v1641
    %v1803 = vunpack.c.h.b16 %v1641
    %v1804 = vpack.c.b16 %v1706, %v1704
    %v1805 = vpack.c.b16 %v1707, %v1705
    %v1806 = vpack.c.b16 %v1710, %v1708
    %v1807 = vpack.c.b16 %v1711, %v1709
    %v1808 = vpack.c.b16 %v1714, %v1712
    %v1809 = vpack.c.b16 %v1715, %v1713
    %v1810 = vpack.c.b16 %v1718, %v1716
    %v1811 = vpack.c.b16 %v1719, %v1717
    %v1812 = vpack.c.b16 %v1722, %v1720
    %v1813 = vpack.c.b16 %v1723, %v1721
    %v1814 = vpack.c.b16 %v1726, %v1724
    %v1815 = vpack.c.b16 %v1727, %v1725
    %v1816 = vpack.c.b16 %v1730, %v1728
    %v1817 = vpack.c.b16 %v1731, %v1729
    %v1818 = vpack.c.b16 %v1734, %v1732
    %v1819 = vpack.c.b16 %v1735, %v1733
    %v1820 = vpack.c.b16 %v1738, %v1736
    %v1821 = vpack.c.b16 %v1739, %v1737
    %v1822 = vpack.c.b16 %v1742, %v1740
    %v1823 = vpack.c.b16 %v1743, %v1741
    %v1824 = vpack.c.b16 %v1746, %v1744
    %v1825 = vpack.c.b16 %v1747, %v1745
    %v1826 = vpack.c.b16 %v1750, %v1748
    %v1827 = vpack.c.b16 %v1751, %v1749
    %v1828 = vpack.c.b16 %v1754, %v1752
    %v1829 = vpack.c.b16 %v1755, %v1753
    %v1830 = vpack.c.b16 %v1758, %v1756
    %v1831 = vpack.c.b16 %v1759, %v1757
    %v1832 = vpack.c.b16 %v1762, %v1760
    %v1833 = vpack.c.b16 %v1763, %v1761
    %v1834 = vpack.c.b16 %v1766, %v1764
    %v1835 = vpack.c.b16 %v1767, %v1765
    %v1836 = vpack.c.b16 %v1770, %v1768
    %v1837 = vpack.c.b16 %v1771, %v1769
    %v1838 = vpack.c.b16 %v1774, %v1772
    %v1839 = vpack.c.b16 %v1775, %v1773
    %v1840 = vpack.c.b16 %v1778, %v1776
    %v1841 = vpack.c.b16 %v1779, %v1777
    %v1842 = vpack.c.b16 %v1782, %v1780
    %v1843 = vpack.c.b16 %v1783, %v1781
    %v1844 = vpack.c.b16 %v1786, %v1784
    %v1845 = vpack.c.b16 %v1787, %v1785
    %v1846 = vpack.c.b16 %v1790, %v1788
    %v1847 = vpack.c.b16 %v1791, %v1789
    %v1848 = vpack.c.b16 %v1794, %v1792
    %v1849 = vpack.c.b16 %v1795, %v1793
    %v1850 = vpack.c.b16 %v1798, %v1796
    %v1851 = vpack.c.b16 %v1799, %v1797
    %v1852 = vpack.c.b16 %v1802, %v1800
    %v1853 = vpack.c.b16 %v1803, %v1801
    %v1905 = vsel %vm1252, %v1591, 0
    %1907 = vmatprep.subr.bf16.mxu0 %v1805
    %1908 = vmatpush1.bf16.msra.mxu0 %v1804
    %1909 = vmatprep.subr.bf16.mxu0 %v1807
    %1910 = vmatpush1.bf16.msra.mxu0 %v1806
    %1911 = vmatprep.subr.bf16.mxu0 %v1809
    %1912 = vmatpush1.bf16.msra.mxu0 %v1808
    %1913 = vmatprep.subr.bf16.mxu0 %v1811
    %1914 = vmatpush1.bf16.msra.mxu0 %v1810
    %1915 = vmatprep.subr.bf16.mxu0 %v1813
    %1916 = vmatpush1.bf16.msra.mxu0 %v1812
    %1917 = vmatprep.subr.bf16.mxu0 %v1815
    %1918 = vmatpush1.bf16.msra.mxu0 %v1814
    %1919 = vmatprep.subr.bf16.mxu0 %v1817
    %1920 = vmatpush1.bf16.msra.mxu0 %v1816
    %1921 = vmatprep.subr.bf16.mxu0 %v1819
    %1922 = vmatpush1.bf16.msra.mxu0 %v1818
    %1923 = vmatprep.subr.bf16.mxu0 %v1821
    %1924 = vmatpush1.bf16.msra.mxu0 %v1820
    %1925 = vmatprep.subr.bf16.mxu0 %v1823
    %1926 = vmatpush1.bf16.msra.mxu0 %v1822
    %1927 = vmatprep.subr.bf16.mxu0 %v1825
    %1928 = vmatpush1.bf16.msra.mxu0 %v1824
    %1929 = vmatprep.subr.bf16.mxu0 %v1827
    %1930 = vmatpush1.bf16.msra.mxu0 %v1826
    %1931 = vmatprep.subr.bf16.mxu0 %v1829
    %1932 = vmatpush1.bf16.msra.mxu0 %v1828
    %1933 = vmatprep.subr.bf16.mxu0 %v1831
    %1934 = vmatpush1.bf16.msra.mxu0 %v1830
    %1935 = vmatprep.subr.bf16.mxu0 %v1833
    %1936 = vmatpush1.bf16.msra.mxu0 %v1832
    %1937 = vmatprep.subr.bf16.mxu0 %v1835
    %1938 = vmatpush1.bf16.msra.mxu0 %v1834
    %1939 = vmatprep.mubr.bf16.mxu0 %v1589
    %1940 = vmatmul.mubr.bf16.gmra.mrb[0].mxu0 %v1588
    %v1941 = vpop.f32.mrb[0].mxu0
    %v1942 = vadd.f32 %v1647, %v1941
    %v1943 = vpop.f32.mrb[0].mxu0
    %v1944 = vadd.f32 %v1651, %v1943
    %v1945 = vpop.f32.mrb[0].mxu0
    %v1946 = vpop.f32.mrb[0].mxu0
    %1947 = vdwg.mxu0
    %1948 = vmatprep.subr.bf16.mxu0 %v1837
    %1949 = vmatpush1.bf16.msra.mxu0 %v1836
    %1950 = vmatprep.subr.bf16.mxu0 %v1839
    %1951 = vmatpush1.bf16.msra.mxu0 %v1838
    %1952 = vmatprep.subr.bf16.mxu0 %v1841
    %1953 = vmatpush1.bf16.msra.mxu0 %v1840
    %1954 = vmatprep.subr.bf16.mxu0 %v1843
    %1955 = vmatpush1.bf16.msra.mxu0 %v1842
    %1956 = vmatprep.subr.bf16.mxu0 %v1845
    %1957 = vmatpush1.bf16.msra.mxu0 %v1844
    %1958 = vmatprep.subr.bf16.mxu0 %v1847
    %1959 = vmatpush1.bf16.msra.mxu0 %v1846
    %1960 = vmatprep.subr.bf16.mxu0 %v1849
    %1961 = vmatpush1.bf16.msra.mxu0 %v1848
    %1962 = vmatprep.subr.bf16.mxu0 %v1851
    %1963 = vmatpush1.bf16.msra.mxu0 %v1850
    %1964 = vmatprep.subr.bf16.mxu0 %v1853
    %1965 = vmatpush1.bf16.msra.mxu0 %v1852
    %1966 = vmatprep.subr.bf16.mxu0 0
    %1967 = vmatpush1.bf16.msra.mxu0 0
    %1968 = vmatprep.subr.bf16.mxu0 0
    %1969 = vmatpush1.bf16.msra.mxu0 0
    %1970 = vmatprep.subr.bf16.mxu0 0
    %1971 = vmatpush1.bf16.msra.mxu0 0
    %1972 = vmatprep.subr.bf16.mxu0 0
    %1973 = vmatpush1.bf16.msra.mxu0 0
    %1974 = vmatprep.subr.bf16.mxu0 0
    %1975 = vmatpush1.bf16.msra.mxu0 0
    %1976 = vmatprep.subr.bf16.mxu0 0
    %1977 = vmatpush1.bf16.msra.mxu0 0
    %1978 = vmatprep.subr.bf16.mxu0 0
    %1979 = vmatpush1.bf16.msra.mxu0 0
    %1980 = vmatprep.mubr.bf16.mxu0 %v1905
    %1981 = vmatmul.mubr.bf16.gmra.mrb[0].mxu0 %v1590
    %v1982 = vpop.f32.mrb[0].mxu0
    %v1983 = vadd.f32 %v1942, %v1982
    %v1984 = vpop.f32.mrb[0].mxu0
    %v1985 = vadd.f32 %v1944, %v1984
    %v1986 = vpop.f32.mrb[0].mxu0
    %v1987 = vpop.f32.mrb[0].mxu0
    %1988 = vdwg.mxu0
    %v1989 = vld [vmem:[%s1] sm:$0xff]
    %v1990 = vmul.f32 %v1985, 0.5
    %v1991 = vmul.f32 %v1990, 1.442695
    %v1992 = vpow.pop %v1991
    %v1993 = vmul.f32 %v1989, %v1992
    %v1994 = vadd.f32 %v1993, %v1983
    %v1995 = vpack.c.bf16 %v1994, %v1994
    %v1996 = vld [vmem:[%s6] sm:$0xff]
    %v1997 = vld [vmem:[%s6 + $0x8] sm:$0xff]
    %v1998 = vld [vmem:[%s6 + $0x10] sm:$0xff]
    %v1999 = vld [vmem:[%s6 + $0x18] sm:$0xff]
    %v2000 = vld [vmem:[%s6 + $0x20] sm:$0xff]
    %v2001 = vld [vmem:[%s6 + $0x28] sm:$0xff]
    %v2002 = vld [vmem:[%s6 + $0x30] sm:$0xff]
    %v2003 = vld [vmem:[%s6 + $0x38] sm:$0xff]
    %v2004 = vld [vmem:[%s6 + $0x40] sm:$0xff]
    %v2005 = vld [vmem:[%s6 + $0x48] sm:$0xff]
    %v2006 = vld [vmem:[%s6 + $0x50] sm:$0xff]
    %v2007 = vld [vmem:[%s6 + $0x58] sm:$0xff]
    %v2008 = vld [vmem:[%s6 + $0x60] sm:$0xff]
    %v2009 = vld [vmem:[%s6 + $0x68] sm:$0xff]
    %v2010 = vld [vmem:[%s6 + $0x70] sm:$0xff]
    %v2011 = vld [vmem:[%s6 + $0x78] sm:$0xff]
    %v2012 = vld [vmem:[%s6 + $0x80] sm:$0xff]
    %v2013 = vld [vmem:[%s6 + $0x88] sm:$0xff]
    %v2014 = vld [vmem:[%s6 + $0x90] sm:$0xff]
    %v2015 = vld [vmem:[%s6 + $0x98] sm:$0xff]
    %v2016 = vld [vmem:[%s6 + $0xa0] sm:$0xff]
    %v2017 = vld [vmem:[%s6 + $0xa8] sm:$0xff]
    %v2018 = vld [vmem:[%s6 + $0xb0] sm:$0xff]
    %v2019 = vld [vmem:[%s6 + $0xb8] sm:$0xff]
    %v2020 = vld [vmem:[%s6 + $0xc0] sm:$0xff]
    %v2021 = vld [vmem:[%s6 + $0xc8] sm:$0xff]
    %v2022 = vld [vmem:[%s6 + $0xd0] sm:$0xff]
    %v2023 = vld [vmem:[%s6 + $0xd8] sm:$0xff]
    %v2024 = vld [vmem:[%s6 + $0xe0] sm:$0xff]
    %v2025 = vld [vmem:[%s6 + $0xe8] sm:$0xff]
    %v2026 = vld [vmem:[%s6 + $0xf0] sm:$0xff]
    %v2027 = vld [vmem:[%s6 + $0xf8] sm:$0xff]
    %v2028 = vld [vmem:[%s7] sm:$0xf]
    %v2030 = vlaneseq
    %v2031 = vshrl.u32 %v2030, 7
    %v2032 = vsub.s32 0, %v2031
    %v2033 = vrot.slane %v2028, %v2032
    %v2034 = vlaneseq
    %v2035 = vshrl.u32 %v2034, 7
    %v2036 = vsub.s32 1, %v2035
    %v2037 = vrot.slane %v2028, %v2036
    %v2038 = vlaneseq
    %v2039 = vshrl.u32 %v2038, 7
    %v2040 = vsub.s32 2, %v2039
    %v2041 = vrot.slane %v2028, %v2040
    %v2042 = vlaneseq
    %v2043 = vshrl.u32 %v2042, 7
    %v2044 = vsub.s32 3, %v2043
    %v2045 = vrot.slane %v2028, %v2044
    %v2082 = vunpack.c.l.b16 %v1996
    %v2083 = vunpack.c.h.b16 %v1996
    %v2084 = vunpack.c.l.b16 %v1997
    %v2085 = vunpack.c.h.b16 %v1997
    %v2086 = vunpack.c.l.b16 %v1998
    %v2087 = vunpack.c.h.b16 %v1998
    %v2088 = vunpack.c.l.b16 %v1999
    %v2089 = vunpack.c.h.b16 %v1999
    %v2090 = vunpack.c.l.b16 %v2000
    %v2091 = vunpack.c.h.b16 %v2000
    %v2092 = vunpack.c.l.b16 %v2001
    %v2093 = vunpack.c.h.b16 %v2001
    %v2094 = vunpack.c.l.b16 %v2002
    %v2095 = vunpack.c.h.b16 %v2002
    %v2096 = vunpack.c.l.b16 %v2003
    %v2097 = vunpack.c.h.b16 %v2003
    %v2098 = vunpack.c.l.b16 %v2004
    %v2099 = vunpack.c.h.b16 %v2004
    %v2100 = vunpack.c.l.b16 %v2005
    %v2101 = vunpack.c.h.b16 %v2005
    %v2102 = vunpack.c.l.b16 %v2006
    %v2103 = vunpack.c.h.b16 %v2006
    %v2104 = vunpack.c.l.b16 %v2007
    %v2105 = vunpack.c.h.b16 %v2007
    %v2106 = vunpack.c.l.b16 %v2008
    %v2107 = vunpack.c.h.b16 %v2008
    %v2108 = vunpack.c.l.b16 %v2009
    %v2109 = vunpack.c.h.b16 %v2009
    %v2110 = vunpack.c.l.b16 %v2010
    %v2111 = vunpack.c.h.b16 %v2010
    %v2112 = vunpack.c.l.b16 %v2011
    %v2113 = vunpack.c.h.b16 %v2011
    %v2114 = vunpack.c.l.b16 %v2012
    %v2115 = vunpack.c.h.b16 %v2012
    %v2116 = vunpack.c.l.b16 %v2013
    %v2117 = vunpack.c.h.b16 %v2013
    %v2118 = vunpack.c.l.b16 %v2014
    %v2119 = vunpack.c.h.b16 %v2014
    %v2120 = vunpack.c.l.b16 %v2015
    %v2121 = vunpack.c.h.b16 %v2015
    %v2122 = vunpack.c.l.b16 %v2016
    %v2123 = vunpack.c.h.b16 %v2016
    %v2124 = vunpack.c.l.b16 %v2017
    %v2125 = vunpack.c.h.b16 %v2017
    %v2126 = vunpack.c.l.b16 %v2018
    %v2127 = vunpack.c.h.b16 %v2018
    %v2128 = vunpack.c.l.b16 %v2019
    %v2129 = vunpack.c.h.b16 %v2019
    %v2130 = vunpack.c.l.b16 %v2020
    %v2131 = vunpack.c.h.b16 %v2020
    %v2132 = vunpack.c.l.b16 %v2021
    %v2133 = vunpack.c.h.b16 %v2021
    %v2134 = vunpack.c.l.b16 %v2022
    %v2135 = vunpack.c.h.b16 %v2022
    %v2136 = vunpack.c.l.b16 %v2023
    %v2137 = vunpack.c.h.b16 %v2023
    %v2138 = vunpack.c.l.b16 %v2024
    %v2139 = vunpack.c.h.b16 %v2024
    %v2140 = vunpack.c.l.b16 %v2025
    %v2141 = vunpack.c.h.b16 %v2025
    %v2142 = vunpack.c.l.b16 %v2026
    %v2143 = vunpack.c.h.b16 %v2026
    %v2144 = vunpack.c.l.b16 %v2027
    %v2145 = vunpack.c.h.b16 %v2027
    %v2146 = vpack.c.b16 %v2086, %v2082
    %v2147 = vpack.c.b16 %v2087, %v2083
    %v2148 = vpack.c.b16 %v2088, %v2084
    %v2149 = vpack.c.b16 %v2089, %v2085
    %v2150 = vpack.c.b16 %v2094, %v2090
    %v2151 = vpack.c.b16 %v2095, %v2091
    %v2152 = vpack.c.b16 %v2096, %v2092
    %v2153 = vpack.c.b16 %v2097, %v2093
    %v2154 = vpack.c.b16 %v2102, %v2098
    %v2155 = vpack.c.b16 %v2103, %v2099
    %v2156 = vpack.c.b16 %v2104, %v2100
    %v2157 = vpack.c.b16 %v2105, %v2101
    %v2158 = vpack.c.b16 %v2110, %v2106
    %v2159 = vpack.c.b16 %v2111, %v2107
    %v2160 = vpack.c.b16 %v2112, %v2108
    %v2161 = vpack.c.b16 %v2113, %v2109
    %v2162 = vpack.c.b16 %v2118, %v2114
    %v2163 = vpack.c.b16 %v2119, %v2115
    %v2164 = vpack.c.b16 %v2120, %v2116
    %v2165 = vpack.c.b16 %v2121, %v2117
    %v2166 = vpack.c.b16 %v2126, %v2122
    %v2167 = vpack.c.b16 %v2127, %v2123
    %v2168 = vpack.c.b16 %v2128, %v2124
    %v2169 = vpack.c.b16 %v2129, %v2125
    %v2170 = vpack.c.b16 %v2134, %v2130
    %v2171 = vpack.c.b16 %v2135, %v2131
    %v2172 = vpack.c.b16 %v2136, %v2132
    %v2173 = vpack.c.b16 %v2137, %v2133
    %v2174 = vpack.c.b16 %v2142, %v2138
    %v2175 = vpack.c.b16 %v2143, %v2139
    %v2176 = vpack.c.b16 %v2144, %v2140
    %v2177 = vpack.c.b16 %v2145, %v2141
    %2210 = vmatprep.subr.bf16.mxu0 %v2147
    %2211 = vmatpush1.bf16.msra.mxu0 %v2146
    %2212 = vmatprep.subr.bf16.mxu0 %v2151
    %2213 = vmatpush1.bf16.msra.mxu0 %v2150
    %2214 = vmatprep.subr.bf16.mxu0 %v2155
    %2215 = vmatpush1.bf16.msra.mxu0 %v2154
    %2216 = vmatprep.subr.bf16.mxu0 %v2159
    %2217 = vmatpush1.bf16.msra.mxu0 %v2158
    %2218 = vmatprep.subr.bf16.mxu0 %v2163
    %2219 = vmatpush1.bf16.msra.mxu0 %v2162
    %2220 = vmatprep.subr.bf16.mxu0 %v2167
    %2221 = vmatpush1.bf16.msra.mxu0 %v2166
    %2222 = vmatprep.subr.bf16.mxu0 %v2171
    %2223 = vmatpush1.bf16.msra.mxu0 %v2170
    %2224 = vmatprep.subr.bf16.mxu0 %v2175
    %2225 = vmatpush1.bf16.msra.mxu0 %v2174
    %2226 = vmatprep.subr.bf16.mxu0 0
    %2227 = vmatpush1.bf16.msra.mxu0 0
    %2228 = vmatprep.subr.bf16.mxu0 0
    %2229 = vmatpush1.bf16.msra.mxu0 0
    %2230 = vmatprep.subr.bf16.mxu0 0
    %2231 = vmatpush1.bf16.msra.mxu0 0
    %2232 = vmatprep.subr.bf16.mxu0 0
    %2233 = vmatpush1.bf16.msra.mxu0 0
    %2234 = vmatprep.subr.bf16.mxu0 0
    %2235 = vmatpush1.bf16.msra.mxu0 0
    %2236 = vmatprep.subr.bf16.mxu0 0
    %2237 = vmatpush1.bf16.msra.mxu0 0
    %2238 = vmatprep.subr.bf16.mxu0 0
    %2239 = vmatpush1.bf16.msra.mxu0 0
    %2240 = vmatprep.subr.bf16.mxu0 0
    %2241 = vmatpush1.bf16.msra.mxu0 0
    %2242 = vmatprep.mubr.bf16.mxu0 0
    %2243 = vmatmul.mubr.bf16.gmra.mrb[0].mxu0 %v1995
    %v2244 = vpop.f32.mrb[0].mxu0
    %v2245 = vadd.f32 %v2033, %v2244
    %v2246 = vpop.f32.mrb[0].mxu0
    %v2247 = vadd.f32 %v2037, %v2246
    %v2248 = vpop.f32.mrb[0].mxu0
    %v2249 = vpop.f32.mrb[0].mxu0
    %2250 = vdwg.mxu0
    %2251 = vmatprep.subr.bf16.mxu0 %v2149
    %2252 = vmatpush1.bf16.msra.mxu0 %v2148
    %2253 = vmatprep.subr.bf16.mxu0 %v2153
    %2254 = vmatpush1.bf16.msra.mxu0 %v2152
    %2255 = vmatprep.subr.bf16.mxu0 %v2157
    %2256 = vmatpush1.bf16.msra.mxu0 %v2156
    %2257 = vmatprep.subr.bf16.mxu0 %v2161
    %2258 = vmatpush1.bf16.msra.mxu0 %v2160
    %2259 = vmatprep.subr.bf16.mxu0 %v2165
    %2260 = vmatpush1.bf16.msra.mxu0 %v2164
    %2261 = vmatprep.subr.bf16.mxu0 %v2169
    %2262 = vmatpush1.bf16.msra.mxu0 %v2168
    %2263 = vmatprep.subr.bf16.mxu0 %v2173
    %2264 = vmatpush1.bf16.msra.mxu0 %v2172
    %2265 = vmatprep.subr.bf16.mxu0 %v2177
    %2266 = vmatpush1.bf16.msra.mxu0 %v2176
    %2267 = vmatprep.subr.bf16.mxu0 0
    %2268 = vmatpush1.bf16.msra.mxu0 0
    %2269 = vmatprep.subr.bf16.mxu0 0
    %2270 = vmatpush1.bf16.msra.mxu0 0
    %2271 = vmatprep.subr.bf16.mxu0 0
    %2272 = vmatpush1.bf16.msra.mxu0 0
    %2273 = vmatprep.subr.bf16.mxu0 0
    %2274 = vmatpush1.bf16.msra.mxu0 0
    %2275 = vmatprep.subr.bf16.mxu0 0
    %2276 = vmatpush1.bf16.msra.mxu0 0
    %2277 = vmatprep.subr.bf16.mxu0 0
    %2278 = vmatpush1.bf16.msra.mxu0 0
    %2279 = vmatprep.subr.bf16.mxu0 0
    %2280 = vmatpush1.bf16.msra.mxu0 0
    %2281 = vmatprep.subr.bf16.mxu0 0
    %2282 = vmatpush1.bf16.msra.mxu0 0
    %2283 = vmatprep.mubr.bf16.mxu0 0
    %2284 = vmatmul.mubr.bf16.gmra.mrb[0].mxu0 %v1995
    %v2285 = vpop.f32.mrb[0].mxu0
    %v2286 = vadd.f32 %v2041, %v2285
    %v2287 = vpop.f32.mrb[0].mxu0
    %v2288 = vadd.f32 %v2045, %v2287
    %v2289 = vpop.f32.mrb[0].mxu0
    %v2290 = vpop.f32.mrb[0].mxu0
    %2291 = vdwg.mxu0
    %v2292 = vmax.f32 %v2245, 0.0
    %v2293 = vmax.f32 %v2247, 0.0
    %v2294 = vmax.f32 %v2286, 0.0
    %v2295 = vmax.f32 %v2288, 0.0
    %v2296 = vpack.c.bf16 %v2292, %v2292
    %v2297 = vpack.c.bf16 %v2293, %v2293
    %v2298 = vpack.c.bf16 %v2294, %v2294
    %v2299 = vpack.c.bf16 %v2295, %v2295
    %v2300 = vld [vmem:[%s8] sm:$0xff]
    %v2301 = vld [vmem:[%s8 + $0x8] sm:$0xff]
    %v2302 = vld [vmem:[%s8 + $0x10] sm:$0xff]
    %v2303 = vld [vmem:[%s8 + $0x18] sm:$0xf]
    %v2304 = vld [vmem:[%s8 + $0x1c] sm:$0xff]
    %v2305 = vld [vmem:[%s8 + $0x24] sm:$0xff]
    %v2306 = vld [vmem:[%s8 + $0x2c] sm:$0xff]
    %v2307 = vld [vmem:[%s8 + $0x34] sm:$0xf]
    %v2308 = vld [vmem:[%s8 + $0x38] sm:$0xff]
    %v2309 = vld [vmem:[%s8 + $0x40] sm:$0xff]
    %v2310 = vld [vmem:[%s8 + $0x48] sm:$0xff]
    %v2311 = vld [vmem:[%s8 + $0x50] sm:$0xf]
    %v2312 = vld [vmem:[%s8 + $0x54] sm:$0xff]
    %v2313 = vld [vmem:[%s8 + $0x5c] sm:$0xff]
    %v2314 = vld [vmem:[%s8 + $0x64] sm:$0xff]
    %v2315 = vld [vmem:[%s8 + $0x6c] sm:$0xf]
    %v2316 = vld [vmem:[%s8 + $0x70] sm:$0xff]
    %v2317 = vld [vmem:[%s8 + $0x78] sm:$0xff]
    %v2318 = vld [vmem:[%s8 + $0x80] sm:$0xff]
    %v2319 = vld [vmem:[%s8 + $0x88] sm:$0xf]
    %v2320 = vld [vmem:[%s8 + $0x8c] sm:$0xff]
    %v2321 = vld [vmem:[%s8 + $0x94] sm:$0xff]
    %v2322 = vld [vmem:[%s8 + $0x9c] sm:$0xff]
    %v2323 = vld [vmem:[%s8 + $0xa4] sm:$0xf]
    %v2324 = vld [vmem:[%s8 + $0xa8] sm:$0xff]
    %v2325 = vld [vmem:[%s8 + $0xb0] sm:$0xff]
    %v2326 = vld [vmem:[%s8 + $0xb8] sm:$0xff]
    %v2327 = vld [vmem:[%s8 + $0xc0] sm:$0xf]
    %v2328 = vld [vmem:[%s8 + $0xc4] sm:$0xff]
    %v2329 = vld [vmem:[%s8 + $0xcc] sm:$0xff]
    %v2330 = vld [vmem:[%s8 + $0xd4] sm:$0xff]
    %v2331 = vld [vmem:[%s8 + $0xdc] sm:$0xf]
    %v2332 = vld [vmem:[%s8 + $0xe0] sm:$0xff]
    %v2333 = vld [vmem:[%s8 + $0xe8] sm:$0xff]
    %v2334 = vld [vmem:[%s8 + $0xf0] sm:$0xff]
    %v2335 = vld [vmem:[%s8 + $0xf8] sm:$0xf]
    %v2336 = vld [vmem:[%s8 + $0xfc] sm:$0xff]
    %v2337 = vld [vmem:[%s8 + $0x104] sm:$0xff]
    %v2338 = vld [vmem:[%s8 + $0x10c] sm:$0xff]
    %v2339 = vld [vmem:[%s8 + $0x114] sm:$0xf]
    %v2340 = vld [vmem:[%s8 + $0x118] sm:$0xff]
    %v2341 = vld [vmem:[%s8 + $0x120] sm:$0xff]
    %v2342 = vld [vmem:[%s8 + $0x128] sm:$0xff]
    %v2343 = vld [vmem:[%s8 + $0x130] sm:$0xf]
    %v2344 = vld [vmem:[%s8 + $0x134] sm:$0xff]
    %v2345 = vld [vmem:[%s8 + $0x13c] sm:$0xff]
    %v2346 = vld [vmem:[%s8 + $0x144] sm:$0xff]
    %v2347 = vld [vmem:[%s8 + $0x14c] sm:$0xf]
    %v2348 = vld [vmem:[%s8 + $0x150] sm:$0xff]
    %v2349 = vld [vmem:[%s8 + $0x158] sm:$0xff]
    %v2350 = vld [vmem:[%s8 + $0x160] sm:$0xff]
    %v2351 = vld [vmem:[%s8 + $0x168] sm:$0xf]
    %v2352 = vld [vmem:[%s8 + $0x16c] sm:$0xff]
    %v2353 = vld [vmem:[%s8 + $0x174] sm:$0xff]
    %v2354 = vld [vmem:[%s8 + $0x17c] sm:$0xff]
    %v2355 = vld [vmem:[%s8 + $0x184] sm:$0xf]
    %v2356 = vld [vmem:[%s8 + $0x188] sm:$0xff]
    %v2357 = vld [vmem:[%s8 + $0x190] sm:$0xff]
    %v2358 = vld [vmem:[%s8 + $0x198] sm:$0xff]
    %v2359 = vld [vmem:[%s8 + $0x1a0] sm:$0xf]
    %v2360 = vld [vmem:[%s8 + $0x1a4] sm:$0xff]
    %v2361 = vld [vmem:[%s8 + $0x1ac] sm:$0xff]
    %v2362 = vld [vmem:[%s8 + $0x1b4] sm:$0xff]
    %v2363 = vld [vmem:[%s8 + $0x1bc] sm:$0xf]
    %v2364 = vld [vmem:[%s8 + $0x1c0] sm:$0xff]
    %v2365 = vld [vmem:[%s8 + $0x1c8] sm:$0xff]
    %v2366 = vld [vmem:[%s8 + $0x1d0] sm:$0xff]
    %v2367 = vld [vmem:[%s8 + $0x1d8] sm:$0xf]
    %v2368 = vld [vmem:[%s8 + $0x1dc] sm:$0xff]
    %v2369 = vld [vmem:[%s8 + $0x1e4] sm:$0xff]
    %v2370 = vld [vmem:[%s8 + $0x1ec] sm:$0xff]
    %v2371 = vld [vmem:[%s8 + $0x1f4] sm:$0xf]
    %v2372 = vld [vmem:[%s8 + $0x1f8] sm:$0xff]
    %v2373 = vld [vmem:[%s8 + $0x200] sm:$0xff]
    %v2374 = vld [vmem:[%s8 + $0x208] sm:$0xff]
    %v2375 = vld [vmem:[%s8 + $0x210] sm:$0xf]
    %v2376 = vld [vmem:[%s8 + $0x214] sm:$0xff]
    %v2377 = vld [vmem:[%s8 + $0x21c] sm:$0xff]
    %v2378 = vld [vmem:[%s8 + $0x224] sm:$0xff]
    %v2379 = vld [vmem:[%s8 + $0x22c] sm:$0xf]
    %v2380 = vld [vmem:[%s8 + $0x230] sm:$0xff]
    %v2381 = vld [vmem:[%s8 + $0x238] sm:$0xff]
    %v2382 = vld [vmem:[%s8 + $0x240] sm:$0xff]
    %v2383 = vld [vmem:[%s8 + $0x248] sm:$0xf]
    %v2384 = vld [vmem:[%s8 + $0x24c] sm:$0xff]
    %v2385 = vld [vmem:[%s8 + $0x254] sm:$0xff]
    %v2386 = vld [vmem:[%s8 + $0x25c] sm:$0xff]
    %v2387 = vld [vmem:[%s8 + $0x264] sm:$0xf]
    %v2388 = vld [vmem:[%s8 + $0x268] sm:$0xff]
    %v2389 = vld [vmem:[%s8 + $0x270] sm:$0xff]
    %v2390 = vld [vmem:[%s8 + $0x278] sm:$0xff]
    %v2391 = vld [vmem:[%s8 + $0x280] sm:$0xf]
    %v2392 = vld [vmem:[%s8 + $0x284] sm:$0xff]
    %v2393 = vld [vmem:[%s8 + $0x28c] sm:$0xff]
    %v2394 = vld [vmem:[%s8 + $0x294] sm:$0xff]
    %v2395 = vld [vmem:[%s8 + $0x29c] sm:$0xf]
    %v2396 = vld [vmem:[%s8 + $0x2a0] sm:$0xff]
    %v2397 = vld [vmem:[%s8 + $0x2a8] sm:$0xff]
    %v2398 = vld [vmem:[%s8 + $0x2b0] sm:$0xff]
    %v2399 = vld [vmem:[%s8 + $0x2b8] sm:$0xf]
    %v2400 = vld [vmem:[%s8 + $0x2bc] sm:$0xff]
    %v2401 = vld [vmem:[%s8 + $0x2c4] sm:$0xff]
    %v2402 = vld [vmem:[%s8 + $0x2cc] sm:$0xff]
    %v2403 = vld [vmem:[%s8 + $0x2d4] sm:$0xf]
    %v2404 = vld [vmem:[%s8 + $0x2d8] sm:$0xff]
    %v2405 = vld [vmem:[%s8 + $0x2e0] sm:$0xff]
    %v2406 = vld [vmem:[%s8 + $0x2e8] sm:$0xff]
    %v2407 = vld [vmem:[%s8 + $0x2f0] sm:$0xf]
    %v2408 = vld [vmem:[%s8 + $0x2f4] sm:$0xff]
    %v2409 = vld [vmem:[%s8 + $0x2fc] sm:$0xff]
    %v2410 = vld [vmem:[%s8 + $0x304] sm:$0xff]
    %v2411 = vld [vmem:[%s8 + $0x30c] sm:$0xf]
    %v2412 = vld [vmem:[%s8 + $0x310] sm:$0xff]
    %v2413 = vld [vmem:[%s8 + $0x318] sm:$0xff]
    %v2414 = vld [vmem:[%s8 + $0x320] sm:$0xff]
    %v2415 = vld [vmem:[%s8 + $0x328] sm:$0xf]
    %v2416 = vld [vmem:[%s8 + $0x32c] sm:$0xff]
    %v2417 = vld [vmem:[%s8 + $0x334] sm:$0xff]
    %v2418 = vld [vmem:[%s8 + $0x33c] sm:$0xff]
    %v2419 = vld [vmem:[%s8 + $0x344] sm:$0xf]
    %v2420 = vld [vmem:[%s8 + $0x348] sm:$0xff]
    %v2421 = vld [vmem:[%s8 + $0x350] sm:$0xff]
    %v2422 = vld [vmem:[%s8 + $0x358] sm:$0xff]
    %v2423 = vld [vmem:[%s8 + $0x360] sm:$0xf]
    %v2424 = vld [vmem:[%s8 + $0x364] sm:$0xff]
    %v2425 = vld [vmem:[%s8 + $0x36c] sm:$0xff]
    %v2426 = vld [vmem:[%s8 + $0x374] sm:$0xff]
    %v2427 = vld [vmem:[%s8 + $0x37c] sm:$0xf]
    %v2428 = vld [vmem:[%s8 + $0x380] sm:$0xff]
    %v2429 = vld [vmem:[%s8 + $0x388] sm:$0xff]
    %v2430 = vld [vmem:[%s8 + $0x390] sm:$0xff]
    %v2431 = vld [vmem:[%s8 + $0x398] sm:$0xf]
    %v2432 = vld [vmem:[%s8 + $0x39c] sm:$0xff]
    %v2433 = vld [vmem:[%s8 + $0x3a4] sm:$0xff]
    %v2434 = vld [vmem:[%s8 + $0x3ac] sm:$0xff]
    %v2435 = vld [vmem:[%s8 + $0x3b4] sm:$0xf]
    %v2436 = vld [vmem:[%s8 + $0x3b8] sm:$0xff]
    %v2437 = vld [vmem:[%s8 + $0x3c0] sm:$0xff]
    %v2438 = vld [vmem:[%s8 + $0x3c8] sm:$0xff]
    %v2439 = vld [vmem:[%s8 + $0x3d0] sm:$0xf]
    %v2440 = vld [vmem:[%s8 + $0x3d4] sm:$0xff]
    %v2441 = vld [vmem:[%s8 + $0x3dc] sm:$0xff]
    %v2442 = vld [vmem:[%s8 + $0x3e4] sm:$0xff]
    %v2443 = vld [vmem:[%s8 + $0x3ec] sm:$0xf]
    %v2444 = vld [vmem:[%s8 + $0x3f0] sm:$0xff]
    %v2445 = vld [vmem:[%s8 + $0x3f8] sm:$0xff]
    %v2446 = vld [vmem:[%s8 + $0x400] sm:$0xff]
    %v2447 = vld [vmem:[%s8 + $0x408] sm:$0xf]
    %v2448 = vld [vmem:[%s8 + $0x40c] sm:$0xff]
    %v2449 = vld [vmem:[%s8 + $0x414] sm:$0xff]
    %v2450 = vld [vmem:[%s8 + $0x41c] sm:$0xff]
    %v2451 = vld [vmem:[%s8 + $0x424] sm:$0xf]
    %v2452 = vld [vmem:[%s8 + $0x428] sm:$0xff]
    %v2453 = vld [vmem:[%s8 + $0x430] sm:$0xff]
    %v2454 = vld [vmem:[%s8 + $0x438] sm:$0xff]
    %v2455 = vld [vmem:[%s8 + $0x440] sm:$0xf]
    %v2456 = vld [vmem:[%s8 + $0x444] sm:$0xff]
    %v2457 = vld [vmem:[%s8 + $0x44c] sm:$0xff]
    %v2458 = vld [vmem:[%s8 + $0x454] sm:$0xff]
    %v2459 = vld [vmem:[%s8 + $0x45c] sm:$0xf]
    %v2460 = vld [vmem:[%s8 + $0x460] sm:$0xff]
    %v2461 = vld [vmem:[%s8 + $0x468] sm:$0xff]
    %v2462 = vld [vmem:[%s8 + $0x470] sm:$0xff]
    %v2463 = vld [vmem:[%s8 + $0x478] sm:$0xf]
    %v2464 = vld [vmem:[%s8 + $0x47c] sm:$0xff]
    %v2465 = vld [vmem:[%s8 + $0x484] sm:$0xff]
    %v2466 = vld [vmem:[%s8 + $0x48c] sm:$0xff]
    %v2467 = vld [vmem:[%s8 + $0x494] sm:$0xf]
    %v2468 = vld [vmem:[%s8 + $0x498] sm:$0xff]
    %v2469 = vld [vmem:[%s8 + $0x4a0] sm:$0xff]
    %v2470 = vld [vmem:[%s8 + $0x4a8] sm:$0xff]
    %v2471 = vld [vmem:[%s8 + $0x4b0] sm:$0xf]
    %v2472 = vld [vmem:[%s8 + $0x4b4] sm:$0xff]
    %v2473 = vld [vmem:[%s8 + $0x4bc] sm:$0xff]
    %v2474 = vld [vmem:[%s8 + $0x4c4] sm:$0xff]
    %v2475 = vld [vmem:[%s8 + $0x4cc] sm:$0xf]
    %v2476 = vld [vmem:[%s8 + $0x4d0] sm:$0xff]
    %v2477 = vld [vmem:[%s8 + $0x4d8] sm:$0xff]
    %v2478 = vld [vmem:[%s8 + $0x4e0] sm:$0xff]
    %v2479 = vld [vmem:[%s8 + $0x4e8] sm:$0xf]
    %v2480 = vld [vmem:[%s8 + $0x4ec] sm:$0xff]
    %v2481 = vld [vmem:[%s8 + $0x4f4] sm:$0xff]
    %v2482 = vld [vmem:[%s8 + $0x4fc] sm:$0xff]
    %v2483 = vld [vmem:[%s8 + $0x504] sm:$0xf]
    %v2484 = vld [vmem:[%s8 + $0x508] sm:$0xff]
    %v2485 = vld [vmem:[%s8 + $0x510] sm:$0xff]
    %v2486 = vld [vmem:[%s8 + $0x518] sm:$0xff]
    %v2487 = vld [vmem:[%s8 + $0x520] sm:$0xf]
    %v2488 = vld [vmem:[%s8 + $0x524] sm:$0xff]
    %v2489 = vld [vmem:[%s8 + $0x52c] sm:$0xff]
    %v2490 = vld [vmem:[%s8 + $0x534] sm:$0xff]
    %v2491 = vld [vmem:[%s8 + $0x53c] sm:$0xf]
    %v2492 = vld [vmem:[%s8 + $0x540] sm:$0xff]
    %v2493 = vld [vmem:[%s8 + $0x548] sm:$0xff]
    %v2494 = vld [vmem:[%s8 + $0x550] sm:$0xff]
    %v2495 = vld [vmem:[%s8 + $0x558] sm:$0xf]
    %v2496 = vld [vmem:[%s8 + $0x55c] sm:$0xff]
    %v2497 = vld [vmem:[%s8 + $0x564] sm:$0xff]
    %v2498 = vld [vmem:[%s8 + $0x56c] sm:$0xff]
    %v2499 = vld [vmem:[%s8 + $0x574] sm:$0xf]
    %v2500 = vld [vmem:[%s9] sm:$0x7f]
    %v2502 = vlaneseq
    %v2503 = vshrl.u32 %v2502, 7
    %v2504 = vsub.s32 0, %v2503
    %v2505 = vrot.slane %v2500, %v2504
    %v2506 = vlaneseq
    %v2507 = vshrl.u32 %v2506, 7
    %v2508 = vsub.s32 1, %v2507
    %v2509 = vrot.slane %v2500, %v2508
    %v2510 = vlaneseq
    %v2511 = vshrl.u32 %v2510, 7
    %v2512 = vsub.s32 2, %v2511
    %v2513 = vrot.slane %v2500, %v2512
    %v2514 = vlaneseq
    %v2515 = vshrl.u32 %v2514, 7
    %v2516 = vsub.s32 3, %v2515
    %v2517 = vrot.slane %v2500, %v2516
    %v2518 = vlaneseq
    %v2519 = vshrl.u32 %v2518, 7
    %v2520 = vsub.s32 4, %v2519
    %v2521 = vrot.slane %v2500, %v2520
    %v2522 = vlaneseq
    %v2523 = vshrl.u32 %v2522, 7
    %v2524 = vsub.s32 5, %v2523
    %v2525 = vrot.slane %v2500, %v2524
    %v2526 = vlaneseq
    %v2527 = vshrl.u32 %v2526, 7
    %v2528 = vsub.s32 6, %v2527
    %v2529 = vrot.slane %v2500, %v2528
    %v2737 = vunpack.c.l.b16 %v2300
    %v2738 = vunpack.c.h.b16 %v2300
    %v2739 = vunpack.c.l.b16 %v2301
    %v2740 = vunpack.c.h.b16 %v2301
    %v2741 = vunpack.c.l.b16 %v2302
    %v2742 = vunpack.c.h.b16 %v2302
    %v2743 = vunpack.c.l.b16 %v2303
    %v2744 = vunpack.c.l.b16 %v2304
    %v2745 = vunpack.c.h.b16 %v2304
    %v2746 = vunpack.c.l.b16 %v2305
    %v2747 = vunpack.c.h.b16 %v2305
    %v2748 = vunpack.c.l.b16 %v2306
    %v2749 = vunpack.c.h.b16 %v2306
    %v2750 = vunpack.c.l.b16 %v2307
    %v2751 = vunpack.c.l.b16 %v2308
    %v2752 = vunpack.c.h.b16 %v2308
    %v2753 = vunpack.c.l.b16 %v2309
    %v2754 = vunpack.c.h.b16 %v2309
    %v2755 = vunpack.c.l.b16 %v2310
    %v2756 = vunpack.c.h.b16 %v2310
    %v2757 = vunpack.c.l.b16 %v2311
    %v2758 = vunpack.c.l.b16 %v2312
    %v2759 = vunpack.c.h.b16 %v2312
    %v2760 = vunpack.c.l.b16 %v2313
    %v2761 = vunpack.c.h.b16 %v2313
    %v2762 = vunpack.c.l.b16 %v2314
    %v2763 = vunpack.c.h.b16 %v2314
    %v2764 = vunpack.c.l.b16 %v2315
    %v2765 = vunpack.c.l.b16 %v2316
    %v2766 = vunpack.c.h.b16 %v2316
    %v2767 = vunpack.c.l.b16 %v2317
    %v2768 = vunpack.c.h.b16 %v2317
    %v2769 = vunpack.c.l.b16 %v2318
    %v2770 = vunpack.c.h.b16 %v2318
    %v2771 = vunpack.c.l.b16 %v2319
    %v2772 = vunpack.c.l.b16 %v2320
    %v2773 = vunpack.c.h.b16 %v2320
    %v2774 = vunpack.c.l.b16 %v2321
    %v2775 = vunpack.c.h.b16 %v2321
    %v2776 = vunpack.c.l.b16 %v2322
    %v2777 = vunpack.c.h.b16 %v2322
    %v2778 = vunpack.c.l.b16 %v2323
    %v2779 = vunpack.c.l.b16 %v2324
    %v2780 = vunpack.c.h.b16 %v2324
    %v2781 = vunpack.c.l.b16 %v2325
    %v2782 = vunpack.c.h.b16 %v2325
    %v2783 = vunpack.c.l.b16 %v2326
    %v2784 = vunpack.c.h.b16 %v2326
    %v2785 = vunpack.c.l.b16 %v2327
    %v2786 = vunpack.c.l.b16 %v2328
    %v2787 = vunpack.c.h.b16 %v2328
    %v2788 = vunpack.c.l.b16 %v2329
    %v2789 = vunpack.c.h.b16 %v2329
    %v2790 = vunpack.c.l.b16 %v2330
    %v2791 = vunpack.c.h.b16 %v2330
    %v2792 = vunpack.c.l.b16 %v2331
    %v2793 = vunpack.c.l.b16 %v2332
    %v2794 = vunpack.c.h.b16 %v2332
    %v2795 = vunpack.c.l.b16 %v2333
    %v2796 = vunpack.c.h.b16 %v2333
    %v2797 = vunpack.c.l.b16 %v2334
    %v2798 = vunpack.c.h.b16 %v2334
    %v2799 = vunpack.c.l.b16 %v2335
    %v2800 = vunpack.c.l.b16 %v2336
    %v2801 = vunpack.c.h.b16 %v2336
    %v2802 = vunpack.c.l.b16 %v2337
    %v2803 = vunpack.c.h.b16 %v2337
    %v2804 = vunpack.c.l.b16 %v2338
    %v2805 = vunpack.c.h.b16 %v2338
    %v2806 = vunpack.c.l.b16 %v2339
    %v2807 = vunpack.c.l.b16 %v2340
    %v2808 = vunpack.c.h.b16 %v2340
    %v2809 = vunpack.c.l.b16 %v2341
    %v2810 = vunpack.c.h.b16 %v2341
    %v2811 = vunpack.c.l.b16 %v2342
    %v2812 = vunpack.c.h.b16 %v2342
    %v2813 = vunpack.c.l.b16 %v2343
    %v2814 = vunpack.c.l.b16 %v2344
    %v2815 = vunpack.c.h.b16 %v2344
    %v2816 = vunpack.c.l.b16 %v2345
    %v2817 = vunpack.c.h.b16 %v2345
    %v2818 = vunpack.c.l.b16 %v2346
    %v2819 = vunpack.c.h.b16 %v2346
    %v2820 = vunpack.c.l.b16 %v2347
    %v2821 = vunpack.c.l.b16 %v2348
    %v2822 = vunpack.c.h.b16 %v2348
    %v2823 = vunpack.c.l.b16 %v2349
    %v2824 = vunpack.c.h.b16 %v2349
    %v2825 = vunpack.c.l.b16 %v2350
    %v2826 = vunpack.c.h.b16 %v2350
    %v2827 = vunpack.c.l.b16 %v2351
    %v2828 = vunpack.c.l.b16 %v2352
    %v2829 = vunpack.c.h.b16 %v2352
    %v2830 = vunpack.c.l.b16 %v2353
    %v2831 = vunpack.c.h.b16 %v2353
    %v2832 = vunpack.c.l.b16 %v2354
    %v2833 = vunpack.c.h.b16 %v2354
    %v2834 = vunpack.c.l.b16 %v2355
    %v2835 = vunpack.c.l.b16 %v2356
    %v2836 = vunpack.c.h.b16 %v2356
    %v2837 = vunpack.c.l.b16 %v2357
    %v2838 = vunpack.c.h.b16 %v2357
    %v2839 = vunpack.c.l.b16 %v2358
    %v2840 = vunpack.c.h.b16 %v2358
    %v2841 = vunpack.c.l.b16 %v2359
    %v2842 = vunpack.c.l.b16 %v2360
    %v2843 = vunpack.c.h.b16 %v2360
    %v2844 = vunpack.c.l.b16 %v2361
    %v2845 = vunpack.c.h.b16 %v2361
    %v2846 = vunpack.c.l.b16 %v2362
    %v2847 = vunpack.c.h.b16 %v2362
    %v2848 = vunpack.c.l.b16 %v2363
    %v2849 = vunpack.c.l.b16 %v2364
    %v2850 = vunpack.c.h.b16 %v2364
    %v2851 = vunpack.c.l.b16 %v2365
    %v2852 = vunpack.c.h.b16 %v2365
    %v2853 = vunpack.c.l.b16 %v2366
    %v2854 = vunpack.c.h.b16 %v2366
    %v2855 = vunpack.c.l.b16 %v2367
    %v2856 = vunpack.c.l.b16 %v2368
    %v2857 = vunpack.c.h.b16 %v2368
    %v2858 = vunpack.c.l.b16 %v2369
    %v2859 = vunpack.c.h.b16 %v2369
    %v2860 = vunpack.c.l.b16 %v2370
    %v2861 = vunpack.c.h.b16 %v2370
    %v2862 = vunpack.c.l.b16 %v2371
    %v2863 = vunpack.c.l.b16 %v2372
    %v2864 = vunpack.c.h.b16 %v2372
    %v2865 = vunpack.c.l.b16 %v2373
    %v2866 = vunpack.c.h.b16 %v2373
    %v2867 = vunpack.c.l.b16 %v2374
    %v2868 = vunpack.c.h.b16 %v2374
    %v2869 = vunpack.c.l.b16 %v2375
    %v2870 = vunpack.c.l.b16 %v2376
    %v2871 = vunpack.c.h.b16 %v2376
    %v2872 = vunpack.c.l.b16 %v2377
    %v2873 = vunpack.c.h.b16 %v2377
    %v2874 = vunpack.c.l.b16 %v2378
    %v2875 = vunpack.c.h.b16 %v2378
    %v2876 = vunpack.c.l.b16 %v2379
    %v2877 = vunpack.c.l.b16 %v2380
    %v2878 = vunpack.c.h.b16 %v2380
    %v2879 = vunpack.c.l.b16 %v2381
    %v2880 = vunpack.c.h.b16 %v2381
    %v2881 = vunpack.c.l.b16 %v2382
    %v2882 = vunpack.c.h.b16 %v2382
    %v2883 = vunpack.c.l.b16 %v2383
    %v2884 = vunpack.c.l.b16 %v2384
    %v2885 = vunpack.c.h.b16 %v2384
    %v2886 = vunpack.c.l.b16 %v2385
    %v2887 = vunpack.c.h.b16 %v2385
    %v2888 = vunpack.c.l.b16 %v2386
    %v2889 = vunpack.c.h.b16 %v2386
    %v2890 = vunpack.c.l.b16 %v2387
    %v2891 = vunpack.c.l.b16 %v2388
    %v2892 = vunpack.c.h.b16 %v2388
    %v2893 = vunpack.c.l.b16 %v2389
    %v2894 = vunpack.c.h.b16 %v2389
    %v2895 = vunpack.c.l.b16 %v2390
    %v2896 = vunpack.c.h.b16 %v2390
    %v2897 = vunpack.c.l.b16 %v2391
    %v2898 = vunpack.c.l.b16 %v2392
    %v2899 = vunpack.c.h.b16 %v2392
    %v2900 = vunpack.c.l.b16 %v2393
    %v2901 = vunpack.c.h.b16 %v2393
    %v2902 = vunpack.c.l.b16 %v2394
    %v2903 = vunpack.c.h.b16 %v2394
    %v2904 = vunpack.c.l.b16 %v2395
    %v2905 = vunpack.c.l.b16 %v2396
    %v2906 = vunpack.c.h.b16 %v2396
    %v2907 = vunpack.c.l.b16 %v2397
    %v2908 = vunpack.c.h.b16 %v2397
    %v2909 = vunpack.c.l.b16 %v2398
    %v2910 = vunpack.c.h.b16 %v2398
    %v2911 = vunpack.c.l.b16 %v2399
    %v2912 = vunpack.c.l.b16 %v2400
    %v2913 = vunpack.c.h.b16 %v2400
    %v2914 = vunpack.c.l.b16 %v2401
    %v2915 = vunpack.c.h.b16 %v2401
    %v2916 = vunpack.c.l.b16 %v2402
    %v2917 = vunpack.c.h.b16 %v2402
    %v2918 = vunpack.c.l.b16 %v2403
    %v2919 = vunpack.c.l.b16 %v2404
    %v2920 = vunpack.c.h.b16 %v2404
    %v2921 = vunpack.c.l.b16 %v2405
    %v2922 = vunpack.c.h.b16 %v2405
    %v2923 = vunpack.c.l.b16 %v2406
    %v2924 = vunpack.c.h.b16 %v2406
    %v2925 = vunpack.c.l.b16 %v2407
    %v2926 = vunpack.c.l.b16 %v2408
    %v2927 = vunpack.c.h.b16 %v2408
    %v2928 = vunpack.c.l.b16 %v2409
    %v2929 = vunpack.c.h.b16 %v2409
    %v2930 = vunpack.c.l.b16 %v2410
    %v2931 = vunpack.c.h.b16 %v2410
    %v2932 = vunpack.c.l.b16 %v2411
    %v2933 = vunpack.c.l.b16 %v2412
    %v2934 = vunpack.c.h.b16 %v2412
    %v2935 = vunpack.c.l.b16 %v2413
    %v2936 = vunpack.c.h.b16 %v2413
    %v2937 = vunpack.c.l.b16 %v2414
    %v2938 = vunpack.c.h.b16 %v2414
    %v2939 = vunpack.c.l.b16 %v2415
    %v2940 = vunpack.c.l.b16 %v2416
    %v2941 = vunpack.c.h.b16 %v2416
    %v2942 = vunpack.c.l.b16 %v2417
    %v2943 = vunpack.c.h.b16 %v2417
    %v2944 = vunpack.c.l.b16 %v2418
    %v2945 = vunpack.c.h.b16 %v2418
    %v2946 = vunpack.c.l.b16 %v2419
    %v2947 = vunpack.c.l.b16 %v2420
    %v2948 = vunpack.c.h.b16 %v2420
    %v2949 = vunpack.c.l.b16 %v2421
    %v2950 = vunpack.c.h.b16 %v2421
    %v2951 = vunpack.c.l.b16 %v2422
    %v2952 = vunpack.c.h.b16 %v2422
    %v2953 = vunpack.c.l.b16 %v2423
    %v2954 = vunpack.c.l.b16 %v2424
    %v2955 = vunpack.c.h.b16 %v2424
    %v2956 = vunpack.c.l.b16 %v2425
    %v2957 = vunpack.c.h.b16 %v2425
    %v2958 = vunpack.c.l.b16 %v2426
    %v2959 = vunpack.c.h.b16 %v2426
    %v2960 = vunpack.c.l.b16 %v2427
    %v2961 = vunpack.c.l.b16 %v2428
    %v2962 = vunpack.c.h.b16 %v2428
    %v2963 = vunpack.c.l.b16 %v2429
    %v2964 = vunpack.c.h.b16 %v2429
    %v2965 = vunpack.c.l.b16 %v2430
    %v2966 = vunpack.c.h.b16 %v2430
    %v2967 = vunpack.c.l.b16 %v2431
    %v2968 = vunpack.c.l.b16 %v2432
    %v2969 = vunpack.c.h.b16 %v2432
    %v2970 = vunpack.c.l.b16 %v2433
    %v2971 = vunpack.c.h.b16 %v2433
    %v2972 = vunpack.c.l.b16 %v2434
    %v2973 = vunpack.c.h.b16 %v2434
    %v2974 = vunpack.c.l.b16 %v2435
    %v2975 = vunpack.c.l.b16 %v2436
    %v2976 = vunpack.c.h.b16 %v2436
    %v2977 = vunpack.c.l.b16 %v2437
    %v2978 = vunpack.c.h.b16 %v2437
    %v2979 = vunpack.c.l.b16 %v2438
    %v2980 = vunpack.c.h.b16 %v2438
    %v2981 = vunpack.c.l.b16 %v2439
    %v2982 = vunpack.c.l.b16 %v2440
    %v2983 = vunpack.c.h.b16 %v2440
    %v2984 = vunpack.c.l.b16 %v2441
    %v2985 = vunpack.c.h.b16 %v2441
    %v2986 = vunpack.c.l.b16 %v2442
    %v2987 = vunpack.c.h.b16 %v2442
    %v2988 = vunpack.c.l.b16 %v2443
    %v2989 = vunpack.c.l.b16 %v2444
    %v2990 = vunpack.c.h.b16 %v2444
    %v2991 = vunpack.c.l.b16 %v2445
    %v2992 = vunpack.c.h.b16 %v2445
    %v2993 = vunpack.c.l.b16 %v2446
    %v2994 = vunpack.c.h.b16 %v2446
    %v2995 = vunpack.c.l.b16 %v2447
    %v2996 = vunpack.c.l.b16 %v2448
    %v2997 = vunpack.c.h.b16 %v2448
    %v2998 = vunpack.c.l.b16 %v2449
    %v2999 = vunpack.c.h.b16 %v2449
    %v3000 = vunpack.c.l.b16 %v2450
    %v3001 = vunpack.c.h.b16 %v2450
    %v3002 = vunpack.c.l.b16 %v2451
    %v3003 = vunpack.c.l.b16 %v2452
    %v3004 = vunpack.c.h.b16 %v2452
    %v3005 = vunpack.c.l.b16 %v2453
    %v3006 = vunpack.c.h.b16 %v2453
    %v3007 = vunpack.c.l.b16 %v2454
    %v3008 = vunpack.c.h.b16 %v2454
    %v3009 = vunpack.c.l.b16 %v2455
    %v3010 = vunpack.c.l.b16 %v2456
    %v3011 = vunpack.c.h.b16 %v2456
    %v3012 = vunpack.c.l.b16 %v2457
    %v3013 = vunpack.c.h.b16 %v2457
    %v3014 = vunpack.c.l.b16 %v2458
    %v3015 = vunpack.c.h.b16 %v2458
    %v3016 = vunpack.c.l.b16 %v2459
    %v3017 = vunpack.c.l.b16 %v2460
    %v3018 = vunpack.c.h.b16 %v2460
    %v3019 = vunpack.c.l.b16 %v2461
    %v3020 = vunpack.c.h.b16 %v2461
    %v3021 = vunpack.c.l.b16 %v2462
    %v3022 = vunpack.c.h.b16 %v2462
    %v3023 = vunpack.c.l.b16 %v2463
    %v3024 = vunpack.c.l.b16 %v2464
    %v3025 = vunpack.c.h.b16 %v2464
    %v3026 = vunpack.c.l.b16 %v2465
    %v3027 = vunpack.c.h.b16 %v2465
    %v3028 = vunpack.c.l.b16 %v2466
    %v3029 = vunpack.c.h.b16 %v2466
    %v3030 = vunpack.c.l.b16 %v2467
    %v3031 = vunpack.c.l.b16 %v2468
    %v3032 = vunpack.c.h.b16 %v2468
    %v3033 = vunpack.c.l.b16 %v2469
    %v3034 = vunpack.c.h.b16 %v2469
    %v3035 = vunpack.c.l.b16 %v2470
    %v3036 = vunpack.c.h.b16 %v2470
    %v3037 = vunpack.c.l.b16 %v2471
    %v3038 = vunpack.c.l.b16 %v2472
    %v3039 = vunpack.c.h.b16 %v2472
    %v3040 = vunpack.c.l.b16 %v2473
    %v3041 = vunpack.c.h.b16 %v2473
    %v3042 = vunpack.c.l.b16 %v2474
    %v3043 = vunpack.c.h.b16 %v2474
    %v3044 = vunpack.c.l.b16 %v2475
    %v3045 = vunpack.c.l.b16 %v2476
    %v3046 = vunpack.c.h.b16 %v2476
    %v3047 = vunpack.c.l.b16 %v2477
    %v3048 = vunpack.c.h.b16 %v2477
    %v3049 = vunpack.c.l.b16 %v2478
    %v3050 = vunpack.c.h.b16 %v2478
    %v3051 = vunpack.c.l.b16 %v2479
    %v3052 = vunpack.c.l.b16 %v2480
    %v3053 = vunpack.c.h.b16 %v2480
    %v3054 = vunpack.c.l.b16 %v2481
    %v3055 = vunpack.c.h.b16 %v2481
    %v3056 = vunpack.c.l.b16 %v2482
    %v3057 = vunpack.c.h.b16 %v2482
    %v3058 = vunpack.c.l.b16 %v2483
    %v3059 = vunpack.c.l.b16 %v2484
    %v3060 = vunpack.c.h.b16 %v2484
    %v3061 = vunpack.c.l.b16 %v2485
    %v3062 = vunpack.c.h.b16 %v2485
    %v3063 = vunpack.c.l.b16 %v2486
    %v3064 = vunpack.c.h.b16 %v2486
    %v3065 = vunpack.c.l.b16 %v2487
    %v3066 = vunpack.c.l.b16 %v2488
    %v3067 = vunpack.c.h.b16 %v2488
    %v3068 = vunpack.c.l.b16 %v2489
    %v3069 = vunpack.c.h.b16 %v2489
    %v3070 = vunpack.c.l.b16 %v2490
    %v3071 = vunpack.c.h.b16 %v2490
    %v3072 = vunpack.c.l.b16 %v2491
    %v3073 = vunpack.c.l.b16 %v2492
    %v3074 = vunpack.c.h.b16 %v2492
    %v3075 = vunpack.c.l.b16 %v2493
    %v3076 = vunpack.c.h.b16 %v2493
    %v3077 = vunpack.c.l.b16 %v2494
    %v3078 = vunpack.c.h.b16 %v2494
    %v3079 = vunpack.c.l.b16 %v2495
    %v3080 = vunpack.c.l.b16 %v2496
    %v3081 = vunpack.c.h.b16 %v2496
    %v3082 = vunpack.c.l.b16 %v2497
    %v3083 = vunpack.c.h.b16 %v2497
    %v3084 = vunpack.c.l.b16 %v2498
    %v3085 = vunpack.c.h.b16 %v2498
    %v3086 = vunpack.c.l.b16 %v2499
    %v3087 = vpack.c.b16 %v2744, %v2737
    %v3088 = vpack.c.b16 %v2745, %v2738
    %v3089 = vpack.c.b16 %v2746, %v2739
    %v3090 = vpack.c.b16 %v2747, %v2740
    %v3091 = vpack.c.b16 %v2748, %v2741
    %v3092 = vpack.c.b16 %v2749, %v2742
    %v3093 = vpack.c.b16 %v2750, %v2743
    %v3094 = vpack.c.b16 %v2758, %v2751
    %v3095 = vpack.c.b16 %v2759, %v2752
    %v3096 = vpack.c.b16 %v2760, %v2753
    %v3097 = vpack.c.b16 %v2761, %v2754
    %v3098 = vpack.c.b16 %v2762, %v2755
    %v3099 = vpack.c.b16 %v2763, %v2756
    %v3100 = vpack.c.b16 %v2764, %v2757
    %v3101 = vpack.c.b16 %v2772, %v2765
    %v3102 = vpack.c.b16 %v2773, %v2766
    %v3103 = vpack.c.b16 %v2774, %v2767
    %v3104 = vpack.c.b16 %v2775, %v2768
    %v3105 = vpack.c.b16 %v2776, %v2769
    %v3106 = vpack.c.b16 %v2777, %v2770
    %v3107 = vpack.c.b16 %v2778, %v2771
    %v3108 = vpack.c.b16 %v2786, %v2779
    %v3109 = vpack.c.b16 %v2787, %v2780
    %v3110 = vpack.c.b16 %v2788, %v2781
    %v3111 = vpack.c.b16 %v2789, %v2782
    %v3112 = vpack.c.b16 %v2790, %v2783
    %v3113 = vpack.c.b16 %v2791, %v2784
    %v3114 = vpack.c.b16 %v2792, %v2785
    %v3115 = vpack.c.b16 %v2800, %v2793
    %v3116 = vpack.c.b16 %v2801, %v2794
    %v3117 = vpack.c.b16 %v2802, %v2795
    %v3118 = vpack.c.b16 %v2803, %v2796
    %v3119 = vpack.c.b16 %v2804, %v2797
    %v3120 = vpack.c.b16 %v2805, %v2798
    %v3121 = vpack.c.b16 %v2806, %v2799
    %v3122 = vpack.c.b16 %v2814, %v2807
    %v3123 = vpack.c.b16 %v2815, %v2808
    %v3124 = vpack.c.b16 %v2816, %v2809
    %v3125 = vpack.c.b16 %v2817, %v2810
    %v3126 = vpack.c.b16 %v2818, %v2811
    %v3127 = vpack.c.b16 %v2819, %v2812
    %v3128 = vpack.c.b16 %v2820, %v2813
    %v3129 = vpack.c.b16 %v2828, %v2821
    %v3130 = vpack.c.b16 %v2829, %v2822
    %v3131 = vpack.c.b16 %v2830, %v2823
    %v3132 = vpack.c.b16 %v2831, %v2824
    %v3133 = vpack.c.b16 %v2832, %v2825
    %v3134 = vpack.c.b16 %v2833, %v2826
    %v3135 = vpack.c.b16 %v2834, %v2827
    %v3136 = vpack.c.b16 %v2842, %v2835
    %v3137 = vpack.c.b16 %v2843, %v2836
    %v3138 = vpack.c.b16 %v2844, %v2837
    %v3139 = vpack.c.b16 %v2845, %v2838
    %v3140 = vpack.c.b16 %v2846, %v2839
    %v3141 = vpack.c.b16 %v2847, %v2840
    %v3142 = vpack.c.b16 %v2848, %v2841
    %v3143 = vpack.c.b16 %v2856, %v2849
    %v3144 = vpack.c.b16 %v2857, %v2850
    %v3145 = vpack.c.b16 %v2858, %v2851
    %v3146 = vpack.c.b16 %v2859, %v2852
    %v3147 = vpack.c.b16 %v2860, %v2853
    %v3148 = vpack.c.b16 %v2861, %v2854
    %v3149 = vpack.c.b16 %v2862, %v2855
    %v3150 = vpack.c.b16 %v2870, %v2863
    %v3151 = vpack.c.b16 %v2871, %v2864
    %v3152 = vpack.c.b16 %v2872, %v2865
    %v3153 = vpack.c.b16 %v2873, %v2866
    %v3154 = vpack.c.b16 %v2874, %v2867
    %v3155 = vpack.c.b16 %v2875, %v2868
    %v3156 = vpack.c.b16 %v2876, %v2869
    %v3157 = vpack.c.b16 %v2884, %v2877
    %v3158 = vpack.c.b16 %v2885, %v2878
    %v3159 = vpack.c.b16 %v2886, %v2879
    %v3160 = vpack.c.b16 %v2887, %v2880
    %v3161 = vpack.c.b16 %v2888, %v2881
    %v3162 = vpack.c.b16 %v2889, %v2882
    %v3163 = vpack.c.b16 %v2890, %v2883
    %v3164 = vpack.c.b16 %v2898, %v2891
    %v3165 = vpack.c.b16 %v2899, %v2892
    %v3166 = vpack.c.b16 %v2900, %v2893
    %v3167 = vpack.c.b16 %v2901, %v2894
    %v3168 = vpack.c.b16 %v2902, %v2895
    %v3169 = vpack.c.b16 %v2903, %v2896
    %v3170 = vpack.c.b16 %v2904, %v2897
    %v3171 = vpack.c.b16 %v2912, %v2905
    %v3172 = vpack.c.b16 %v2913, %v2906
    %v3173 = vpack.c.b16 %v2914, %v2907
    %v3174 = vpack.c.b16 %v2915, %v2908
    %v3175 = vpack.c.b16 %v2916, %v2909
    %v3176 = vpack.c.b16 %v2917, %v2910
    %v3177 = vpack.c.b16 %v2918, %v2911
    %v3178 = vpack.c.b16 %v2926, %v2919
    %v3179 = vpack.c.b16 %v2927, %v2920
    %v3180 = vpack.c.b16 %v2928, %v2921
    %v3181 = vpack.c.b16 %v2929, %v2922
    %v3182 = vpack.c.b16 %v2930, %v2923
    %v3183 = vpack.c.b16 %v2931, %v2924
    %v3184 = vpack.c.b16 %v2932, %v2925
    %v3185 = vpack.c.b16 %v2940, %v2933
    %v3186 = vpack.c.b16 %v2941, %v2934
    %v3187 = vpack.c.b16 %v2942, %v2935
    %v3188 = vpack.c.b16 %v2943, %v2936
    %v3189 = vpack.c.b16 %v2944, %v2937
    %v3190 = vpack.c.b16 %v2945, %v2938
    %v3191 = vpack.c.b16 %v2946, %v2939
    %v3192 = vpack.c.b16 %v2954, %v2947
    %v3193 = vpack.c.b16 %v2955, %v2948
    %v3194 = vpack.c.b16 %v2956, %v2949
    %v3195 = vpack.c.b16 %v2957, %v2950
    %v3196 = vpack.c.b16 %v2958, %v2951
    %v3197 = vpack.c.b16 %v2959, %v2952
    %v3198 = vpack.c.b16 %v2960, %v2953
    %v3199 = vpack.c.b16 %v2968, %v2961
    %v3200 = vpack.c.b16 %v2969, %v2962
    %v3201 = vpack.c.b16 %v2970, %v2963
    %v3202 = vpack.c.b16 %v2971, %v2964
    %v3203 = vpack.c.b16 %v2972, %v2965
    %v3204 = vpack.c.b16 %v2973, %v2966
    %v3205 = vpack.c.b16 %v2974, %v2967
    %v3206 = vpack.c.b16 %v2982, %v2975
    %v3207 = vpack.c.b16 %v2983, %v2976
    %v3208 = vpack.c.b16 %v2984, %v2977
    %v3209 = vpack.c.b16 %v2985, %v2978
    %v3210 = vpack.c.b16 %v2986, %v2979
    %v3211 = vpack.c.b16 %v2987, %v2980
    %v3212 = vpack.c.b16 %v2988, %v2981
    %v3213 = vpack.c.b16 %v2996, %v2989
    %v3214 = vpack.c.b16 %v2997, %v2990
    %v3215 = vpack.c.b16 %v2998, %v2991
    %v3216 = vpack.c.b16 %v2999, %v2992
    %v3217 = vpack.c.b16 %v3000, %v2993
    %v3218 = vpack.c.b16 %v3001, %v2994
    %v3219 = vpack.c.b16 %v3002, %v2995
    %v3220 = vpack.c.b16 %v3010, %v3003
    %v3221 = vpack.c.b16 %v3011, %v3004
    %v3222 = vpack.c.b16 %v3012, %v3005
    %v3223 = vpack.c.b16 %v3013, %v3006
    %v3224 = vpack.c.b16 %v3014, %v3007
    %v3225 = vpack.c.b16 %v3015, %v3008
    %v3226 = vpack.c.b16 %v3016, %v3009
    %v3227 = vpack.c.b16 %v3024, %v3017
    %v3228 = vpack.c.b16 %v3025, %v3018
    %v3229 = vpack.c.b16 %v3026, %v3019
    %v3230 = vpack.c.b16 %v3027, %v3020
    %v3231 = vpack.c.b16 %v3028, %v3021
    %v3232 = vpack.c.b16 %v3029, %v3022
    %v3233 = vpack.c.b16 %v3030, %v3023
    %v3234 = vpack.c.b16 %v3038, %v3031
    %v3235 = vpack.c.b16 %v3039, %v3032
    %v3236 = vpack.c.b16 %v3040, %v3033
    %v3237 = vpack.c.b16 %v3041, %v3034
    %v3238 = vpack.c.b16 %v3042, %v3035
    %v3239 = vpack.c.b16 %v3043, %v3036
    %v3240 = vpack.c.b16 %v3044, %v3037
    %v3241 = vpack.c.b16 %v3052, %v3045
    %v3242 = vpack.c.b16 %v3053, %v3046
    %v3243 = vpack.c.b16 %v3054, %v3047
    %v3244 = vpack.c.b16 %v3055, %v3048
    %v3245 = vpack.c.b16 %v3056, %v3049
    %v3246 = vpack.c.b16 %v3057, %v3050
    %v3247 = vpack.c.b16 %v3058, %v3051
    %v3248 = vpack.c.b16 %v3066, %v3059
    %v3249 = vpack.c.b16 %v3067, %v3060
    %v3250 = vpack.c.b16 %v3068, %v3061
    %v3251 = vpack.c.b16 %v3069, %v3062
    %v3252 = vpack.c.b16 %v3070, %v3063
    %v3253 = vpack.c.b16 %v3071, %v3064
    %v3254 = vpack.c.b16 %v3072, %v3065
    %v3255 = vpack.c.b16 %v3080, %v3073
    %v3256 = vpack.c.b16 %v3081, %v3074
    %v3257 = vpack.c.b16 %v3082, %v3075
    %v3258 = vpack.c.b16 %v3083, %v3076
    %v3259 = vpack.c.b16 %v3084, %v3077
    %v3260 = vpack.c.b16 %v3085, %v3078
    %v3261 = vpack.c.b16 %v3086, %v3079
    %v3438 = vsel %vm1252, %v2299, 0
    %3440 = vmatprep.subr.bf16.mxu0 %v3088
    %3441 = vmatpush1.bf16.msra.mxu0 %v3087
    %3442 = vmatprep.subr.bf16.mxu0 %v3095
    %3443 = vmatpush1.bf16.msra.mxu0 %v3094
    %3444 = vmatprep.subr.bf16.mxu0 %v3102
    %3445 = vmatpush1.bf16.msra.mxu0 %v3101
    %3446 = vmatprep.subr.bf16.mxu0 %v3109
    %3447 = vmatpush1.bf16.msra.mxu0 %v3108
    %3448 = vmatprep.subr.bf16.mxu0 %v3116
    %3449 = vmatpush1.bf16.msra.mxu0 %v3115
    %3450 = vmatprep.subr.bf16.mxu0 %v3123
    %3451 = vmatpush1.bf16.msra.mxu0 %v3122
    %3452 = vmatprep.subr.bf16.mxu0 %v3130
    %3453 = vmatpush1.bf16.msra.mxu0 %v3129
    %3454 = vmatprep.subr.bf16.mxu0 %v3137
    %3455 = vmatpush1.bf16.msra.mxu0 %v3136
    %3456 = vmatprep.subr.bf16.mxu0 %v3144
    %3457 = vmatpush1.bf16.msra.mxu0 %v3143
    %3458 = vmatprep.subr.bf16.mxu0 %v3151
    %3459 = vmatpush1.bf16.msra.mxu0 %v3150
    %3460 = vmatprep.subr.bf16.mxu0 %v3158
    %3461 = vmatpush1.bf16.msra.mxu0 %v3157
    %3462 = vmatprep.subr.bf16.mxu0 %v3165
    %3463 = vmatpush1.bf16.msra.mxu0 %v3164
    %3464 = vmatprep.subr.bf16.mxu0 %v3172
    %3465 = vmatpush1.bf16.msra.mxu0 %v3171
    %3466 = vmatprep.subr.bf16.mxu0 %v3179
    %3467 = vmatpush1.bf16.msra.mxu0 %v3178
    %3468 = vmatprep.subr.bf16.mxu0 %v3186
    %3469 = vmatpush1.bf16.msra.mxu0 %v3185
    %3470 = vmatprep.subr.bf16.mxu0 %v3193
    %3471 = vmatpush1.bf16.msra.mxu0 %v3192
    %3472 = vmatprep.mubr.bf16.mxu0 %v2297
    %3473 = vmatmul.mubr.bf16.gmra.mrb[0].mxu0 %v2296
    %v3474 = vpop.f32.mrb[0].mxu0
    %v3475 = vadd.f32 %v2505, %v3474
    %v3476 = vpop.f32.mrb[0].mxu0
    %v3477 = vadd.f32 %v2509, %v3476
    %v3478 = vpop.f32.mrb[0].mxu0
    %v3479 = vpop.f32.mrb[0].mxu0
    %3480 = vdwg.mxu0
    %3481 = vmatprep.subr.bf16.mxu0 %v3200
    %3482 = vmatpush1.bf16.msra.mxu0 %v3199
    %3483 = vmatprep.subr.bf16.mxu0 %v3207
    %3484 = vmatpush1.bf16.msra.mxu0 %v3206
    %3485 = vmatprep.subr.bf16.mxu0 %v3214
    %3486 = vmatpush1.bf16.msra.mxu0 %v3213
    %3487 = vmatprep.subr.bf16.mxu0 %v3221
    %3488 = vmatpush1.bf16.msra.mxu0 %v3220
    %3489 = vmatprep.subr.bf16.mxu0 %v3228
    %3490 = vmatpush1.bf16.msra.mxu0 %v3227
    %3491 = vmatprep.subr.bf16.mxu0 %v3235
    %3492 = vmatpush1.bf16.msra.mxu0 %v3234
    %3493 = vmatprep.subr.bf16.mxu0 %v3242
    %3494 = vmatpush1.bf16.msra.mxu0 %v3241
    %3495 = vmatprep.subr.bf16.mxu0 %v3249
    %3496 = vmatpush1.bf16.msra.mxu0 %v3248
    %3497 = vmatprep.subr.bf16.mxu0 %v3256
    %3498 = vmatpush1.bf16.msra.mxu0 %v3255
    %3499 = vmatprep.subr.bf16.mxu0 0
    %3500 = vmatpush1.bf16.msra.mxu0 0
    %3501 = vmatprep.subr.bf16.mxu0 0
    %3502 = vmatpush1.bf16.msra.mxu0 0
    %3503 = vmatprep.subr.bf16.mxu0 0
    %3504 = vmatpush1.bf16.msra.mxu0 0
    %3505 = vmatprep.subr.bf16.mxu0 0
    %3506 = vmatpush1.bf16.msra.mxu0 0
    %3507 = vmatprep.subr.bf16.mxu0 0
    %3508 = vmatpush1.bf16.msra.mxu0 0
    %3509 = vmatprep.subr.bf16.mxu0 0
    %3510 = vmatpush1.bf16.msra.mxu0 0
    %3511 = vmatprep.subr.bf16.mxu0 0
    %3512 = vmatpush1.bf16.msra.mxu0 0
    %3513 = vmatprep.mubr.bf16.mxu0 %v3438
    %3514 = vmatmul.mubr.bf16.gmra.mrb[0].mxu0 %v2298
    %v3515 = vpop.f32.mrb[0].mxu0
    %v3516 = vadd.f32 %v3475, %v3515
    %v3517 = vpop.f32.mrb[0].mxu0
    %v3518 = vadd.f32 %v3477, %v3517
    %v3519 = vpop.f32.mrb[0].mxu0
    %v3520 = vpop.f32.mrb[0].mxu0
    %3521 = vdwg.mxu0
    %3522 = vmatprep.subr.bf16.mxu0 %v3090
    %3523 = vmatpush1.bf16.msra.mxu0 %v3089
    %3524 = vmatprep.subr.bf16.mxu0 %v3097
    %3525 = vmatpush1.bf16.msra.mxu0 %v3096
    %3526 = vmatprep.subr.bf16.mxu0 %v3104
    %3527 = vmatpush1.bf16.msra.mxu0 %v3103
    %3528 = vmatprep.subr.bf16.mxu0 %v3111
    %3529 = vmatpush1.bf16.msra.mxu0 %v3110
    %3530 = vmatprep.subr.bf16.mxu0 %v3118
    %3531 = vmatpush1.bf16.msra.mxu0 %v3117
    %3532 = vmatprep.subr.bf16.mxu0 %v3125
    %3533 = vmatpush1.bf16.msra.mxu0 %v3124
    %3534 = vmatprep.subr.bf16.mxu0 %v3132
    %3535 = vmatpush1.bf16.msra.mxu0 %v3131
    %3536 = vmatprep.subr.bf16.mxu0 %v3139
    %3537 = vmatpush1.bf16.msra.mxu0 %v3138
    %3538 = vmatprep.subr.bf16.mxu0 %v3146
    %3539 = vmatpush1.bf16.msra.mxu0 %v3145
    %3540 = vmatprep.subr.bf16.mxu0 %v3153
    %3541 = vmatpush1.bf16.msra.mxu0 %v3152
    %3542 = vmatprep.subr.bf16.mxu0 %v3160
    %3543 = vmatpush1.bf16.msra.mxu0 %v3159
    %3544 = vmatprep.subr.bf16.mxu0 %v3167
    %3545 = vmatpush1.bf16.msra.mxu0 %v3166
    %3546 = vmatprep.subr.bf16.mxu0 %v3174
    %3547 = vmatpush1.bf16.msra.mxu0 %v3173
    %3548 = vmatprep.subr.bf16.mxu0 %v3181
    %3549 = vmatpush1.bf16.msra.mxu0 %v3180
    %3550 = vmatprep.subr.bf16.mxu0 %v3188
    %3551 = vmatpush1.bf16.msra.mxu0 %v3187
    %3552 = vmatprep.subr.bf16.mxu0 %v3195
    %3553 = vmatpush1.bf16.msra.mxu0 %v3194
    %3554 = vmatprep.mubr.bf16.mxu0 %v2297
    %3555 = vmatmul.mubr.bf16.gmra.mrb[0].mxu0 %v2296
    %v3556 = vpop.f32.mrb[0].mxu0
    %v3557 = vadd.f32 %v2513, %v3556
    %v3558 = vpop.f32.mrb[0].mxu0
    %v3559 = vadd.f32 %v2517, %v3558
    %v3560 = vpop.f32.mrb[0].mxu0
    %v3561 = vpop.f32.mrb[0].mxu0
    %3562 = vdwg.mxu0
    %3563 = vmatprep.subr.bf16.mxu0 %v3202
    %3564 = vmatpush1.bf16.msra.mxu0 %v3201
    %3565 = vmatprep.subr.bf16.mxu0 %v3209
    %3566 = vmatpush1.bf16.msra.mxu0 %v3208
    %3567 = vmatprep.subr.bf16.mxu0 %v3216
    %3568 = vmatpush1.bf16.msra.mxu0 %v3215
    %3569 = vmatprep.subr.bf16.mxu0 %v3223
    %3570 = vmatpush1.bf16.msra.mxu0 %v3222
    %3571 = vmatprep.subr.bf16.mxu0 %v3230
    %3572 = vmatpush1.bf16.msra.mxu0 %v3229
    %3573 = vmatprep.subr.bf16.mxu0 %v3237
    %3574 = vmatpush1.bf16.msra.mxu0 %v3236
    %3575 = vmatprep.subr.bf16.mxu0 %v3244
    %3576 = vmatpush1.bf16.msra.mxu0 %v3243
    %3577 = vmatprep.subr.bf16.mxu0 %v3251
    %3578 = vmatpush1.bf16.msra.mxu0 %v3250
    %3579 = vmatprep.subr.bf16.mxu0 %v3258
    %3580 = vmatpush1.bf16.msra.mxu0 %v3257
    %3581 = vmatprep.subr.bf16.mxu0 0
    %3582 = vmatpush1.bf16.msra.mxu0 0
    %3583 = vmatprep.subr.bf16.mxu0 0
    %3584 = vmatpush1.bf16.msra.mxu0 0
    %3585 = vmatprep.subr.bf16.mxu0 0
    %3586 = vmatpush1.bf16.msra.mxu0 0
    %3587 = vmatprep.subr.bf16.mxu0 0
    %3588 = vmatpush1.bf16.msra.mxu0 0
    %3589 = vmatprep.subr.bf16.mxu0 0
    %3590 = vmatpush1.bf16.msra.mxu0 0
    %3591 = vmatprep.subr.bf16.mxu0 0
    %3592 = vmatpush1.bf16.msra.mxu0 0
    %3593 = vmatprep.subr.bf16.mxu0 0
    %3594 = vmatpush1.bf16.msra.mxu0 0
    %3595 = vmatprep.mubr.bf16.mxu0 %v3438
    %3596 = vmatmul.mubr.bf16.gmra.mrb[0].mxu0 %v2298
    %v3597 = vpop.f32.mrb[0].mxu0
    %v3598 = vadd.f32 %v3557, %v3597
    %v3599 = vpop.f32.mrb[0].mxu0
    %v3600 = vadd.f32 %v3559, %v3599
    %v3601 = vpop.f32.mrb[0].mxu0
    %v3602 = vpop.f32.mrb[0].mxu0
    %3603 = vdwg.mxu0
    %3604 = vmatprep.subr.bf16.mxu0 %v3092
    %3605 = vmatpush1.bf16.msra.mxu0 %v3091
    %3606 = vmatprep.subr.bf16.mxu0 %v3099
    %3607 = vmatpush1.bf16.msra.mxu0 %v3098
    %3608 = vmatprep.subr.bf16.mxu0 %v3106
    %3609 = vmatpush1.bf16.msra.mxu0 %v3105
    %3610 = vmatprep.subr.bf16.mxu0 %v3113
    %3611 = vmatpush1.bf16.msra.mxu0 %v3112
    %3612 = vmatprep.subr.bf16.mxu0 %v3120
    %3613 = vmatpush1.bf16.msra.mxu0 %v3119
    %3614 = vmatprep.subr.bf16.mxu0 %v3127
    %3615 = vmatpush1.bf16.msra.mxu0 %v3126
    %3616 = vmatprep.subr.bf16.mxu0 %v3134
    %3617 = vmatpush1.bf16.msra.mxu0 %v3133
    %3618 = vmatprep.subr.bf16.mxu0 %v3141
    %3619 = vmatpush1.bf16.msra.mxu0 %v3140
    %3620 = vmatprep.subr.bf16.mxu0 %v3148
    %3621 = vmatpush1.bf16.msra.mxu0 %v3147
    %3622 = vmatprep.subr.bf16.mxu0 %v3155
    %3623 = vmatpush1.bf16.msra.mxu0 %v3154
    %3624 = vmatprep.subr.bf16.mxu0 %v3162
    %3625 = vmatpush1.bf16.msra.mxu0 %v3161
    %3626 = vmatprep.subr.bf16.mxu0 %v3169
    %3627 = vmatpush1.bf16.msra.mxu0 %v3168
    %3628 = vmatprep.subr.bf16.mxu0 %v3176
    %3629 = vmatpush1.bf16.msra.mxu0 %v3175
    %3630 = vmatprep.subr.bf16.mxu0 %v3183
    %3631 = vmatpush1.bf16.msra.mxu0 %v3182
    %3632 = vmatprep.subr.bf16.mxu0 %v3190
    %3633 = vmatpush1.bf16.msra.mxu0 %v3189
    %3634 = vmatprep.subr.bf16.mxu0 %v3197
    %3635 = vmatpush1.bf16.msra.mxu0 %v3196
    %3636 = vmatprep.mubr.bf16.mxu0 %v2297
    %3637 = vmatmul.mubr.bf16.gmra.mrb[0].mxu0 %v2296
    %v3638 = vpop.f32.mrb[0].mxu0
    %v3639 = vadd.f32 %v2521, %v3638
    %v3640 = vpop.f32.mrb[0].mxu0
    %v3641 = vadd.f32 %v2525, %v3640
    %v3642 = vpop.f32.mrb[0].mxu0
    %v3643 = vpop.f32.mrb[0].mxu0
    %3644 = vdwg.mxu0
    %3645 = vmatprep.subr.bf16.mxu0 %v3204
    %3646 = vmatpush1.bf16.msra.mxu0 %v3203
    %3647 = vmatprep.subr.bf16.mxu0 %v3211
    %3648 = vmatpush1.bf16.msra.mxu0 %v3210
    %3649 = vmatprep.subr.bf16.mxu0 %v3218
    %3650 = vmatpush1.bf16.msra.mxu0 %v3217
    %3651 = vmatprep.subr.bf16.mxu0 %v3225
    %3652 = vmatpush1.bf16.msra.mxu0 %v3224
    %3653 = vmatprep.subr.bf16.mxu0 %v3232
    %3654 = vmatpush1.bf16.msra.mxu0 %v3231
    %3655 = vmatprep.subr.bf16.mxu0 %v3239
    %3656 = vmatpush1.bf16.msra.mxu0 %v3238
    %3657 = vmatprep.subr.bf16.mxu0 %v3246
    %3658 = vmatpush1.bf16.msra.mxu0 %v3245
    %3659 = vmatprep.subr.bf16.mxu0 %v3253
    %3660 = vmatpush1.bf16.msra.mxu0 %v3252
    %3661 = vmatprep.subr.bf16.mxu0 %v3260
    %3662 = vmatpush1.bf16.msra.mxu0 %v3259
    %3663 = vmatprep.subr.bf16.mxu0 0
    %3664 = vmatpush1.bf16.msra.mxu0 0
    %3665 = vmatprep.subr.bf16.mxu0 0
    %3666 = vmatpush1.bf16.msra.mxu0 0
    %3667 = vmatprep.subr.bf16.mxu0 0
    %3668 = vmatpush1.bf16.msra.mxu0 0
    %3669 = vmatprep.subr.bf16.mxu0 0
    %3670 = vmatpush1.bf16.msra.mxu0 0
    %3671 = vmatprep.subr.bf16.mxu0 0
    %3672 = vmatpush1.bf16.msra.mxu0 0
    %3673 = vmatprep.subr.bf16.mxu0 0
    %3674 = vmatpush1.bf16.msra.mxu0 0
    %3675 = vmatprep.subr.bf16.mxu0 0
    %3676 = vmatpush1.bf16.msra.mxu0 0
    %3677 = vmatprep.mubr.bf16.mxu0 %v3438
    %3678 = vmatmul.mubr.bf16.gmra.mrb[0].mxu0 %v2298
    %v3679 = vpop.f32.mrb[0].mxu0
    %v3680 = vadd.f32 %v3639, %v3679
    %v3681 = vpop.f32.mrb[0].mxu0
    %v3682 = vadd.f32 %v3641, %v3681
    %v3683 = vpop.f32.mrb[0].mxu0
    %v3684 = vpop.f32.mrb[0].mxu0
    %3685 = vdwg.mxu0
    %3686 = vmatprep.subr.bf16.mxu0 0
    %3687 = vmatpush1.bf16.msra.mxu0 %v3093
    %3688 = vmatprep.subr.bf16.mxu0 0
    %3689 = vmatpush1.bf16.msra.mxu0 %v3100
    %3690 = vmatprep.subr.bf16.mxu0 0
    %3691 = vmatpush1.bf16.msra.mxu0 %v3107
    %3692 = vmatprep.subr.bf16.mxu0 0
    %3693 = vmatpush1.bf16.msra.mxu0 %v3114
    %3694 = vmatprep.subr.bf16.mxu0 0
    %3695 = vmatpush1.bf16.msra.mxu0 %v3121
    %3696 = vmatprep.subr.bf16.mxu0 0
    %3697 = vmatpush1.bf16.msra.mxu0 %v3128
    %3698 = vmatprep.subr.bf16.mxu0 0
    %3699 = vmatpush1.bf16.msra.mxu0 %v3135
    %3700 = vmatprep.subr.bf16.mxu0 0
    %3701 = vmatpush1.bf16.msra.mxu0 %v3142
    %3702 = vmatprep.subr.bf16.mxu0 0
    %3703 = vmatpush1.bf16.msra.mxu0 %v3149
    %3704 = vmatprep.subr.bf16.mxu0 0
    %3705 = vmatpush1.bf16.msra.mxu0 %v3156
    %3706 = vmatprep.subr.bf16.mxu0 0
    %3707 = vmatpush1.bf16.msra.mxu0 %v3163
    %3708 = vmatprep.subr.bf16.mxu0 0
    %3709 = vmatpush1.bf16.msra.mxu0 %v3170
    %3710 = vmatprep.subr.bf16.mxu0 0
    %3711 = vmatpush1.bf16.msra.mxu0 %v3177
    %3712 = vmatprep.subr.bf16.mxu0 0
    %3713 = vmatpush1.bf16.msra.mxu0 %v3184
    %3714 = vmatprep.subr.bf16.mxu0 0
    %3715 = vmatpush1.bf16.msra.mxu0 %v3191
    %3716 = vmatprep.subr.bf16.mxu0 0
    %3717 = vmatpush1.bf16.msra.mxu0 %v3198
    %3718 = vmatprep.mubr.bf16.mxu0 %v2297
    %3719 = vmatmul.mubr.bf16.gmra.mrb[0].mxu0 %v2296
    %v3720 = vpop.f32.mrb[0].mxu0
    %v3721 = vadd.f32 %v2529, %v3720
    %v3722 = vpop.f32.mrb[0].mxu0
    %v3723 = vpop.f32.mrb[0].mxu0
    %v3724 = vpop.f32.mrb[0].mxu0
    %3725 = vdwg.mxu0
    %3726 = vmatprep.subr.bf16.mxu0 0
    %3727 = vmatpush1.bf16.msra.mxu0 %v3205
    %3728 = vmatprep.subr.bf16.mxu0 0
    %3729 = vmatpush1.bf16.msra.mxu0 %v3212
    %3730 = vmatprep.subr.bf16.mxu0 0
    %3731 = vmatpush1.bf16.msra.mxu0 %v3219
    %3732 = vmatprep.subr.bf16.mxu0 0
    %3733 = vmatpush1.bf16.msra.mxu0 %v3226
    %3734 = vmatprep.subr.bf16.mxu0 0
    %3735 = vmatpush1.bf16.msra.mxu0 %v3233
    %3736 = vmatprep.subr.bf16.mxu0 0
    %3737 = vmatpush1.bf16.msra.mxu0 %v3240
    %3738 = vmatprep.subr.bf16.mxu0 0
    %3739 = vmatpush1.bf16.msra.mxu0 %v3247
    %3740 = vmatprep.subr.bf16.mxu0 0
    %3741 = vmatpush1.bf16.msra.mxu0 %v3254
    %3742 = vmatprep.subr.bf16.mxu0 0
    %3743 = vmatpush1.bf16.msra.mxu0 %v3261
    %3744 = vmatprep.subr.bf16.mxu0 0
    %3745 = vmatpush1.bf16.msra.mxu0 0
    %3746 = vmatprep.subr.bf16.mxu0 0
    %3747 = vmatpush1.bf16.msra.mxu0 0
    %3748 = vmatprep.subr.bf16.mxu0 0
    %3749 = vmatpush1.bf16.msra.mxu0 0
    %3750 = vmatprep.subr.bf16.mxu0 0
    %3751 = vmatpush1.bf16.msra.mxu0 0
    %3752 = vmatprep.subr.bf16.mxu0 0
    %3753 = vmatpush1.bf16.msra.mxu0 0
    %3754 = vmatprep.subr.bf16.mxu0 0
    %3755 = vmatpush1.bf16.msra.mxu0 0
    %3756 = vmatprep.subr.bf16.mxu0 0
    %3757 = vmatpush1.bf16.msra.mxu0 0
    %3758 = vmatprep.mubr.bf16.mxu0 %v3438
    %3759 = vmatmul.mubr.bf16.gmra.mrb[0].mxu0 %v2298
    %v3760 = vpop.f32.mrb[0].mxu0
    %v3761 = vadd.f32 %v3721, %v3760
    %v3762 = vpop.f32.mrb[0].mxu0
    %v3763 = vpop.f32.mrb[0].mxu0
    %v3764 = vpop.f32.mrb[0].mxu0
    %3765 = vdwg.mxu0
    %v3766 = vxor.u32 %v3516, 2147483648
    %v3767 = vxor.u32 %v3518, 2147483648
    %v3768 = vxor.u32 %v3598, 2147483648
    %v3769 = vxor.u32 %v3600, 2147483648
    %v3770 = vxor.u32 %v3680, 2147483648
    %v3771 = vxor.u32 %v3682, 2147483648
    %v3772 = vxor.u32 %v3761, 2147483648
    %v3773 = vmul.f32 %v3766, 1.442695
    %v3774 = vpow.pop %v3773
    %v3775 = vmul.f32 %v3767, 1.442695
    %v3776 = vpow.pop %v3775
    %v3777 = vmul.f32 %v3768, 1.442695
    %v3778 = vpow.pop %v3777
    %v3779 = vmul.f32 %v3769, 1.442695
    %v3780 = vpow.pop %v3779
    %v3781 = vmul.f32 %v3770, 1.442695
    %v3782 = vpow.pop %v3781
    %v3783 = vmul.f32 %v3771, 1.442695
    %v3784 = vpow.pop %v3783
    %v3785 = vmul.f32 %v3772, 1.442695
    %v3786 = vpow.pop %v3785
    %v3787 = vadd.f32 %v3774, 1.0
    %v3788 = vadd.f32 %v3776, 1.0
    %v3789 = vadd.f32 %v3778, 1.0
    %v3790 = vadd.f32 %v3780, 1.0
    %v3791 = vadd.f32 %v3782, 1.0
    %v3792 = vadd.f32 %v3784, 1.0
    %v3793 = vadd.f32 %v3786, 1.0
    %v3794 = vrcp.pop %v3787
    %v3795 = vmul.f32 1.0, %v3794
    %v3796 = vrcp.pop %v3788
    %v3797 = vmul.f32 1.0, %v3796
    %v3798 = vrcp.pop %v3789
    %v3799 = vmul.f32 1.0, %v3798
    %v3800 = vrcp.pop %v3790
    %v3801 = vmul.f32 1.0, %v3800
    %v3802 = vrcp.pop %v3791
    %v3803 = vmul.f32 1.0, %v3802
    %v3804 = vrcp.pop %v3792
    %v3805 = vmul.f32 1.0, %v3804
    %v3806 = vrcp.pop %v3793
    %v3807 = vmul.f32 1.0, %v3806
    %3808 = vst [vmem:[#allocation2] sm:$0xff] %v3795
    %3809 = vst [vmem:[#allocation2 + $0x8] sm:$0xff] %v3797
    %3810 = vst [vmem:[#allocation2 + $0x10] sm:$0xff] %v3799
    %3811 = vst [vmem:[#allocation2 + $0x18] sm:$0xff] %v3801
    %3812 = vst [vmem:[#allocation2 + $0x20] sm:$0xff] %v3803
    %3813 = vst [vmem:[#allocation2 + $0x28] sm:$0xff] %v3805
    %3814 = vst.msk [vmem:[#allocation2 + $0x30] sm:$0xff] %vm1252, %v3807
    %3815 = vst [vmem:[#allocation4] sm:$0xff] %v1983
    %3816 = vst [vmem:[#allocation4 + $0x8] sm:$0xff] %v1985
    // Predicated region
    $region42: #{tpu_custom_call.1} parent=1 // pred_check
      _
    $region43: #{tpu_custom_call.1} parent=1 // pred_check_branch
      %3818 = sbr.rel (0) target = $region45
    $region44: #{tpu_custom_call.1} parent=1 // pred_region
      %s3820 = ssub.s32 896, 896
      %3821 = vsyncadd [#allocation3], %s3820
      %s3823 = sshll.u32 [#allocation2], 4
      %s3824 = int_to_ptr.vmem [resolvable:$true] %s3823
      %3826 = dma.vmem_to_hbm [thread:$0]  %s3824, 896, %s10, [#allocation3]
    $region45: #{tpu_custom_call.1} parent=1 // pred_fallthru
      _
    // Predicated region
    $region46: #{tpu_custom_call.1} parent=1 // pred_check
      _
    $region47: #{tpu_custom_call.1} parent=1 // pred_check_branch
      %3828 = sbr.rel (0) target = $region49
    $region48: #{tpu_custom_call.1} parent=1 // pred_region
      %s3830 = ssub.s32 256, 256
      %3831 = vsyncadd [#allocation5], %s3830
      %s3833 = sshll.u32 [#allocation4], 4
      %s3834 = int_to_ptr.vmem [resolvable:$true] %s3833
      %3836 = dma.vmem_to_hbm [thread:$0]  %s3834, 256, %s11, [#allocation5]
    $region49: #{tpu_custom_call.1} parent=1 // pred_fallthru
      _
    // Predicated region
    $region50: #{tpu_custom_call.1} parent=1 // pred_check
      _
    $region51: #{tpu_custom_call.1} parent=1 // pred_check_branch
      %3838 = sbr.rel (0) target = $region53
    $region52: #{tpu_custom_call.1} parent=1 // pred_region
      %3839 = dma.done [#allocation3], 896
    $region53: #{tpu_custom_call.1} parent=1 // pred_fallthru
      _
    // Predicated region
    $region54: #{tpu_custom_call.1} parent=1 // pred_check
      _
    $region55: #{tpu_custom_call.1} parent=1 // pred_check_branch
      %3841 = sbr.rel (0) target = $region57
    $region56: #{tpu_custom_call.1} parent=1 // pred_region
      %3842 = dma.done [#allocation5], 256
    $region57: #{tpu_custom_call.1} parent=1 // pred_fallthru
      _
    %3843 = vsyncpa [#allocation3], 1
    %3844 = vsyncpa [#allocation5], 1

</llo_original>
